<compile_context>
chip_gen: v7x
topology: tpu7x:2x2x1
jax: 0.10.0
libtpu: 0.0.40
codegen_flags: <defaults>
</compile_context>

<pallas_src>
import jax
import jax.numpy as jnp
from jax.experimental import pallas as pl
from jax.experimental.pallas import tpu as pltpu

# ---- static config (mirrors RefinementNetwork.__init__ arguments) ----------
Z_SIZE = 4                    # z_size
INPUT_SIZE = (4, 16, 16)      # input_size; only input_size[1] (spatial) is used
CH_IN = 4                     # refinenet_channels_in
CONV_SIZE = 3                 # refinenet_conv_size (3 -> 3x3 convs, pad 1)
CONV_CH = 8                   # conv_channels
LSTM_DIM = 32                 # lstm_dim
B = 2                         # N * K (batch of the refinement net)
H = W = INPUT_SIZE[1]
HP, WP = H // 4, W // 4       # spatial after AvgPool2d(4)
FEAT = HP * WP * CONV_CH      # flattened feature size fed to the fc layer
K = CONV_SIZE
PAD = K // 2

WC_IN = W * CH_IN             # 64  lanes: conv1 input rows
WC = W * CONV_CH              # 128 lanes: conv output rows


def _elu(v):
    # nn.ELU(alpha=1): x if x > 0 else exp(x) - 1
    return jnp.where(v > 0, v, jnp.exp(jnp.minimum(v, 0.0)) - 1.0)


def _sigmoid(v):
    # 1 / (1 + exp(-v)); reciprocal pushed onto the EUP slot
    return pl.reciprocal(1.0 + jnp.exp(-v), approx=True)


def refinement_kernel(
    img_ref, vec_ref, h0_ref, c0_ref,
    band1_ref, b1_ref, band2_ref, b2_ref, band3_ref, b3_ref,
    fcw_ref, fcb_ref, pwf_ref, pwv_ref, pb_ref,
    wih_ref, whh_ref, blstm_ref, headw_ref, headb_ref,
    lamda_ref, hout_ref, cout_ref,
    pad1_ref, pad2_ref,
):
    # zero the H-padding buffers once; interiors are fully rewritten per layer
    pad1_ref[...] = jnp.zeros_like(pad1_ref)
    pad2_ref[...] = jnp.zeros_like(pad2_ref)

    def conv_banded(pad_ref, x, band_ref, bias_ref):
        """3x3 'same' conv in [H, W*C] layout as 3 row-shifted matmuls.

        x        : [H, W*Cin]
        band_ref : [K, W*Cin, W*Cout]  (dx taps + W zero-padding baked in)
        bias_ref : [1, W*Cout]         (per-channel bias tiled across W)
        """
        pad_ref[PAD:PAD + H, :] = x
        acc = jnp.dot(pad_ref[0:H, :], band_ref[0],
                      preferred_element_type=jnp.float32)
        for dy in range(1, K):
            acc = acc + jnp.dot(pad_ref[dy:dy + H, :], band_ref[dy],
                                preferred_element_type=jnp.float32)
        return acc + bias_ref[...]

    # ---- self.conv: conv -> ELU x3 -----------------------------------------
    x = img_ref[0]                                          # [H, W*Cin]
    x = _elu(conv_banded(pad1_ref, x, band1_ref, b1_ref))   # [H, W*Cc]
    x = _elu(conv_banded(pad2_ref, x, band2_ref, b2_ref))
    x = _elu(conv_banded(pad2_ref, x, band3_ref, b3_ref))   # [H, 128]

    # ---- AvgPool2d(4) + Flatten + Linear + ELU ------------------------------
    # W-pooling and the 1/16 scale are folded into fcw (wrapper);
    # H-pooling is a 4-row sum per group feeding one small matmul each.
    feat = fcb_ref[...]                                     # [1, L]
    for hp in range(HP):
        rows = jnp.sum(x[4 * hp:4 * hp + 4, :], axis=0, keepdims=True)
        feat = feat + jnp.dot(rows, fcw_ref[hp],
                              preferred_element_type=jnp.float32)
    feat = _elu(feat)                                       # [1, L]

    # ---- cat([x, vec_inputs], 1) + input_proj (split, no lane concat) -------
    proj = _elu(jnp.dot(feat, pwf_ref[...], preferred_element_type=jnp.float32)
                + jnp.dot(vec_ref[0], pwv_ref[...],
                          preferred_element_type=jnp.float32)
                + pb_ref[...])                              # [1, L]

    # ---- single-timestep LSTM (seq_len = 1), b_ih + b_hh pre-fused ----------
    h0 = h0_ref[0]                                          # [1, L]
    c0 = c0_ref[0]
    gates = (jnp.dot(proj, wih_ref[...], preferred_element_type=jnp.float32)
             + jnp.dot(h0, whh_ref[...], preferred_element_type=jnp.float32)
             + blstm_ref[...])                              # [1, 4L]
    sig = _sigmoid(gates)
    tnh = jnp.tanh(gates)
    L = LSTM_DIM
    i_g, f_g, o_g = sig[:, 0:L], sig[:, L:2 * L], sig[:, 3 * L:4 * L]
    g_g = tnh[:, 2 * L:3 * L]
    c_new = f_g * c0 + i_g * g_g
    h_new = o_g * jnp.tanh(c_new)

    # ---- fused loc/scale head -> lamda --------------------------------------
    lamda_ref[0] = (jnp.dot(h_new, headw_ref[...],
                            preferred_element_type=jnp.float32)
                    + headb_ref[...])
    hout_ref[0] = h_new
    cout_ref[0] = c_new


# ---------------------------- wrapper-side repacks ---------------------------
def _make_banded(conv_w, cin, cout):
    """[K*K*cin, cout] (rows (dy,dx,ci)) -> [K, W*cin, W*cout] banded weights."""
    w4 = conv_w.reshape(K, K, cin, cout)                    # (dy, dx, ci, co)
    w_in = jnp.arange(W)[:, None]
    w_out = jnp.arange(W)[None, :]
    dx = w_in - w_out + PAD                                 # [W, W]
    valid = (dx >= 0) & (dx < K)
    g = w4[:, jnp.clip(dx, 0, K - 1)]                       # [K, W, W, ci, co]
    g = jnp.where(valid[None, :, :, None, None], g, 0.0)
    band = jnp.transpose(g, (0, 1, 3, 2, 4))                # [K, w_in, ci, w_out, co]
    return band.reshape(K, W * cin, W * cout)


def _fold_fc(fcw):
    """Fold AvgPool(4) over W and the 1/16 scale into the fc weight.

    fcw: [HP*WP*C, L] rows (hp, wp, c)  ->  [HP, W*C, L]
    """
    f = fcw.reshape(HP, WP, 1, CONV_CH, LSTM_DIM)
    f = jnp.broadcast_to(f, (HP, WP, 4, CONV_CH, LSTM_DIM)) * (1.0 / 16.0)
    return f.reshape(HP, W * CONV_CH, LSTM_DIM)


def init_params(key):
    ks = jax.random.split(key, 18)

    def nrm(k, shape, scale=0.08):
        return scale * jax.random.normal(k, shape, jnp.float32)

    return (
        nrm(ks[0], (K * K * CH_IN, CONV_CH)),    # conv1 W
        nrm(ks[1], (1, CONV_CH)),                # conv1 b
        nrm(ks[2], (K * K * CONV_CH, CONV_CH)),  # conv2 W
        nrm(ks[3], (1, CONV_CH)),                # conv2 b
        nrm(ks[4], (K * K * CONV_CH, CONV_CH)),  # conv3 W
        nrm(ks[5], (1, CONV_CH)),                # conv3 b
        nrm(ks[6], (FEAT, LSTM_DIM)),            # fc W (post-pool NHWC flatten)
        nrm(ks[7], (1, LSTM_DIM)),               # fc b
        nrm(ks[8], (LSTM_DIM + 4 * Z_SIZE, LSTM_DIM)),  # input_proj W
        nrm(ks[9], (1, LSTM_DIM)),                      # input_proj b
        nrm(ks[10], (LSTM_DIM, 4 * LSTM_DIM)),   # lstm W_ih^T
        nrm(ks[11], (LSTM_DIM, 4 * LSTM_DIM)),   # lstm W_hh^T
        nrm(ks[12], (1, 4 * LSTM_DIM)),          # lstm b_ih
        nrm(ks[13], (1, 4 * LSTM_DIM)),          # lstm b_hh
        nrm(ks[14], (LSTM_DIM, Z_SIZE)),         # loc W
        nrm(ks[15], (1, Z_SIZE)),                # loc b
        nrm(ks[16], (LSTM_DIM, Z_SIZE)),         # scale W
        nrm(ks[17], (1, Z_SIZE)),                # scale b
    )


def refinement_forward(img_nchw, vec_inputs, h, c, params):
    """img_nchw: [B, C, H, W], vec_inputs: [B, 4z], h/c: [1, B, L]."""
    (w1, b1, w2, b2, w3, b3, fcw, fcb, pw, pb,
     wih, whh, bih, bhh, locw, locb, scw, scb) = params

    # layout: NCHW (PyTorch) -> NHWC -> lane-dense [B, H, W*C]
    img = jnp.transpose(img_nchw, (0, 2, 3, 1)).astype(jnp.float32)
    img = img.reshape(B, H, WC_IN)

    # weight repacks (cheap one-off XLA ops, outside the Pallas kernel)
    band1 = _make_banded(w1, CH_IN, CONV_CH)                # [3,  64, 128]
    band2 = _make_banded(w2, CONV_CH, CONV_CH)              # [3, 128, 128]
    band3 = _make_banded(w3, CONV_CH, CONV_CH)              # [3, 128, 128]
    b1b = jnp.tile(b1, (1, W))                              # [1, 128]
    b2b = jnp.tile(b2, (1, W))
    b3b = jnp.tile(b3, (1, W))
    fcw_p = _fold_fc(fcw)                                   # [HP, 128, L]
    pwf, pwv = pw[:LSTM_DIM], pw[LSTM_DIM:]                 # split input_proj
    blstm = bih + bhh                                       # fused LSTM bias
    headw = jnp.concatenate([locw, scw], axis=1)            # [L, 2Z]
    headb = jnp.concatenate([locb, scb], axis=1)            # [1, 2Z]

    vec3 = vec_inputs.astype(jnp.float32).reshape(B, 1, 4 * Z_SIZE)
    h03 = h[0].astype(jnp.float32).reshape(B, 1, LSTM_DIM)
    c03 = c[0].astype(jnp.float32).reshape(B, 1, LSTM_DIM)

    batched = (img, vec3, h03, c03)
    weights = (band1, b1b, band2, b2b, band3, b3b,
               fcw_p, fcb, pwf, pwv, pb,
               wih, whh, blstm, headw, headb)

    def _wspec(arr):
        zeros = (0,) * arr.ndim
        return pl.BlockSpec(arr.shape, lambda i: zeros)     # resident weights

    def bmap(i):
        return (i, 0, 0)

    in_specs = [
        pl.BlockSpec((1, H, WC_IN), bmap),
        pl.BlockSpec((1, 1, 4 * Z_SIZE), bmap),
        pl.BlockSpec((1, 1, LSTM_DIM), bmap),
        pl.BlockSpec((1, 1, LSTM_DIM), bmap),
    ] + [_wspec(w) for w in weights]

    out_shape = (
        jax.ShapeDtypeStruct((B, 1, 2 * Z_SIZE), jnp.float32),   # lamda
        jax.ShapeDtypeStruct((B, 1, LSTM_DIM), jnp.float32),     # h_new
        jax.ShapeDtypeStruct((B, 1, LSTM_DIM), jnp.float32),     # c_new
    )
    out_specs = (
        pl.BlockSpec((1, 1, 2 * Z_SIZE), bmap),
        pl.BlockSpec((1, 1, LSTM_DIM), bmap),
        pl.BlockSpec((1, 1, LSTM_DIM), bmap),
    )

    lamda, h_new, c_new = pl.pallas_call(
        refinement_kernel,
        out_shape=out_shape,
        grid=(B,),                                          # one batch elem / program
        in_specs=in_specs,
        out_specs=out_specs,
        scratch_shapes=[
            pltpu.VMEM((H + 2 * PAD, WC_IN), jnp.float32),  # conv1 H-padded rows
            pltpu.VMEM((H + 2 * PAD, WC), jnp.float32),     # conv2/3 H-padded rows
        ],
        input_output_aliases={2: 1, 3: 2},                  # h0 -> h_out, c0 -> c_out
        compiler_params=pltpu.CompilerParams(
            dimension_semantics=("parallel",)),             # both v7x TensorCores
    )(*batched, *weights)

    # restore PyTorch shapes: lamda [B, 2z], LSTM state [num_layers=1, B, L]
    return lamda[:, 0], (h_new[:, 0][None], c_new[:, 0][None])


if __name__ == "__main__":
    key = jax.random.PRNGKey(0)
    k_img, k_vec, k_h, k_c, k_p = jax.random.split(key, 5)

    img = jax.random.normal(k_img, (B, CH_IN, H, W), jnp.float32)   # [N*K, C, H, W]
    vec = jax.random.normal(k_vec, (B, 4 * Z_SIZE), jnp.float32)    # [N*K, 4*z]
    h0 = jax.random.normal(k_h, (1, B, LSTM_DIM), jnp.float32)
    c0 = jax.random.normal(k_c, (1, B, LSTM_DIM), jnp.float32)
    params = init_params(k_p)

    lamda, (h1, c1) = jax.jit(refinement_forward)(img, vec, h0, c0, params)
    jax.block_until_ready((lamda, h1, c1))

    assert lamda.shape == (B, 2 * Z_SIZE)
    assert h1.shape == (1, B, LSTM_DIM) and c1.shape == (1, B, LSTM_DIM)
    # TODO(synk): lstm.flatten_parameters() is a CUDA-only memory-layout hint; no-op here.
    print("KERNEL_OK")
</pallas_src>

<mosaic_0001>
module attributes {stable_mosaic.version = 11 : i64} {
  func.func @refinement_kernel(%arg0: i32, %arg1: memref<1x16x64xf32, #tpu.memory_space<vmem>>, %arg2: memref<1x1x16xf32, #tpu.memory_space<vmem>>, %arg3: memref<1x1x32xf32, #tpu.memory_space<vmem>>, %arg4: memref<1x1x32xf32, #tpu.memory_space<vmem>>, %arg5: memref<3x64x128xf32, #tpu.memory_space<vmem>>, %arg6: memref<1x128xf32, #tpu.memory_space<vmem>>, %arg7: memref<3x128x128xf32, #tpu.memory_space<vmem>>, %arg8: memref<1x128xf32, #tpu.memory_space<vmem>>, %arg9: memref<3x128x128xf32, #tpu.memory_space<vmem>>, %arg10: memref<1x128xf32, #tpu.memory_space<vmem>>, %arg11: memref<4x128x32xf32, #tpu.memory_space<vmem>>, %arg12: memref<1x32xf32, #tpu.memory_space<vmem>>, %arg13: memref<32x32xf32, #tpu.memory_space<vmem>>, %arg14: memref<16x32xf32, #tpu.memory_space<vmem>>, %arg15: memref<1x32xf32, #tpu.memory_space<vmem>>, %arg16: memref<32x128xf32, #tpu.memory_space<vmem>>, %arg17: memref<32x128xf32, #tpu.memory_space<vmem>>, %arg18: memref<1x128xf32, #tpu.memory_space<vmem>>, %arg19: memref<32x8xf32, #tpu.memory_space<vmem>>, %arg20: memref<1x8xf32, #tpu.memory_space<vmem>>, %arg21: memref<1x1x8xf32, #tpu.memory_space<vmem>>, %arg22: memref<1x1x32xf32, #tpu.memory_space<vmem>>, %arg23: memref<1x1x32xf32, #tpu.memory_space<vmem>>, %arg24: memref<18x64xf32, #tpu.memory_space<vmem>>, %arg25: memref<18x128xf32, #tpu.memory_space<vmem>>) attributes {dimension_semantics = [#tpu.dimension_semantics<parallel>], iteration_bounds = array<i64: 2>, scalar_prefetch = 0 : i64, scratch_operands = 2 : i64, tpu.core_type = #tpu.core_type<tc>, window_params = [{transform_indices = @transform_0, window_bounds = array<i64: 1, 16, 64>}, {transform_indices = @transform_1, window_bounds = array<i64: 1, 1, 16>}, {transform_indices = @transform_2, window_bounds = array<i64: 1, 1, 32>}, {transform_indices = @transform_3, window_bounds = array<i64: 1, 1, 32>}, {pipeline_mode = #tpu.pipeline_mode<synchronous>, transform_indices = @transform_4, window_bounds = array<i64: 3, 64, 128>}, {pipeline_mode = #tpu.pipeline_mode<synchronous>, transform_indices = @transform_5, window_bounds = array<i64: 1, 128>}, {pipeline_mode = #tpu.pipeline_mode<synchronous>, transform_indices = @transform_6, window_bounds = array<i64: 3, 128, 128>}, {pipeline_mode = #tpu.pipeline_mode<synchronous>, transform_indices = @transform_7, window_bounds = array<i64: 1, 128>}, {pipeline_mode = #tpu.pipeline_mode<synchronous>, transform_indices = @transform_8, window_bounds = array<i64: 3, 128, 128>}, {pipeline_mode = #tpu.pipeline_mode<synchronous>, transform_indices = @transform_9, window_bounds = array<i64: 1, 128>}, {pipeline_mode = #tpu.pipeline_mode<synchronous>, transform_indices = @transform_10, window_bounds = array<i64: 4, 128, 32>}, {pipeline_mode = #tpu.pipeline_mode<synchronous>, transform_indices = @transform_11, window_bounds = array<i64: 1, 32>}, {pipeline_mode = #tpu.pipeline_mode<synchronous>, transform_indices = @transform_12, window_bounds = array<i64: 32, 32>}, {pipeline_mode = #tpu.pipeline_mode<synchronous>, transform_indices = @transform_13, window_bounds = array<i64: 16, 32>}, {pipeline_mode = #tpu.pipeline_mode<synchronous>, transform_indices = @transform_14, window_bounds = array<i64: 1, 32>}, {pipeline_mode = #tpu.pipeline_mode<synchronous>, transform_indices = @transform_15, window_bounds = array<i64: 32, 128>}, {pipeline_mode = #tpu.pipeline_mode<synchronous>, transform_indices = @transform_16, window_bounds = array<i64: 32, 128>}, {pipeline_mode = #tpu.pipeline_mode<synchronous>, transform_indices = @transform_17, window_bounds = array<i64: 1, 128>}, {pipeline_mode = #tpu.pipeline_mode<synchronous>, transform_indices = @transform_18, window_bounds = array<i64: 32, 8>}, {pipeline_mode = #tpu.pipeline_mode<synchronous>, transform_indices = @transform_19, window_bounds = array<i64: 1, 8>}, {transform_indices = @transform_20, window_bounds = array<i64: 1, 1, 8>}, {transform_indices = @transform_21, window_bounds = array<i64: 1, 1, 32>}, {transform_indices = @transform_22, window_bounds = array<i64: 1, 1, 32>}]} {
    %cst = arith.constant 0.000000e+00 : f32
    %0 = vector.broadcast %cst : f32 to vector<18x64xf32>
    %c0 = arith.constant 0 : index
    %c0_0 = arith.constant 0 : index
    %1 = vector.load %arg24[%c0, %c0_0] : memref<18x64xf32, #tpu.memory_space<vmem>>, vector<18x64xf32>
    tpu.vector_store %arg24[%c0, %c0_0], %0 {strides = array<i32>} : memref<18x64xf32, #tpu.memory_space<vmem>>, vector<18x64xf32>,
    %cst_1 = arith.constant 0.000000e+00 : f32
    %2 = vector.broadcast %cst_1 : f32 to vector<18x128xf32>
    %c0_2 = arith.constant 0 : index
    %c0_3 = arith.constant 0 : index
    %3 = vector.load %arg25[%c0_2, %c0_3] : memref<18x128xf32, #tpu.memory_space<vmem>>, vector<18x128xf32>
    tpu.vector_store %arg25[%c0_2, %c0_3], %2 {strides = array<i32>} : memref<18x128xf32, #tpu.memory_space<vmem>>, vector<18x128xf32>,
    %c0_4 = arith.constant 0 : index
    %c0_5 = arith.constant 0 : index
    %c0_6 = arith.constant 0 : index
    %4 = vector.load %arg1[%c0_4, %c0_5, %c0_6] : memref<1x16x64xf32, #tpu.memory_space<vmem>>, vector<1x16x64xf32>
    %5 = vector.shape_cast %4 : vector<1x16x64xf32> to vector<16x64xf32>
    %c1 = arith.constant 1 : index
    %c0_7 = arith.constant 0 : index
    %6 = vector.load %arg24[%c1, %c0_7] : memref<18x64xf32, #tpu.memory_space<vmem>>, vector<16x64xf32>
    tpu.vector_store %arg24[%c1, %c0_7], %5 {strides = array<i32>} : memref<18x64xf32, #tpu.memory_space<vmem>>, vector<16x64xf32>,
    %c0_8 = arith.constant 0 : index
    %c0_9 = arith.constant 0 : index
    %7 = vector.load %arg24[%c0_8, %c0_9] : memref<18x64xf32, #tpu.memory_space<vmem>>, vector<16x64xf32>
    %c0_10 = arith.constant 0 : index
    %c0_11 = arith.constant 0 : index
    %c0_12 = arith.constant 0 : index
    %8 = vector.load %arg5[%c0_10, %c0_11, %c0_12] : memref<3x64x128xf32, #tpu.memory_space<vmem>>, vector<1x64x128xf32>
    %9 = vector.shape_cast %8 : vector<1x64x128xf32> to vector<64x128xf32>
    %cst_13 = arith.constant dense<0.000000e+00> : vector<16x128xf32>
    %10 = tpu.matmul %7, %9, %cst_13 {dimension_numbers = #tpu.dot_dimension_numbers<[1], [0], [0], [1], [0, 0, 1, 1], [], []>} : vector<16x64xf32>, vector<64x128xf32>, vector<16x128xf32> -> vector<16x128xf32>
    %c1_14 = arith.constant 1 : index
    %c0_15 = arith.constant 0 : index
    %11 = vector.load %arg24[%c1_14, %c0_15] : memref<18x64xf32, #tpu.memory_space<vmem>>, vector<16x64xf32>
    %c1_16 = arith.constant 1 : index
    %c0_17 = arith.constant 0 : index
    %c0_18 = arith.constant 0 : index
    %12 = vector.load %arg5[%c1_16, %c0_17, %c0_18] : memref<3x64x128xf32, #tpu.memory_space<vmem>>, vector<1x64x128xf32>
    %13 = vector.shape_cast %12 : vector<1x64x128xf32> to vector<64x128xf32>
    %cst_19 = arith.constant dense<0.000000e+00> : vector<16x128xf32>
    %14 = tpu.matmul %11, %13, %cst_19 {dimension_numbers = #tpu.dot_dimension_numbers<[1], [0], [0], [1], [0, 0, 1, 1], [], []>} : vector<16x64xf32>, vector<64x128xf32>, vector<16x128xf32> -> vector<16x128xf32>
    %15 = arith.addf %10, %14 : vector<16x128xf32>
    %c2 = arith.constant 2 : index
    %c0_20 = arith.constant 0 : index
    %16 = vector.load %arg24[%c2, %c0_20] : memref<18x64xf32, #tpu.memory_space<vmem>>, vector<16x64xf32>
    %c2_21 = arith.constant 2 : index
    %c0_22 = arith.constant 0 : index
    %c0_23 = arith.constant 0 : index
    %17 = vector.load %arg5[%c2_21, %c0_22, %c0_23] : memref<3x64x128xf32, #tpu.memory_space<vmem>>, vector<1x64x128xf32>
    %18 = vector.shape_cast %17 : vector<1x64x128xf32> to vector<64x128xf32>
    %cst_24 = arith.constant dense<0.000000e+00> : vector<16x128xf32>
    %19 = tpu.matmul %16, %18, %cst_24 {dimension_numbers = #tpu.dot_dimension_numbers<[1], [0], [0], [1], [0, 0, 1, 1], [], []>} : vector<16x64xf32>, vector<64x128xf32>, vector<16x128xf32> -> vector<16x128xf32>
    %20 = arith.addf %15, %19 : vector<16x128xf32>
    %c0_25 = arith.constant 0 : index
    %c0_26 = arith.constant 0 : index
    %21 = vector.load %arg6[%c0_25, %c0_26] : memref<1x128xf32, #tpu.memory_space<vmem>>, vector<1x128xf32>
    %22 = vector.broadcast %21 : vector<1x128xf32> to vector<16x128xf32>
    %23 = arith.addf %20, %22 : vector<16x128xf32>
    %cst_27 = arith.constant 0.000000e+00 : f32
    %24 = vector.broadcast %cst_27 : f32 to vector<16x128xf32>
    %25 = arith.cmpf ogt, %23, %24 : vector<16x128xf32>
    %cst_28 = arith.constant 0.000000e+00 : f32
    %26 = vector.broadcast %cst_28 : f32 to vector<16x128xf32>
    %27 = arith.minimumf %23, %26 : vector<16x128xf32>
    %28 = math.exp %27 : vector<16x128xf32>
    %cst_29 = arith.constant 1.000000e+00 : f32
    %29 = vector.broadcast %cst_29 : f32 to vector<16x128xf32>
    %30 = arith.subf %28, %29 : vector<16x128xf32>
    %31 = arith.select %25, %23, %30 : vector<16x128xi1>, vector<16x128xf32>
    %c1_30 = arith.constant 1 : index
    %c0_31 = arith.constant 0 : index
    %32 = vector.load %arg25[%c1_30, %c0_31] : memref<18x128xf32, #tpu.memory_space<vmem>>, vector<16x128xf32>
    tpu.vector_store %arg25[%c1_30, %c0_31], %31 {strides = array<i32>} : memref<18x128xf32, #tpu.memory_space<vmem>>, vector<16x128xf32>,
    %c0_32 = arith.constant 0 : index
    %c0_33 = arith.constant 0 : index
    %33 = vector.load %arg25[%c0_32, %c0_33] : memref<18x128xf32, #tpu.memory_space<vmem>>, vector<16x128xf32>
    %c0_34 = arith.constant 0 : index
    %c0_35 = arith.constant 0 : index
    %c0_36 = arith.constant 0 : index
    %34 = vector.load %arg7[%c0_34, %c0_35, %c0_36] : memref<3x128x128xf32, #tpu.memory_space<vmem>>, vector<1x128x128xf32>
    %35 = vector.shape_cast %34 : vector<1x128x128xf32> to vector<128x128xf32>
    %cst_37 = arith.constant dense<0.000000e+00> : vector<16x128xf32>
    %36 = tpu.matmul %33, %35, %cst_37 {dimension_numbers = #tpu.dot_dimension_numbers<[1], [0], [0], [1], [0, 0, 1, 1], [], []>} : vector<16x128xf32>, vector<128x128xf32>, vector<16x128xf32> -> vector<16x128xf32>
    %c1_38 = arith.constant 1 : index
    %c0_39 = arith.constant 0 : index
    %37 = vector.load %arg25[%c1_38, %c0_39] : memref<18x128xf32, #tpu.memory_space<vmem>>, vector<16x128xf32>
    %c1_40 = arith.constant 1 : index
    %c0_41 = arith.constant 0 : index
    %c0_42 = arith.constant 0 : index
    %38 = vector.load %arg7[%c1_40, %c0_41, %c0_42] : memref<3x128x128xf32, #tpu.memory_space<vmem>>, vector<1x128x128xf32>
    %39 = vector.shape_cast %38 : vector<1x128x128xf32> to vector<128x128xf32>
    %cst_43 = arith.constant dense<0.000000e+00> : vector<16x128xf32>
    %40 = tpu.matmul %37, %39, %cst_43 {dimension_numbers = #tpu.dot_dimension_numbers<[1], [0], [0], [1], [0, 0, 1, 1], [], []>} : vector<16x128xf32>, vector<128x128xf32>, vector<16x128xf32> -> vector<16x128xf32>
    %41 = arith.addf %36, %40 : vector<16x128xf32>
    %c2_44 = arith.constant 2 : index
    %c0_45 = arith.constant 0 : index
    %42 = vector.load %arg25[%c2_44, %c0_45] : memref<18x128xf32, #tpu.memory_space<vmem>>, vector<16x128xf32>
    %c2_46 = arith.constant 2 : index
    %c0_47 = arith.constant 0 : index
    %c0_48 = arith.constant 0 : index
    %43 = vector.load %arg7[%c2_46, %c0_47, %c0_48] : memref<3x128x128xf32, #tpu.memory_space<vmem>>, vector<1x128x128xf32>
    %44 = vector.shape_cast %43 : vector<1x128x128xf32> to vector<128x128xf32>
    %cst_49 = arith.constant dense<0.000000e+00> : vector<16x128xf32>
    %45 = tpu.matmul %42, %44, %cst_49 {dimension_numbers = #tpu.dot_dimension_numbers<[1], [0], [0], [1], [0, 0, 1, 1], [], []>} : vector<16x128xf32>, vector<128x128xf32>, vector<16x128xf32> -> vector<16x128xf32>
    %46 = arith.addf %41, %45 : vector<16x128xf32>
    %c0_50 = arith.constant 0 : index
    %c0_51 = arith.constant 0 : index
    %47 = vector.load %arg8[%c0_50, %c0_51] : memref<1x128xf32, #tpu.memory_space<vmem>>, vector<1x128xf32>
    %48 = vector.broadcast %47 : vector<1x128xf32> to vector<16x128xf32>
    %49 = arith.addf %46, %48 : vector<16x128xf32>
    %cst_52 = arith.constant 0.000000e+00 : f32
    %50 = vector.broadcast %cst_52 : f32 to vector<16x128xf32>
    %51 = arith.cmpf ogt, %49, %50 : vector<16x128xf32>
    %cst_53 = arith.constant 0.000000e+00 : f32
    %52 = vector.broadcast %cst_53 : f32 to vector<16x128xf32>
    %53 = arith.minimumf %49, %52 : vector<16x128xf32>
    %54 = math.exp %53 : vector<16x128xf32>
    %cst_54 = arith.constant 1.000000e+00 : f32
    %55 = vector.broadcast %cst_54 : f32 to vector<16x128xf32>
    %56 = arith.subf %54, %55 : vector<16x128xf32>
    %57 = arith.select %51, %49, %56 : vector<16x128xi1>, vector<16x128xf32>
    %c1_55 = arith.constant 1 : index
    %c0_56 = arith.constant 0 : index
    %58 = vector.load %arg25[%c1_55, %c0_56] : memref<18x128xf32, #tpu.memory_space<vmem>>, vector<16x128xf32>
    tpu.vector_store %arg25[%c1_55, %c0_56], %57 {strides = array<i32>} : memref<18x128xf32, #tpu.memory_space<vmem>>, vector<16x128xf32>,
    %c0_57 = arith.constant 0 : index
    %c0_58 = arith.constant 0 : index
    %59 = vector.load %arg25[%c0_57, %c0_58] : memref<18x128xf32, #tpu.memory_space<vmem>>, vector<16x128xf32>
    %c0_59 = arith.constant 0 : index
    %c0_60 = arith.constant 0 : index
    %c0_61 = arith.constant 0 : index
    %60 = vector.load %arg9[%c0_59, %c0_60, %c0_61] : memref<3x128x128xf32, #tpu.memory_space<vmem>>, vector<1x128x128xf32>
    %61 = vector.shape_cast %60 : vector<1x128x128xf32> to vector<128x128xf32>
    %cst_62 = arith.constant dense<0.000000e+00> : vector<16x128xf32>
    %62 = tpu.matmul %59, %61, %cst_62 {dimension_numbers = #tpu.dot_dimension_numbers<[1], [0], [0], [1], [0, 0, 1, 1], [], []>} : vector<16x128xf32>, vector<128x128xf32>, vector<16x128xf32> -> vector<16x128xf32>
    %c1_63 = arith.constant 1 : index
    %c0_64 = arith.constant 0 : index
    %63 = vector.load %arg25[%c1_63, %c0_64] : memref<18x128xf32, #tpu.memory_space<vmem>>, vector<16x128xf32>
    %c1_65 = arith.constant 1 : index
    %c0_66 = arith.constant 0 : index
    %c0_67 = arith.constant 0 : index
    %64 = vector.load %arg9[%c1_65, %c0_66, %c0_67] : memref<3x128x128xf32, #tpu.memory_space<vmem>>, vector<1x128x128xf32>
    %65 = vector.shape_cast %64 : vector<1x128x128xf32> to vector<128x128xf32>
    %cst_68 = arith.constant dense<0.000000e+00> : vector<16x128xf32>
    %66 = tpu.matmul %63, %65, %cst_68 {dimension_numbers = #tpu.dot_dimension_numbers<[1], [0], [0], [1], [0, 0, 1, 1], [], []>} : vector<16x128xf32>, vector<128x128xf32>, vector<16x128xf32> -> vector<16x128xf32>
    %67 = arith.addf %62, %66 : vector<16x128xf32>
    %c2_69 = arith.constant 2 : index
    %c0_70 = arith.constant 0 : index
    %68 = vector.load %arg25[%c2_69, %c0_70] : memref<18x128xf32, #tpu.memory_space<vmem>>, vector<16x128xf32>
    %c2_71 = arith.constant 2 : index
    %c0_72 = arith.constant 0 : index
    %c0_73 = arith.constant 0 : index
    %69 = vector.load %arg9[%c2_71, %c0_72, %c0_73] : memref<3x128x128xf32, #tpu.memory_space<vmem>>, vector<1x128x128xf32>
    %70 = vector.shape_cast %69 : vector<1x128x128xf32> to vector<128x128xf32>
    %cst_74 = arith.constant dense<0.000000e+00> : vector<16x128xf32>
    %71 = tpu.matmul %68, %70, %cst_74 {dimension_numbers = #tpu.dot_dimension_numbers<[1], [0], [0], [1], [0, 0, 1, 1], [], []>} : vector<16x128xf32>, vector<128x128xf32>, vector<16x128xf32> -> vector<16x128xf32>
    %72 = arith.addf %67, %71 : vector<16x128xf32>
    %c0_75 = arith.constant 0 : index
    %c0_76 = arith.constant 0 : index
    %73 = vector.load %arg10[%c0_75, %c0_76] : memref<1x128xf32, #tpu.memory_space<vmem>>, vector<1x128xf32>
    %74 = vector.broadcast %73 : vector<1x128xf32> to vector<16x128xf32>
    %75 = arith.addf %72, %74 : vector<16x128xf32>
    %cst_77 = arith.constant 0.000000e+00 : f32
    %76 = vector.broadcast %cst_77 : f32 to vector<16x128xf32>
    %77 = arith.cmpf ogt, %75, %76 : vector<16x128xf32>
    %cst_78 = arith.constant 0.000000e+00 : f32
    %78 = vector.broadcast %cst_78 : f32 to vector<16x128xf32>
    %79 = arith.minimumf %75, %78 : vector<16x128xf32>
    %80 = math.exp %79 : vector<16x128xf32>
    %cst_79 = arith.constant 1.000000e+00 : f32
    %81 = vector.broadcast %cst_79 : f32 to vector<16x128xf32>
    %82 = arith.subf %80, %81 : vector<16x128xf32>
    %83 = arith.select %77, %75, %82 : vector<16x128xi1>, vector<16x128xf32>
    %c0_80 = arith.constant 0 : index
    %c0_81 = arith.constant 0 : index
    %84 = vector.load %arg12[%c0_80, %c0_81] : memref<1x32xf32, #tpu.memory_space<vmem>>, vector<1x32xf32>
    %85 = vector.extract_strided_slice %83 {offsets = [0, 0], sizes = [4, 128], strides = [1, 1]} : vector<16x128xf32> to vector<4x128xf32>
    %cst_82 = arith.constant dense<0.000000e+00> : vector<128xf32>
    %86 = vector.multi_reduction <add>, %85, %cst_82 [0] : vector<4x128xf32> to vector<128xf32>
    %87 = vector.shape_cast %86 : vector<128xf32> to vector<1x128xf32>
    %c0_83 = arith.constant 0 : index
    %c0_84 = arith.constant 0 : index
    %c0_85 = arith.constant 0 : index
    %88 = vector.load %arg11[%c0_83, %c0_84, %c0_85] : memref<4x128x32xf32, #tpu.memory_space<vmem>>, vector<1x128x32xf32>
    %89 = vector.shape_cast %88 : vector<1x128x32xf32> to vector<128x32xf32>
    %cst_86 = arith.constant dense<0.000000e+00> : vector<1x32xf32>
    %90 = tpu.matmul %87, %89, %cst_86 {dimension_numbers = #tpu.dot_dimension_numbers<[1], [0], [0], [1], [0, 0, 1, 1], [], []>} : vector<1x128xf32>, vector<128x32xf32>, vector<1x32xf32> -> vector<1x32xf32>
    %91 = arith.addf %84, %90 : vector<1x32xf32>
    %92 = vector.extract_strided_slice %83 {offsets = [4, 0], sizes = [4, 128], strides = [1, 1]} : vector<16x128xf32> to vector<4x128xf32>
    %cst_87 = arith.constant dense<0.000000e+00> : vector<128xf32>
    %93 = vector.multi_reduction <add>, %92, %cst_87 [0] : vector<4x128xf32> to vector<128xf32>
    %94 = vector.shape_cast %93 : vector<128xf32> to vector<1x128xf32>
    %c1_88 = arith.constant 1 : index
    %c0_89 = arith.constant 0 : index
    %c0_90 = arith.constant 0 : index
    %95 = vector.load %arg11[%c1_88, %c0_89, %c0_90] : memref<4x128x32xf32, #tpu.memory_space<vmem>>, vector<1x128x32xf32>
    %96 = vector.shape_cast %95 : vector<1x128x32xf32> to vector<128x32xf32>
    %cst_91 = arith.constant dense<0.000000e+00> : vector<1x32xf32>
    %97 = tpu.matmul %94, %96, %cst_91 {dimension_numbers = #tpu.dot_dimension_numbers<[1], [0], [0], [1], [0, 0, 1, 1], [], []>} : vector<1x128xf32>, vector<128x32xf32>, vector<1x32xf32> -> vector<1x32xf32>
    %98 = arith.addf %91, %97 : vector<1x32xf32>
    %99 = vector.extract_strided_slice %83 {offsets = [8, 0], sizes = [4, 128], strides = [1, 1]} : vector<16x128xf32> to vector<4x128xf32>
    %cst_92 = arith.constant dense<0.000000e+00> : vector<128xf32>
    %100 = vector.multi_reduction <add>, %99, %cst_92 [0] : vector<4x128xf32> to vector<128xf32>
    %101 = vector.shape_cast %100 : vector<128xf32> to vector<1x128xf32>
    %c2_93 = arith.constant 2 : index
    %c0_94 = arith.constant 0 : index
    %c0_95 = arith.constant 0 : index
    %102 = vector.load %arg11[%c2_93, %c0_94, %c0_95] : memref<4x128x32xf32, #tpu.memory_space<vmem>>, vector<1x128x32xf32>
    %103 = vector.shape_cast %102 : vector<1x128x32xf32> to vector<128x32xf32>
    %cst_96 = arith.constant dense<0.000000e+00> : vector<1x32xf32>
    %104 = tpu.matmul %101, %103, %cst_96 {dimension_numbers = #tpu.dot_dimension_numbers<[1], [0], [0], [1], [0, 0, 1, 1], [], []>} : vector<1x128xf32>, vector<128x32xf32>, vector<1x32xf32> -> vector<1x32xf32>
    %105 = arith.addf %98, %104 : vector<1x32xf32>
    %106 = vector.extract_strided_slice %83 {offsets = [12, 0], sizes = [4, 128], strides = [1, 1]} : vector<16x128xf32> to vector<4x128xf32>
    %cst_97 = arith.constant dense<0.000000e+00> : vector<128xf32>
    %107 = vector.multi_reduction <add>, %106, %cst_97 [0] : vector<4x128xf32> to vector<128xf32>
    %108 = vector.shape_cast %107 : vector<128xf32> to vector<1x128xf32>
    %c3 = arith.constant 3 : index
    %c0_98 = arith.constant 0 : index
    %c0_99 = arith.constant 0 : index
    %109 = vector.load %arg11[%c3, %c0_98, %c0_99] : memref<4x128x32xf32, #tpu.memory_space<vmem>>, vector<1x128x32xf32>
    %110 = vector.shape_cast %109 : vector<1x128x32xf32> to vector<128x32xf32>
    %cst_100 = arith.constant dense<0.000000e+00> : vector<1x32xf32>
    %111 = tpu.matmul %108, %110, %cst_100 {dimension_numbers = #tpu.dot_dimension_numbers<[1], [0], [0], [1], [0, 0, 1, 1], [], []>} : vector<1x128xf32>, vector<128x32xf32>, vector<1x32xf32> -> vector<1x32xf32>
    %112 = arith.addf %105, %111 : vector<1x32xf32>
    %cst_101 = arith.constant 0.000000e+00 : f32
    %113 = vector.broadcast %cst_101 : f32 to vector<1x32xf32>
    %114 = arith.cmpf ogt, %112, %113 : vector<1x32xf32>
    %cst_102 = arith.constant 0.000000e+00 : f32
    %115 = vector.broadcast %cst_102 : f32 to vector<1x32xf32>
    %116 = arith.minimumf %112, %115 : vector<1x32xf32>
    %117 = math.exp %116 : vector<1x32xf32>
    %cst_103 = arith.constant 1.000000e+00 : f32
    %118 = vector.broadcast %cst_103 : f32 to vector<1x32xf32>
    %119 = arith.subf %117, %118 : vector<1x32xf32>
    %120 = arith.select %114, %112, %119 : vector<1x32xi1>, vector<1x32xf32>
    %c0_104 = arith.constant 0 : index
    %c0_105 = arith.constant 0 : index
    %121 = vector.load %arg13[%c0_104, %c0_105] : memref<32x32xf32, #tpu.memory_space<vmem>>, vector<32x32xf32>
    %cst_106 = arith.constant dense<0.000000e+00> : vector<1x32xf32>
    %122 = tpu.matmul %120, %121, %cst_106 {dimension_numbers = #tpu.dot_dimension_numbers<[1], [0], [0], [1], [0, 0, 1, 1], [], []>} : vector<1x32xf32>, vector<32x32xf32>, vector<1x32xf32> -> vector<1x32xf32>
    %c0_107 = arith.constant 0 : index
    %c0_108 = arith.constant 0 : index
    %c0_109 = arith.constant 0 : index
    %123 = vector.load %arg2[%c0_107, %c0_108, %c0_109] : memref<1x1x16xf32, #tpu.memory_space<vmem>>, vector<1x1x16xf32>
    %124 = vector.shape_cast %123 : vector<1x1x16xf32> to vector<1x16xf32>
    %c0_110 = arith.constant 0 : index
    %c0_111 = arith.constant 0 : index
    %125 = vector.load %arg14[%c0_110, %c0_111] : memref<16x32xf32, #tpu.memory_space<vmem>>, vector<16x32xf32>
    %cst_112 = arith.constant dense<0.000000e+00> : vector<1x32xf32>
    %126 = tpu.matmul %124, %125, %cst_112 {dimension_numbers = #tpu.dot_dimension_numbers<[1], [0], [0], [1], [0, 0, 1, 1], [], []>} : vector<1x16xf32>, vector<16x32xf32>, vector<1x32xf32> -> vector<1x32xf32>
    %127 = arith.addf %122, %126 : vector<1x32xf32>
    %c0_113 = arith.constant 0 : index
    %c0_114 = arith.constant 0 : index
    %128 = vector.load %arg15[%c0_113, %c0_114] : memref<1x32xf32, #tpu.memory_space<vmem>>, vector<1x32xf32>
    %129 = arith.addf %127, %128 : vector<1x32xf32>
    %cst_115 = arith.constant 0.000000e+00 : f32
    %130 = vector.broadcast %cst_115 : f32 to vector<1x32xf32>
    %131 = arith.cmpf ogt, %129, %130 : vector<1x32xf32>
    %cst_116 = arith.constant 0.000000e+00 : f32
    %132 = vector.broadcast %cst_116 : f32 to vector<1x32xf32>
    %133 = arith.minimumf %129, %132 : vector<1x32xf32>
    %134 = math.exp %133 : vector<1x32xf32>
    %cst_117 = arith.constant 1.000000e+00 : f32
    %135 = vector.broadcast %cst_117 : f32 to vector<1x32xf32>
    %136 = arith.subf %134, %135 : vector<1x32xf32>
    %137 = arith.select %131, %129, %136 : vector<1x32xi1>, vector<1x32xf32>
    %c0_118 = arith.constant 0 : index
    %c0_119 = arith.constant 0 : index
    %c0_120 = arith.constant 0 : index
    %138 = vector.load %arg3[%c0_118, %c0_119, %c0_120] : memref<1x1x32xf32, #tpu.memory_space<vmem>>, vector<1x1x32xf32>
    %139 = vector.shape_cast %138 : vector<1x1x32xf32> to vector<1x32xf32>
    %c0_121 = arith.constant 0 : index
    %c0_122 = arith.constant 0 : index
    %c0_123 = arith.constant 0 : index
    %140 = vector.load %arg4[%c0_121, %c0_122, %c0_123] : memref<1x1x32xf32, #tpu.memory_space<vmem>>, vector<1x1x32xf32>
    %141 = vector.shape_cast %140 : vector<1x1x32xf32> to vector<1x32xf32>
    %c0_124 = arith.constant 0 : index
    %c0_125 = arith.constant 0 : index
    %142 = vector.load %arg16[%c0_124, %c0_125] : memref<32x128xf32, #tpu.memory_space<vmem>>, vector<32x128xf32>
    %cst_126 = arith.constant dense<0.000000e+00> : vector<1x128xf32>
    %143 = tpu.matmul %137, %142, %cst_126 {dimension_numbers = #tpu.dot_dimension_numbers<[1], [0], [0], [1], [0, 0, 1, 1], [], []>} : vector<1x32xf32>, vector<32x128xf32>, vector<1x128xf32> -> vector<1x128xf32>
    %c0_127 = arith.constant 0 : index
    %c0_128 = arith.constant 0 : index
    %144 = vector.load %arg17[%c0_127, %c0_128] : memref<32x128xf32, #tpu.memory_space<vmem>>, vector<32x128xf32>
    %cst_129 = arith.constant dense<0.000000e+00> : vector<1x128xf32>
    %145 = tpu.matmul %139, %144, %cst_129 {dimension_numbers = #tpu.dot_dimension_numbers<[1], [0], [0], [1], [0, 0, 1, 1], [], []>} : vector<1x32xf32>, vector<32x128xf32>, vector<1x128xf32> -> vector<1x128xf32>
    %146 = arith.addf %143, %145 : vector<1x128xf32>
    %c0_130 = arith.constant 0 : index
    %c0_131 = arith.constant 0 : index
    %147 = vector.load %arg18[%c0_130, %c0_131] : memref<1x128xf32, #tpu.memory_space<vmem>>, vector<1x128xf32>
    %148 = arith.addf %146, %147 : vector<1x128xf32>
    %cst_132 = arith.constant 0.000000e+00 : f32
    %149 = vector.broadcast %cst_132 : f32 to vector<1x128xf32>
    %150 = arith.subf %149, %148 : vector<1x128xf32>
    %151 = math.exp %150 : vector<1x128xf32>
    %cst_133 = arith.constant 1.000000e+00 : f32
    %152 = vector.broadcast %cst_133 : f32 to vector<1x128xf32>
    %153 = arith.addf %152, %151 : vector<1x128xf32>
    %154 = tpu.reciprocal %153 {approx = true} : vector<1x128xf32> -> vector<1x128xf32>
    %155 = math.tanh %148 : vector<1x128xf32>
    %156 = vector.extract_strided_slice %154 {offsets = [0, 0], sizes = [1, 32], strides = [1, 1]} : vector<1x128xf32> to vector<1x32xf32>
    %157 = vector.extract_strided_slice %154 {offsets = [0, 32], sizes = [1, 32], strides = [1, 1]} : vector<1x128xf32> to vector<1x32xf32>
    %158 = vector.extract_strided_slice %154 {offsets = [0, 96], sizes = [1, 32], strides = [1, 1]} : vector<1x128xf32> to vector<1x32xf32>
    %159 = vector.extract_strided_slice %155 {offsets = [0, 64], sizes = [1, 32], strides = [1, 1]} : vector<1x128xf32> to vector<1x32xf32>
    %160 = arith.mulf %157, %141 : vector<1x32xf32>
    %161 = arith.mulf %156, %159 : vector<1x32xf32>
    %162 = arith.addf %160, %161 : vector<1x32xf32>
    %163 = math.tanh %162 : vector<1x32xf32>
    %164 = arith.mulf %158, %163 : vector<1x32xf32>
    %c0_134 = arith.constant 0 : index
    %c0_135 = arith.constant 0 : index
    %165 = vector.load %arg19[%c0_134, %c0_135] : memref<32x8xf32, #tpu.memory_space<vmem>>, vector<32x8xf32>
    %cst_136 = arith.constant dense<0.000000e+00> : vector<1x8xf32>
    %166 = tpu.matmul %164, %165, %cst_136 {dimension_numbers = #tpu.dot_dimension_numbers<[1], [0], [0], [1], [0, 0, 1, 1], [], []>} : vector<1x32xf32>, vector<32x8xf32>, vector<1x8xf32> -> vector<1x8xf32>
    %c0_137 = arith.constant 0 : index
    %c0_138 = arith.constant 0 : index
    %167 = vector.load %arg20[%c0_137, %c0_138] : memref<1x8xf32, #tpu.memory_space<vmem>>, vector<1x8xf32>
    %168 = arith.addf %166, %167 : vector<1x8xf32>
    %c0_139 = arith.constant 0 : index
    %c0_140 = arith.constant 0 : index
    %c0_141 = arith.constant 0 : index
    %169 = vector.load %arg21[%c0_139, %c0_140, %c0_141] : memref<1x1x8xf32, #tpu.memory_space<vmem>>, vector<1x1x8xf32>
    %170 = vector.shape_cast %169 : vector<1x1x8xf32> to vector<1x8xf32>
    %171 = vector.shape_cast %168 : vector<1x8xf32> to vector<1x1x8xf32>
    tpu.vector_store %arg21[%c0_139, %c0_140, %c0_141], %171 {strides = array<i32>} : memref<1x1x8xf32, #tpu.memory_space<vmem>>, vector<1x1x8xf32>,
    %c0_142 = arith.constant 0 : index
    %c0_143 = arith.constant 0 : index
    %c0_144 = arith.constant 0 : index
    %172 = vector.load %arg22[%c0_142, %c0_143, %c0_144] : memref<1x1x32xf32, #tpu.memory_space<vmem>>, vector<1x1x32xf32>
    %173 = vector.shape_cast %172 : vector<1x1x32xf32> to vector<1x32xf32>
    %174 = vector.shape_cast %164 : vector<1x32xf32> to vector<1x1x32xf32>
    tpu.vector_store %arg22[%c0_142, %c0_143, %c0_144], %174 {strides = array<i32>} : memref<1x1x32xf32, #tpu.memory_space<vmem>>, vector<1x1x32xf32>,
    %c0_145 = arith.constant 0 : index
    %c0_146 = arith.constant 0 : index
    %c0_147 = arith.constant 0 : index
    %175 = vector.load %arg23[%c0_145, %c0_146, %c0_147] : memref<1x1x32xf32, #tpu.memory_space<vmem>>, vector<1x1x32xf32>
    %176 = vector.shape_cast %175 : vector<1x1x32xf32> to vector<1x32xf32>
    %177 = vector.shape_cast %162 : vector<1x32xf32> to vector<1x1x32xf32>
    tpu.vector_store %arg23[%c0_145, %c0_146, %c0_147], %177 {strides = array<i32>} : memref<1x1x32xf32, #tpu.memory_space<vmem>>, vector<1x1x32xf32>,
    return
  }
  func.func @transform_0(%arg0: i32) -> (i32, i32, i32) {
    %c0_i32 = arith.constant 0 : i32
    %c0_i32_0 = arith.constant 0 : i32
    %c0_i32_1 = arith.constant 0 : i32
    return %arg0, %c0_i32, %c0_i32_0 : i32, i32, i32
  }
  func.func @transform_1(%arg0: i32) -> (i32, i32, i32) {
    %c0_i32 = arith.constant 0 : i32
    %c0_i32_0 = arith.constant 0 : i32
    %c0_i32_1 = arith.constant 0 : i32
    return %arg0, %c0_i32, %c0_i32_0 : i32, i32, i32
  }
  func.func @transform_2(%arg0: i32) -> (i32, i32, i32) {
    %c0_i32 = arith.constant 0 : i32
    %c0_i32_0 = arith.constant 0 : i32
    %c0_i32_1 = arith.constant 0 : i32
    return %arg0, %c0_i32, %c0_i32_0 : i32, i32, i32
  }
  func.func @transform_3(%arg0: i32) -> (i32, i32, i32) {
    %c0_i32 = arith.constant 0 : i32
    %c0_i32_0 = arith.constant 0 : i32
    %c0_i32_1 = arith.constant 0 : i32
    return %arg0, %c0_i32, %c0_i32_0 : i32, i32, i32
  }
  func.func @transform_4(%arg0: i32) -> (i32, i32, i32) {
    %c0_i32 = arith.constant 0 : i32
    %c0_i32_0 = arith.constant 0 : i32
    %c0_i32_1 = arith.constant 0 : i32
    %c0_i32_2 = arith.constant 0 : i32
    return %c0_i32, %c0_i32_0, %c0_i32_1 : i32, i32, i32
  }
  func.func @transform_5(%arg0: i32) -> (i32, i32) {
    %c0_i32 = arith.constant 0 : i32
    %c0_i32_0 = arith.constant 0 : i32
    %c0_i32_1 = arith.constant 0 : i32
    return %c0_i32, %c0_i32_0 : i32, i32
  }
  func.func @transform_6(%arg0: i32) -> (i32, i32, i32) {
    %c0_i32 = arith.constant 0 : i32
    %c0_i32_0 = arith.constant 0 : i32
    %c0_i32_1 = arith.constant 0 : i32
    %c0_i32_2 = arith.constant 0 : i32
    return %c0_i32, %c0_i32_0, %c0_i32_1 : i32, i32, i32
  }
  func.func @transform_7(%arg0: i32) -> (i32, i32) {
    %c0_i32 = arith.constant 0 : i32
    %c0_i32_0 = arith.constant 0 : i32
    %c0_i32_1 = arith.constant 0 : i32
    return %c0_i32, %c0_i32_0 : i32, i32
  }
  func.func @transform_8(%arg0: i32) -> (i32, i32, i32) {
    %c0_i32 = arith.constant 0 : i32
    %c0_i32_0 = arith.constant 0 : i32
    %c0_i32_1 = arith.constant 0 : i32
    %c0_i32_2 = arith.constant 0 : i32
    return %c0_i32, %c0_i32_0, %c0_i32_1 : i32, i32, i32
  }
  func.func @transform_9(%arg0: i32) -> (i32, i32) {
    %c0_i32 = arith.constant 0 : i32
    %c0_i32_0 = arith.constant 0 : i32
    %c0_i32_1 = arith.constant 0 : i32
    return %c0_i32, %c0_i32_0 : i32, i32
  }
  func.func @transform_10(%arg0: i32) -> (i32, i32, i32) {
    %c0_i32 = arith.constant 0 : i32
    %c0_i32_0 = arith.constant 0 : i32
    %c0_i32_1 = arith.constant 0 : i32
    %c0_i32_2 = arith.constant 0 : i32
    return %c0_i32, %c0_i32_0, %c0_i32_1 : i32, i32, i32
  }
  func.func @transform_11(%arg0: i32) -> (i32, i32) {
    %c0_i32 = arith.constant 0 : i32
    %c0_i32_0 = arith.constant 0 : i32
    %c0_i32_1 = arith.constant 0 : i32
    return %c0_i32, %c0_i32_0 : i32, i32
  }
  func.func @transform_12(%arg0: i32) -> (i32, i32) {
    %c0_i32 = arith.constant 0 : i32
    %c0_i32_0 = arith.constant 0 : i32
    %c0_i32_1 = arith.constant 0 : i32
    return %c0_i32, %c0_i32_0 : i32, i32
  }
  func.func @transform_13(%arg0: i32) -> (i32, i32) {
    %c0_i32 = arith.constant 0 : i32
    %c0_i32_0 = arith.constant 0 : i32
    %c0_i32_1 = arith.constant 0 : i32
    return %c0_i32, %c0_i32_0 : i32, i32
  }
  func.func @transform_14(%arg0: i32) -> (i32, i32) {
    %c0_i32 = arith.constant 0 : i32
    %c0_i32_0 = arith.constant 0 : i32
    %c0_i32_1 = arith.constant 0 : i32
    return %c0_i32, %c0_i32_0 : i32, i32
  }
  func.func @transform_15(%arg0: i32) -> (i32, i32) {
    %c0_i32 = arith.constant 0 : i32
    %c0_i32_0 = arith.constant 0 : i32
    %c0_i32_1 = arith.constant 0 : i32
    return %c0_i32, %c0_i32_0 : i32, i32
  }
  func.func @transform_16(%arg0: i32) -> (i32, i32) {
    %c0_i32 = arith.constant 0 : i32
    %c0_i32_0 = arith.constant 0 : i32
    %c0_i32_1 = arith.constant 0 : i32
    return %c0_i32, %c0_i32_0 : i32, i32
  }
  func.func @transform_17(%arg0: i32) -> (i32, i32) {
    %c0_i32 = arith.constant 0 : i32
    %c0_i32_0 = arith.constant 0 : i32
    %c0_i32_1 = arith.constant 0 : i32
    return %c0_i32, %c0_i32_0 : i32, i32
  }
  func.func @transform_18(%arg0: i32) -> (i32, i32) {
    %c0_i32 = arith.constant 0 : i32
    %c0_i32_0 = arith.constant 0 : i32
    %c0_i32_1 = arith.constant 0 : i32
    return %c0_i32, %c0_i32_0 : i32, i32
  }
  func.func @transform_19(%arg0: i32) -> (i32, i32) {
    %c0_i32 = arith.constant 0 : i32
    %c0_i32_0 = arith.constant 0 : i32
    %c0_i32_1 = arith.constant 0 : i32
    return %c0_i32, %c0_i32_0 : i32, i32
  }
  func.func @transform_20(%arg0: i32) -> (i32, i32, i32) {
    %c0_i32 = arith.constant 0 : i32
    %c0_i32_0 = arith.constant 0 : i32
    %c0_i32_1 = arith.constant 0 : i32
    return %arg0, %c0_i32, %c0_i32_0 : i32, i32, i32
  }
  func.func @transform_21(%arg0: i32) -> (i32, i32, i32) {
    %c0_i32 = arith.constant 0 : i32
    %c0_i32_0 = arith.constant 0 : i32
    %c0_i32_1 = arith.constant 0 : i32
    return %arg0, %c0_i32, %c0_i32_0 : i32, i32, i32
  }
  func.func @transform_22(%arg0: i32) -> (i32, i32, i32) {
    %c0_i32 = arith.constant 0 : i32
    %c0_i32_0 = arith.constant 0 : i32
    %c0_i32_1 = arith.constant 0 : i32
    return %arg0, %c0_i32, %c0_i32_0 : i32, i32, i32
  }
}

</mosaic_0001>

<llo_original>
// kernel: refinement_forward.1
$region0: #{refinement_forward.1}
  #allocation0 [shape = 'u32[]', space=smem, size = 0x4, offset = 0x4, fixed_abs, tag = 'smem constant byte address 0x4 - core index']
  #allocation1 [shape = 'u32[144,128]{1,0:T(1,128)}', space=vmem, size = 0x12000, scoped, tag = 'internal scratch']
  #allocation2 [shape = 'f32[18,64]{1,0:T(8,128)}', space=vmem, size = 0x3000, scoped, tag = 'scratch operand']
  #allocation3 [shape = 'f32[18,128]{1,0:T(8,128)}', space=vmem, size = 0x3000, scoped, tag = 'scratch operand']
  %s0 = inlined_call_operand.vmem [shape: f32[2,16,64], index: 0, kind: input, shape index: {}]
  %s1 = inlined_call_operand.vmem [shape: f32[2,1,16], index: 1, kind: input, shape index: {}]
  %s2 = inlined_call_operand.vmem [shape: f32[2,1,32], index: 2, kind: input, shape index: {}, may-alias: {2,21}]
  %s3 = inlined_call_operand.vmem [shape: f32[2,1,32], index: 3, kind: input, shape index: {}, may-alias: {3,22}]
  %s4 = inlined_call_operand.vmem [shape: f32[3,64,128], index: 4, kind: input, shape index: {}]
  %s5 = inlined_call_operand.vmem [shape: f32[1,128], index: 5, kind: input, shape index: {}]
  %s6 = inlined_call_operand.vmem [shape: f32[3,128,128], index: 6, kind: input, shape index: {}]
  %s7 = inlined_call_operand.vmem [shape: f32[1,128], index: 7, kind: input, shape index: {}]
  %s8 = inlined_call_operand.vmem [shape: f32[3,128,128], index: 8, kind: input, shape index: {}]
  %s9 = inlined_call_operand.vmem [shape: f32[1,128], index: 9, kind: input, shape index: {}]
  %s10 = inlined_call_operand.vmem [shape: f32[4,128,32], index: 10, kind: input, shape index: {}]
  %s11 = inlined_call_operand.vmem [shape: f32[1,32], index: 11, kind: input, shape index: {}]
  %s12 = inlined_call_operand.vmem [shape: f32[32,32], index: 12, kind: input, shape index: {}]
  %s13 = inlined_call_operand.vmem [shape: f32[16,32], index: 13, kind: input, shape index: {}]
  %s14 = inlined_call_operand.vmem [shape: f32[1,32], index: 14, kind: input, shape index: {}]
  %s15 = inlined_call_operand.vmem [shape: f32[32,128], index: 15, kind: input, shape index: {}]
  %s16 = inlined_call_operand.vmem [shape: f32[32,128], index: 16, kind: input, shape index: {}]
  %s17 = inlined_call_operand.vmem [shape: f32[1,128], index: 17, kind: input, shape index: {}]
  %s18 = inlined_call_operand.vmem [shape: f32[32,8], index: 18, kind: input, shape index: {}]
  %s19 = inlined_call_operand.vmem [shape: f32[1,8], index: 19, kind: input, shape index: {}]
  %s20 = inlined_call_operand.hbm [shape: f32[2,1,8], index: 20, kind: output, shape index: {0}]
  %s21 = inlined_call_operand.vmem [shape: f32[2,1,32], index: 21, kind: output, shape index: {1}, may-alias: {2,21}]
  %s22 = inlined_call_operand.vmem [shape: f32[2,1,32], index: 22, kind: output, shape index: {2}, may-alias: {3,22}]
  %23 = xla_tuple %s20, %s21, %s22
  %s24 = sld [smem:[#allocation0]]
  $region129: #{refinement_forward.1} parent=0
    _
  %s26 = ssub.s32 1, %s24
  %s27 = scalar_select 0, %s26, %s24
  $region1: #{refinement_forward.1} parent=0
    #allocation4 [shape = 'u8[1024]{0}', space=vmem, size = 0x400, scoped, tag = 'output window, operand 0']
    #allocation5 [shape = 's32[2]{0}', space=sflag, size = 0x8, scoped, tag = 'scoped memory for refinement_forward.1']
    %28 = vsyncpa [#allocation5], 0
    %s29 = scalar_lea.sflag [#allocation5], 1
    %30 = vsyncpa %s29, 0
    loop: start=0, step=1, limit=4
    $region2: #{refinement_forward.1} parent=1 // loop_pre_header
      _
    $region3: #{refinement_forward.1} parent=1 // loop_header
      %s32 = sphi 0, %s36
      %p33 = scmp.ge.s32.totalorder %s32, 4
      %s42 = sphi 0, %s44
      %s45 = sphi 0, %s42
      %s46 = sphi 0, %s45
      %s62 = sphi 0, %s46
      %s68 = sphi 0, %s70
      %s71 = sphi 0, %s68
      %s72 = sphi 0, %s71
      %s88 = sphi 0, %s72
      %s94 = sphi 0, %s96
      %s97 = sphi 0, %s94
      %s98 = sphi 0, %s97
      %s114 = sphi 0, %s98
      %s120 = sphi 0, %s122
      %s123 = sphi 0, %s120
      %s124 = sphi 0, %s123
      %s140 = sphi 0, %s124
      %s144 = sphi 0, %s144
      %s146 = sphi 0, %s144
      %s147 = sphi 0, %s146
      %s161 = sphi 0, %s147
      %s165 = sphi 0, %s165
      %s167 = sphi 0, %s165
      %s168 = sphi 0, %s167
      %s182 = sphi 0, %s168
      %s186 = sphi 0, %s186
      %s188 = sphi 0, %s186
      %s189 = sphi 0, %s188
      %s203 = sphi 0, %s189
      %s207 = sphi 0, %s207
      %s209 = sphi 0, %s207
      %s210 = sphi 0, %s209
      %s224 = sphi 0, %s210
      %s228 = sphi 0, %s228
      %s230 = sphi 0, %s228
      %s231 = sphi 0, %s230
      %s245 = sphi 0, %s231
      %s249 = sphi 0, %s249
      %s251 = sphi 0, %s249
      %s252 = sphi 0, %s251
      %s266 = sphi 0, %s252
      %s270 = sphi 0, %s270
      %s272 = sphi 0, %s270
      %s273 = sphi 0, %s272
      %s287 = sphi 0, %s273
      %s291 = sphi 0, %s291
      %s293 = sphi 0, %s291
      %s294 = sphi 0, %s293
      %s308 = sphi 0, %s294
      %s312 = sphi 0, %s312
      %s314 = sphi 0, %s312
      %s315 = sphi 0, %s314
      %s329 = sphi 0, %s315
      %s333 = sphi 0, %s333
      %s335 = sphi 0, %s333
      %s336 = sphi 0, %s335
      %s350 = sphi 0, %s336
      %s354 = sphi 0, %s354
      %s356 = sphi 0, %s354
      %s357 = sphi 0, %s356
      %s371 = sphi 0, %s357
      %s375 = sphi 0, %s375
      %s377 = sphi 0, %s375
      %s378 = sphi 0, %s377
      %s392 = sphi 0, %s378
      %s396 = sphi 0, %s396
      %s398 = sphi 0, %s396
      %s399 = sphi 0, %s398
      %s413 = sphi 0, %s399
      %s417 = sphi 0, %s417
      %s419 = sphi 0, %s417
      %s420 = sphi 0, %s419
      %s434 = sphi 0, %s420
      %s438 = sphi 0, %s438
      %s440 = sphi 0, %s438
      %s441 = sphi 0, %s440
      %s455 = sphi 0, %s441
      %s459 = sphi 0, %s459
      %s461 = sphi 0, %s459
      %s462 = sphi 0, %s461
      %s476 = sphi 0, %s462
      %s482 = sphi 0, %s484
      %s485 = sphi 0, %s482
      %s486 = sphi 0, %s485
      %s502 = sphi 0, %s486
      %s508 = sphi 0, %s510
      %s511 = sphi 0, %s508
      %s512 = sphi 0, %s511
      %s528 = sphi 0, %s512
      %s534 = sphi 0, %s536
      %s537 = sphi 0, %s534
      %s538 = sphi 0, %s537
      %s554 = sphi 0, %s538
    $region4: #{refinement_forward.1} parent=1 // loop_header_branch
      %35 = sbr.rel (%p33) target = $region8
    $region5: #{refinement_forward.1} parent=1 // loop_body
      %s37 = ssub.s32 %s32, 1
      %s38 = ssub.s32 %s32, 2
      %s39 = sadd.s32 %s32, 1
      %s40 = ssub.s32 %s32, %s39
      %p41 = scmp.eq.s32.totalorder %s40, 0
      %s43 = sadd.s32 %s42, 1
      %s44 = scalar_select %p41, %s42, %s43
      %p47 = pneg %p41
      %p48 = scmp.eq.s32.totalorder %s32, 1
      %p49 = por %p47, %p48
      %p50 = scmp.ne.s32.totalorder %s42, %s45
      %p51 = scmp.eq.s32.totalorder %s32, 0
      %p52 = por %p50, %p51
      %p53 = scmp.ne.s32.totalorder %s42, %s45
      %p54 = scmp.eq.s32.totalorder %s37, 1
      %p55 = por %p53, %p54
      %p56 = scmp.ne.s32.totalorder %s45, %s46
      %p57 = scmp.eq.s32.totalorder %s37, 0
      %p58 = por %p56, %p57
      %p59 = scmp.ne.s32.totalorder %s45, %s46
      %p60 = scmp.eq.s32.totalorder %s38, 1
      %p61 = por %p59, %p60
      %p63 = scmp.ne.s32.totalorder %s46, %s62
      %p64 = scmp.eq.s32.totalorder %s38, 0
      %p65 = por %p63, %p64
      %s66 = ssub.s32 %s32, %s39
      %p67 = scmp.eq.s32.totalorder %s66, 0
      %s69 = sadd.s32 %s68, 1
      %s70 = scalar_select %p67, %s68, %s69
      %p73 = pneg %p67
      %p74 = scmp.eq.s32.totalorder %s32, 1
      %p75 = por %p73, %p74
      %p76 = scmp.ne.s32.totalorder %s68, %s71
      %p77 = scmp.eq.s32.totalorder %s32, 0
      %p78 = por %p76, %p77
      %p79 = scmp.ne.s32.totalorder %s68, %s71
      %p80 = scmp.eq.s32.totalorder %s37, 1
      %p81 = por %p79, %p80
      %p82 = scmp.ne.s32.totalorder %s71, %s72
      %p83 = scmp.eq.s32.totalorder %s37, 0
      %p84 = por %p82, %p83
      %p85 = scmp.ne.s32.totalorder %s71, %s72
      %p86 = scmp.eq.s32.totalorder %s38, 1
      %p87 = por %p85, %p86
      %p89 = scmp.ne.s32.totalorder %s72, %s88
      %p90 = scmp.eq.s32.totalorder %s38, 0
      %p91 = por %p89, %p90
      %s92 = ssub.s32 %s32, %s39
      %p93 = scmp.eq.s32.totalorder %s92, 0
      %s95 = sadd.s32 %s94, 1
      %s96 = scalar_select %p93, %s94, %s95
      %p99 = pneg %p93
      %p100 = scmp.eq.s32.totalorder %s32, 1
      %p101 = por %p99, %p100
      %p102 = scmp.ne.s32.totalorder %s94, %s97
      %p103 = scmp.eq.s32.totalorder %s32, 0
      %p104 = por %p102, %p103
      %p105 = scmp.ne.s32.totalorder %s94, %s97
      %p106 = scmp.eq.s32.totalorder %s37, 1
      %p107 = por %p105, %p106
      %p108 = scmp.ne.s32.totalorder %s97, %s98
      %p109 = scmp.eq.s32.totalorder %s37, 0
      %p110 = por %p108, %p109
      %p111 = scmp.ne.s32.totalorder %s97, %s98
      %p112 = scmp.eq.s32.totalorder %s38, 1
      %p113 = por %p111, %p112
      %p115 = scmp.ne.s32.totalorder %s98, %s114
      %p116 = scmp.eq.s32.totalorder %s38, 0
      %p117 = por %p115, %p116
      %s118 = ssub.s32 %s32, %s39
      %p119 = scmp.eq.s32.totalorder %s118, 0
      %s121 = sadd.s32 %s120, 1
      %s122 = scalar_select %p119, %s120, %s121
      %p125 = pneg %p119
      %p126 = scmp.eq.s32.totalorder %s32, 1
      %p127 = por %p125, %p126
      %p128 = scmp.ne.s32.totalorder %s120, %s123
      %p129 = scmp.eq.s32.totalorder %s32, 0
      %p130 = por %p128, %p129
      %p131 = scmp.ne.s32.totalorder %s120, %s123
      %p132 = scmp.eq.s32.totalorder %s37, 1
      %p133 = por %p131, %p132
      %p134 = scmp.ne.s32.totalorder %s123, %s124
      %p135 = scmp.eq.s32.totalorder %s37, 0
      %p136 = por %p134, %p135
      %p137 = scmp.ne.s32.totalorder %s123, %s124
      %p138 = scmp.eq.s32.totalorder %s38, 1
      %p139 = por %p137, %p138
      %p141 = scmp.ne.s32.totalorder %s124, %s140
      %p142 = scmp.eq.s32.totalorder %s38, 0
      %p143 = por %p141, %p142
      %s145 = sadd.s32 %s144, 1
      %p148 = scmp.eq.s32.totalorder %s32, 1
      %p149 = scmp.ne.s32.totalorder %s144, %s146
      %p150 = scmp.eq.s32.totalorder %s32, 0
      %p151 = por %p149, %p150
      %p152 = scmp.ne.s32.totalorder %s144, %s146
      %p153 = scmp.eq.s32.totalorder %s37, 1
      %p154 = por %p152, %p153
      %p155 = scmp.ne.s32.totalorder %s146, %s147
      %p156 = scmp.eq.s32.totalorder %s37, 0
      %p157 = por %p155, %p156
      %p158 = scmp.ne.s32.totalorder %s146, %s147
      %p159 = scmp.eq.s32.totalorder %s38, 1
      %p160 = por %p158, %p159
      %p162 = scmp.ne.s32.totalorder %s147, %s161
      %p163 = scmp.eq.s32.totalorder %s38, 0
      %p164 = por %p162, %p163
      %s166 = sadd.s32 %s165, 1
      %p169 = scmp.eq.s32.totalorder %s32, 1
      %p170 = scmp.ne.s32.totalorder %s165, %s167
      %p171 = scmp.eq.s32.totalorder %s32, 0
      %p172 = por %p170, %p171
      %p173 = scmp.ne.s32.totalorder %s165, %s167
      %p174 = scmp.eq.s32.totalorder %s37, 1
      %p175 = por %p173, %p174
      %p176 = scmp.ne.s32.totalorder %s167, %s168
      %p177 = scmp.eq.s32.totalorder %s37, 0
      %p178 = por %p176, %p177
      %p179 = scmp.ne.s32.totalorder %s167, %s168
      %p180 = scmp.eq.s32.totalorder %s38, 1
      %p181 = por %p179, %p180
      %p183 = scmp.ne.s32.totalorder %s168, %s182
      %p184 = scmp.eq.s32.totalorder %s38, 0
      %p185 = por %p183, %p184
      %s187 = sadd.s32 %s186, 1
      %p190 = scmp.eq.s32.totalorder %s32, 1
      %p191 = scmp.ne.s32.totalorder %s186, %s188
      %p192 = scmp.eq.s32.totalorder %s32, 0
      %p193 = por %p191, %p192
      %p194 = scmp.ne.s32.totalorder %s186, %s188
      %p195 = scmp.eq.s32.totalorder %s37, 1
      %p196 = por %p194, %p195
      %p197 = scmp.ne.s32.totalorder %s188, %s189
      %p198 = scmp.eq.s32.totalorder %s37, 0
      %p199 = por %p197, %p198
      %p200 = scmp.ne.s32.totalorder %s188, %s189
      %p201 = scmp.eq.s32.totalorder %s38, 1
      %p202 = por %p200, %p201
      %p204 = scmp.ne.s32.totalorder %s189, %s203
      %p205 = scmp.eq.s32.totalorder %s38, 0
      %p206 = por %p204, %p205
      %s208 = sadd.s32 %s207, 1
      %p211 = scmp.eq.s32.totalorder %s32, 1
      %p212 = scmp.ne.s32.totalorder %s207, %s209
      %p213 = scmp.eq.s32.totalorder %s32, 0
      %p214 = por %p212, %p213
      %p215 = scmp.ne.s32.totalorder %s207, %s209
      %p216 = scmp.eq.s32.totalorder %s37, 1
      %p217 = por %p215, %p216
      %p218 = scmp.ne.s32.totalorder %s209, %s210
      %p219 = scmp.eq.s32.totalorder %s37, 0
      %p220 = por %p218, %p219
      %p221 = scmp.ne.s32.totalorder %s209, %s210
      %p222 = scmp.eq.s32.totalorder %s38, 1
      %p223 = por %p221, %p222
      %p225 = scmp.ne.s32.totalorder %s210, %s224
      %p226 = scmp.eq.s32.totalorder %s38, 0
      %p227 = por %p225, %p226
      %s229 = sadd.s32 %s228, 1
      %p232 = scmp.eq.s32.totalorder %s32, 1
      %p233 = scmp.ne.s32.totalorder %s228, %s230
      %p234 = scmp.eq.s32.totalorder %s32, 0
      %p235 = por %p233, %p234
      %p236 = scmp.ne.s32.totalorder %s228, %s230
      %p237 = scmp.eq.s32.totalorder %s37, 1
      %p238 = por %p236, %p237
      %p239 = scmp.ne.s32.totalorder %s230, %s231
      %p240 = scmp.eq.s32.totalorder %s37, 0
      %p241 = por %p239, %p240
      %p242 = scmp.ne.s32.totalorder %s230, %s231
      %p243 = scmp.eq.s32.totalorder %s38, 1
      %p244 = por %p242, %p243
      %p246 = scmp.ne.s32.totalorder %s231, %s245
      %p247 = scmp.eq.s32.totalorder %s38, 0
      %p248 = por %p246, %p247
      %s250 = sadd.s32 %s249, 1
      %p253 = scmp.eq.s32.totalorder %s32, 1
      %p254 = scmp.ne.s32.totalorder %s249, %s251
      %p255 = scmp.eq.s32.totalorder %s32, 0
      %p256 = por %p254, %p255
      %p257 = scmp.ne.s32.totalorder %s249, %s251
      %p258 = scmp.eq.s32.totalorder %s37, 1
      %p259 = por %p257, %p258
      %p260 = scmp.ne.s32.totalorder %s251, %s252
      %p261 = scmp.eq.s32.totalorder %s37, 0
      %p262 = por %p260, %p261
      %p263 = scmp.ne.s32.totalorder %s251, %s252
      %p264 = scmp.eq.s32.totalorder %s38, 1
      %p265 = por %p263, %p264
      %p267 = scmp.ne.s32.totalorder %s252, %s266
      %p268 = scmp.eq.s32.totalorder %s38, 0
      %p269 = por %p267, %p268
      %s271 = sadd.s32 %s270, 1
      %p274 = scmp.eq.s32.totalorder %s32, 1
      %p275 = scmp.ne.s32.totalorder %s270, %s272
      %p276 = scmp.eq.s32.totalorder %s32, 0
      %p277 = por %p275, %p276
      %p278 = scmp.ne.s32.totalorder %s270, %s272
      %p279 = scmp.eq.s32.totalorder %s37, 1
      %p280 = por %p278, %p279
      %p281 = scmp.ne.s32.totalorder %s272, %s273
      %p282 = scmp.eq.s32.totalorder %s37, 0
      %p283 = por %p281, %p282
      %p284 = scmp.ne.s32.totalorder %s272, %s273
      %p285 = scmp.eq.s32.totalorder %s38, 1
      %p286 = por %p284, %p285
      %p288 = scmp.ne.s32.totalorder %s273, %s287
      %p289 = scmp.eq.s32.totalorder %s38, 0
      %p290 = por %p288, %p289
      %s292 = sadd.s32 %s291, 1
      %p295 = scmp.eq.s32.totalorder %s32, 1
      %p296 = scmp.ne.s32.totalorder %s291, %s293
      %p297 = scmp.eq.s32.totalorder %s32, 0
      %p298 = por %p296, %p297
      %p299 = scmp.ne.s32.totalorder %s291, %s293
      %p300 = scmp.eq.s32.totalorder %s37, 1
      %p301 = por %p299, %p300
      %p302 = scmp.ne.s32.totalorder %s293, %s294
      %p303 = scmp.eq.s32.totalorder %s37, 0
      %p304 = por %p302, %p303
      %p305 = scmp.ne.s32.totalorder %s293, %s294
      %p306 = scmp.eq.s32.totalorder %s38, 1
      %p307 = por %p305, %p306
      %p309 = scmp.ne.s32.totalorder %s294, %s308
      %p310 = scmp.eq.s32.totalorder %s38, 0
      %p311 = por %p309, %p310
      %s313 = sadd.s32 %s312, 1
      %p316 = scmp.eq.s32.totalorder %s32, 1
      %p317 = scmp.ne.s32.totalorder %s312, %s314
      %p318 = scmp.eq.s32.totalorder %s32, 0
      %p319 = por %p317, %p318
      %p320 = scmp.ne.s32.totalorder %s312, %s314
      %p321 = scmp.eq.s32.totalorder %s37, 1
      %p322 = por %p320, %p321
      %p323 = scmp.ne.s32.totalorder %s314, %s315
      %p324 = scmp.eq.s32.totalorder %s37, 0
      %p325 = por %p323, %p324
      %p326 = scmp.ne.s32.totalorder %s314, %s315
      %p327 = scmp.eq.s32.totalorder %s38, 1
      %p328 = por %p326, %p327
      %p330 = scmp.ne.s32.totalorder %s315, %s329
      %p331 = scmp.eq.s32.totalorder %s38, 0
      %p332 = por %p330, %p331
      %s334 = sadd.s32 %s333, 1
      %p337 = scmp.eq.s32.totalorder %s32, 1
      %p338 = scmp.ne.s32.totalorder %s333, %s335
      %p339 = scmp.eq.s32.totalorder %s32, 0
      %p340 = por %p338, %p339
      %p341 = scmp.ne.s32.totalorder %s333, %s335
      %p342 = scmp.eq.s32.totalorder %s37, 1
      %p343 = por %p341, %p342
      %p344 = scmp.ne.s32.totalorder %s335, %s336
      %p345 = scmp.eq.s32.totalorder %s37, 0
      %p346 = por %p344, %p345
      %p347 = scmp.ne.s32.totalorder %s335, %s336
      %p348 = scmp.eq.s32.totalorder %s38, 1
      %p349 = por %p347, %p348
      %p351 = scmp.ne.s32.totalorder %s336, %s350
      %p352 = scmp.eq.s32.totalorder %s38, 0
      %p353 = por %p351, %p352
      %s355 = sadd.s32 %s354, 1
      %p358 = scmp.eq.s32.totalorder %s32, 1
      %p359 = scmp.ne.s32.totalorder %s354, %s356
      %p360 = scmp.eq.s32.totalorder %s32, 0
      %p361 = por %p359, %p360
      %p362 = scmp.ne.s32.totalorder %s354, %s356
      %p363 = scmp.eq.s32.totalorder %s37, 1
      %p364 = por %p362, %p363
      %p365 = scmp.ne.s32.totalorder %s356, %s357
      %p366 = scmp.eq.s32.totalorder %s37, 0
      %p367 = por %p365, %p366
      %p368 = scmp.ne.s32.totalorder %s356, %s357
      %p369 = scmp.eq.s32.totalorder %s38, 1
      %p370 = por %p368, %p369
      %p372 = scmp.ne.s32.totalorder %s357, %s371
      %p373 = scmp.eq.s32.totalorder %s38, 0
      %p374 = por %p372, %p373
      %s376 = sadd.s32 %s375, 1
      %p379 = scmp.eq.s32.totalorder %s32, 1
      %p380 = scmp.ne.s32.totalorder %s375, %s377
      %p381 = scmp.eq.s32.totalorder %s32, 0
      %p382 = por %p380, %p381
      %p383 = scmp.ne.s32.totalorder %s375, %s377
      %p384 = scmp.eq.s32.totalorder %s37, 1
      %p385 = por %p383, %p384
      %p386 = scmp.ne.s32.totalorder %s377, %s378
      %p387 = scmp.eq.s32.totalorder %s37, 0
      %p388 = por %p386, %p387
      %p389 = scmp.ne.s32.totalorder %s377, %s378
      %p390 = scmp.eq.s32.totalorder %s38, 1
      %p391 = por %p389, %p390
      %p393 = scmp.ne.s32.totalorder %s378, %s392
      %p394 = scmp.eq.s32.totalorder %s38, 0
      %p395 = por %p393, %p394
      %s397 = sadd.s32 %s396, 1
      %p400 = scmp.eq.s32.totalorder %s32, 1
      %p401 = scmp.ne.s32.totalorder %s396, %s398
      %p402 = scmp.eq.s32.totalorder %s32, 0
      %p403 = por %p401, %p402
      %p404 = scmp.ne.s32.totalorder %s396, %s398
      %p405 = scmp.eq.s32.totalorder %s37, 1
      %p406 = por %p404, %p405
      %p407 = scmp.ne.s32.totalorder %s398, %s399
      %p408 = scmp.eq.s32.totalorder %s37, 0
      %p409 = por %p407, %p408
      %p410 = scmp.ne.s32.totalorder %s398, %s399
      %p411 = scmp.eq.s32.totalorder %s38, 1
      %p412 = por %p410, %p411
      %p414 = scmp.ne.s32.totalorder %s399, %s413
      %p415 = scmp.eq.s32.totalorder %s38, 0
      %p416 = por %p414, %p415
      %s418 = sadd.s32 %s417, 1
      %p421 = scmp.eq.s32.totalorder %s32, 1
      %p422 = scmp.ne.s32.totalorder %s417, %s419
      %p423 = scmp.eq.s32.totalorder %s32, 0
      %p424 = por %p422, %p423
      %p425 = scmp.ne.s32.totalorder %s417, %s419
      %p426 = scmp.eq.s32.totalorder %s37, 1
      %p427 = por %p425, %p426
      %p428 = scmp.ne.s32.totalorder %s419, %s420
      %p429 = scmp.eq.s32.totalorder %s37, 0
      %p430 = por %p428, %p429
      %p431 = scmp.ne.s32.totalorder %s419, %s420
      %p432 = scmp.eq.s32.totalorder %s38, 1
      %p433 = por %p431, %p432
      %p435 = scmp.ne.s32.totalorder %s420, %s434
      %p436 = scmp.eq.s32.totalorder %s38, 0
      %p437 = por %p435, %p436
      %s439 = sadd.s32 %s438, 1
      %p442 = scmp.eq.s32.totalorder %s32, 1
      %p443 = scmp.ne.s32.totalorder %s438, %s440
      %p444 = scmp.eq.s32.totalorder %s32, 0
      %p445 = por %p443, %p444
      %p446 = scmp.ne.s32.totalorder %s438, %s440
      %p447 = scmp.eq.s32.totalorder %s37, 1
      %p448 = por %p446, %p447
      %p449 = scmp.ne.s32.totalorder %s440, %s441
      %p450 = scmp.eq.s32.totalorder %s37, 0
      %p451 = por %p449, %p450
      %p452 = scmp.ne.s32.totalorder %s440, %s441
      %p453 = scmp.eq.s32.totalorder %s38, 1
      %p454 = por %p452, %p453
      %p456 = scmp.ne.s32.totalorder %s441, %s455
      %p457 = scmp.eq.s32.totalorder %s38, 0
      %p458 = por %p456, %p457
      %s460 = sadd.s32 %s459, 1
      %p463 = scmp.eq.s32.totalorder %s32, 1
      %p464 = scmp.ne.s32.totalorder %s459, %s461
      %p465 = scmp.eq.s32.totalorder %s32, 0
      %p466 = por %p464, %p465
      %p467 = scmp.ne.s32.totalorder %s459, %s461
      %p468 = scmp.eq.s32.totalorder %s37, 1
      %p469 = por %p467, %p468
      %p470 = scmp.ne.s32.totalorder %s461, %s462
      %p471 = scmp.eq.s32.totalorder %s37, 0
      %p472 = por %p470, %p471
      %p473 = scmp.ne.s32.totalorder %s461, %s462
      %p474 = scmp.eq.s32.totalorder %s38, 1
      %p475 = por %p473, %p474
      %p477 = scmp.ne.s32.totalorder %s462, %s476
      %p478 = scmp.eq.s32.totalorder %s38, 0
      %p479 = por %p477, %p478
      %s480 = ssub.s32 %s32, %s39
      %p481 = scmp.eq.s32.totalorder %s480, 0
      %s483 = sadd.s32 %s482, 1
      %s484 = scalar_select %p481, %s482, %s483
      %p487 = pneg %p481
      %p488 = scmp.eq.s32.totalorder %s32, 1
      %p489 = por %p487, %p488
      %p490 = scmp.ne.s32.totalorder %s482, %s485
      %p491 = scmp.eq.s32.totalorder %s32, 0
      %p492 = por %p490, %p491
      %p493 = scmp.ne.s32.totalorder %s482, %s485
      %p494 = scmp.eq.s32.totalorder %s37, 1
      %p495 = por %p493, %p494
      %p496 = scmp.ne.s32.totalorder %s485, %s486
      %p497 = scmp.eq.s32.totalorder %s37, 0
      %p498 = por %p496, %p497
      %p499 = scmp.ne.s32.totalorder %s485, %s486
      %p500 = scmp.eq.s32.totalorder %s38, 1
      %p501 = por %p499, %p500
      %p503 = scmp.ne.s32.totalorder %s486, %s502
      %p504 = scmp.eq.s32.totalorder %s38, 0
      %p505 = por %p503, %p504
      %s506 = ssub.s32 %s32, %s39
      %p507 = scmp.eq.s32.totalorder %s506, 0
      %s509 = sadd.s32 %s508, 1
      %s510 = scalar_select %p507, %s508, %s509
      %p513 = pneg %p507
      %p514 = scmp.eq.s32.totalorder %s32, 1
      %p515 = por %p513, %p514
      %p516 = scmp.ne.s32.totalorder %s508, %s511
      %p517 = scmp.eq.s32.totalorder %s32, 0
      %p518 = por %p516, %p517
      %p519 = scmp.ne.s32.totalorder %s508, %s511
      %p520 = scmp.eq.s32.totalorder %s37, 1
      %p521 = por %p519, %p520
      %p522 = scmp.ne.s32.totalorder %s511, %s512
      %p523 = scmp.eq.s32.totalorder %s37, 0
      %p524 = por %p522, %p523
      %p525 = scmp.ne.s32.totalorder %s511, %s512
      %p526 = scmp.eq.s32.totalorder %s38, 1
      %p527 = por %p525, %p526
      %p529 = scmp.ne.s32.totalorder %s512, %s528
      %p530 = scmp.eq.s32.totalorder %s38, 0
      %p531 = por %p529, %p530
      %s532 = ssub.s32 %s32, %s39
      %p533 = scmp.eq.s32.totalorder %s532, 0
      %s535 = sadd.s32 %s534, 1
      %s536 = scalar_select %p533, %s534, %s535
      %p539 = pneg %p533
      %p540 = scmp.eq.s32.totalorder %s32, 1
      %p541 = por %p539, %p540
      %p542 = scmp.ne.s32.totalorder %s534, %s537
      %p543 = scmp.eq.s32.totalorder %s32, 0
      %p544 = por %p542, %p543
      %p545 = scmp.ne.s32.totalorder %s534, %s537
      %p546 = scmp.eq.s32.totalorder %s37, 1
      %p547 = por %p545, %p546
      %p548 = scmp.ne.s32.totalorder %s537, %s538
      %p549 = scmp.eq.s32.totalorder %s37, 0
      %p550 = por %p548, %p549
      %p551 = scmp.ne.s32.totalorder %s537, %s538
      %p552 = scmp.eq.s32.totalorder %s38, 1
      %p553 = por %p551, %p552
      %p555 = scmp.ne.s32.totalorder %s538, %s554
      %p556 = scmp.eq.s32.totalorder %s38, 0
      %p557 = por %p555, %p556
      %p558 = scmp.le.s32.totalorder 1, %s32
      %p559 = scmp.lt.s32.totalorder %s32, 3
      %p560 = pnand %p558, %p559
      %p561 = pneg %p560
      // Predicated region
      $region9: #{refinement_forward.1} parent=5 // pred_check
        _
      $region10: #{refinement_forward.1} parent=5 // pred_check_branch
        %563 = sbr.rel (%p560) target = $region12
      $region11: #{refinement_forward.1} parent=5 // pred_region
        %s564 = ssub.s32 %s32, 1
        // Predicated region
        $region13: #{refinement_forward.1} parent=11 // pred_check
          %p565 = pneg %p157
        $region14: #{refinement_forward.1} parent=11 // pred_check_branch
          %567 = sbr.rel (%p565) target = $region16
        $region15: #{refinement_forward.1} parent=11 // pred_region
          _
        $region16: #{refinement_forward.1} parent=11 // pred_fallthru
          _
        // Predicated region
        $region17: #{refinement_forward.1} parent=11 // pred_check
          %p568 = pneg %p178
        $region18: #{refinement_forward.1} parent=11 // pred_check_branch
          %570 = sbr.rel (%p568) target = $region20
        $region19: #{refinement_forward.1} parent=11 // pred_region
          _
        $region20: #{refinement_forward.1} parent=11 // pred_fallthru
          _
        // Predicated region
        $region21: #{refinement_forward.1} parent=11 // pred_check
          %p571 = pneg %p199
        $region22: #{refinement_forward.1} parent=11 // pred_check_branch
          %573 = sbr.rel (%p571) target = $region24
        $region23: #{refinement_forward.1} parent=11 // pred_region
          _
        $region24: #{refinement_forward.1} parent=11 // pred_fallthru
          _
        // Predicated region
        $region25: #{refinement_forward.1} parent=11 // pred_check
          %p574 = pneg %p220
        $region26: #{refinement_forward.1} parent=11 // pred_check_branch
          %576 = sbr.rel (%p574) target = $region28
        $region27: #{refinement_forward.1} parent=11 // pred_region
          _
        $region28: #{refinement_forward.1} parent=11 // pred_fallthru
          _
        // Predicated region
        $region29: #{refinement_forward.1} parent=11 // pred_check
          %p577 = pneg %p241
        $region30: #{refinement_forward.1} parent=11 // pred_check_branch
          %579 = sbr.rel (%p577) target = $region32
        $region31: #{refinement_forward.1} parent=11 // pred_region
          _
        $region32: #{refinement_forward.1} parent=11 // pred_fallthru
          _
        // Predicated region
        $region33: #{refinement_forward.1} parent=11 // pred_check
          %p580 = pneg %p262
        $region34: #{refinement_forward.1} parent=11 // pred_check_branch
          %582 = sbr.rel (%p580) target = $region36
        $region35: #{refinement_forward.1} parent=11 // pred_region
          _
        $region36: #{refinement_forward.1} parent=11 // pred_fallthru
          _
        // Predicated region
        $region37: #{refinement_forward.1} parent=11 // pred_check
          %p583 = pneg %p283
        $region38: #{refinement_forward.1} parent=11 // pred_check_branch
          %585 = sbr.rel (%p583) target = $region40
        $region39: #{refinement_forward.1} parent=11 // pred_region
          _
        $region40: #{refinement_forward.1} parent=11 // pred_fallthru
          _
        // Predicated region
        $region41: #{refinement_forward.1} parent=11 // pred_check
          %p586 = pneg %p304
        $region42: #{refinement_forward.1} parent=11 // pred_check_branch
          %588 = sbr.rel (%p586) target = $region44
        $region43: #{refinement_forward.1} parent=11 // pred_region
          _
        $region44: #{refinement_forward.1} parent=11 // pred_fallthru
          _
        // Predicated region
        $region45: #{refinement_forward.1} parent=11 // pred_check
          %p589 = pneg %p325
        $region46: #{refinement_forward.1} parent=11 // pred_check_branch
          %591 = sbr.rel (%p589) target = $region48
        $region47: #{refinement_forward.1} parent=11 // pred_region
          _
        $region48: #{refinement_forward.1} parent=11 // pred_fallthru
          _
        // Predicated region
        $region49: #{refinement_forward.1} parent=11 // pred_check
          %p592 = pneg %p346
        $region50: #{refinement_forward.1} parent=11 // pred_check_branch
          %594 = sbr.rel (%p592) target = $region52
        $region51: #{refinement_forward.1} parent=11 // pred_region
          _
        $region52: #{refinement_forward.1} parent=11 // pred_fallthru
          _
        // Predicated region
        $region53: #{refinement_forward.1} parent=11 // pred_check
          %p595 = pneg %p367
        $region54: #{refinement_forward.1} parent=11 // pred_check_branch
          %597 = sbr.rel (%p595) target = $region56
        $region55: #{refinement_forward.1} parent=11 // pred_region
          _
        $region56: #{refinement_forward.1} parent=11 // pred_fallthru
          _
        // Predicated region
        $region57: #{refinement_forward.1} parent=11 // pred_check
          %p598 = pneg %p388
        $region58: #{refinement_forward.1} parent=11 // pred_check_branch
          %600 = sbr.rel (%p598) target = $region60
        $region59: #{refinement_forward.1} parent=11 // pred_region
          _
        $region60: #{refinement_forward.1} parent=11 // pred_fallthru
          _
        // Predicated region
        $region61: #{refinement_forward.1} parent=11 // pred_check
          %p601 = pneg %p409
        $region62: #{refinement_forward.1} parent=11 // pred_check_branch
          %603 = sbr.rel (%p601) target = $region64
        $region63: #{refinement_forward.1} parent=11 // pred_region
          _
        $region64: #{refinement_forward.1} parent=11 // pred_fallthru
          _
        // Predicated region
        $region65: #{refinement_forward.1} parent=11 // pred_check
          %p604 = pneg %p430
        $region66: #{refinement_forward.1} parent=11 // pred_check_branch
          %606 = sbr.rel (%p604) target = $region68
        $region67: #{refinement_forward.1} parent=11 // pred_region
          _
        $region68: #{refinement_forward.1} parent=11 // pred_fallthru
          _
        // Predicated region
        $region69: #{refinement_forward.1} parent=11 // pred_check
          %p607 = pneg %p451
        $region70: #{refinement_forward.1} parent=11 // pred_check_branch
          %609 = sbr.rel (%p607) target = $region72
        $region71: #{refinement_forward.1} parent=11 // pred_region
          _
        $region72: #{refinement_forward.1} parent=11 // pred_fallthru
          _
        // Predicated region
        $region73: #{refinement_forward.1} parent=11 // pred_check
          %p610 = pneg %p472
        $region74: #{refinement_forward.1} parent=11 // pred_check_branch
          %612 = sbr.rel (%p610) target = $region76
        $region75: #{refinement_forward.1} parent=11 // pred_region
          _
        $region76: #{refinement_forward.1} parent=11 // pred_fallthru
          _
      $region12: #{refinement_forward.1} parent=5 // pred_fallthru
        _
      %p613 = scmp.lt.s32.totalorder %s32, 2
      // Predicated region
      $region77: #{refinement_forward.1} parent=5 // pred_check
        %p614 = pneg %p613
      $region78: #{refinement_forward.1} parent=5 // pred_check_branch
        %616 = sbr.rel (%p614) target = $region80
      $region79: #{refinement_forward.1} parent=5 // pred_region
        // Predicated region
        $region81: #{refinement_forward.1} parent=79 // pred_check
          %p617 = pneg %p52
        $region82: #{refinement_forward.1} parent=79 // pred_check_branch
          %619 = sbr.rel (%p617) target = $region84
        $region83: #{refinement_forward.1} parent=79 // pred_region
          %p620 = scmp.lt.s32.totalorder %s32, 1
          %s621 = scalar_select %p620, %s32, 1
          %s622 = smul.addr %s621, 2
          %s623 = smul.addr %s622, 8
          %s624 = scalar_lea.vmem %s0, %s623
        $region84: #{refinement_forward.1} parent=79 // pred_fallthru
          _
        // Predicated region
        $region85: #{refinement_forward.1} parent=79 // pred_check
          %p625 = pneg %p78
        $region86: #{refinement_forward.1} parent=79 // pred_check_branch
          %627 = sbr.rel (%p625) target = $region88
        $region87: #{refinement_forward.1} parent=79 // pred_region
          %p628 = scmp.lt.s32.totalorder %s32, 1
          %s629 = scalar_select %p628, %s32, 1
          %s630 = scalar_lea.vmem %s1, %s629
        $region88: #{refinement_forward.1} parent=79 // pred_fallthru
          _
        // Predicated region
        $region89: #{refinement_forward.1} parent=79 // pred_check
          %p631 = pneg %p104
        $region90: #{refinement_forward.1} parent=79 // pred_check_branch
          %633 = sbr.rel (%p631) target = $region92
        $region91: #{refinement_forward.1} parent=79 // pred_region
          %p634 = scmp.lt.s32.totalorder %s32, 1
          %s635 = scalar_select %p634, %s32, 1
          %s636 = scalar_lea.vmem %s2, %s635
        $region92: #{refinement_forward.1} parent=79 // pred_fallthru
          _
        // Predicated region
        $region93: #{refinement_forward.1} parent=79 // pred_check
          %p637 = pneg %p130
        $region94: #{refinement_forward.1} parent=79 // pred_check_branch
          %639 = sbr.rel (%p637) target = $region96
        $region95: #{refinement_forward.1} parent=79 // pred_region
          %p640 = scmp.lt.s32.totalorder %s32, 1
          %s641 = scalar_select %p640, %s32, 1
          %s642 = scalar_lea.vmem %s3, %s641
        $region96: #{refinement_forward.1} parent=79 // pred_fallthru
          _
      $region80: #{refinement_forward.1} parent=5 // pred_fallthru
        _
      %p643 = scmp.le.s32.totalorder 1, %s32
      %p644 = scmp.lt.s32.totalorder %s32, 3
      %p645 = pnand %p643, %p644
      %p646 = pneg %p645
      // Predicated region
      $region97: #{refinement_forward.1} parent=5 // pred_check
        _
      $region98: #{refinement_forward.1} parent=5 // pred_check_branch
        %648 = sbr.rel (%p645) target = $region100
      $region99: #{refinement_forward.1} parent=5 // pred_region
        %s649 = ssub.s32 %s32, 1
        %p650 = scmp.lt.s32.totalorder %s37, 1
        %s651 = scalar_select %p650, %s37, 1
        %s652 = smul.addr %s651, 2
        %s653 = smul.addr %s652, 8
        %s654 = scalar_lea.vmem %s0, %s653
        %p655 = pneg %p58
        %p656 = pneg %p55
        %p657 = scmp.lt.s32.totalorder %s37, 1
        %s658 = scalar_select %p657, %s37, 1
        %s659 = scalar_lea.vmem %s1, %s658
        %p660 = pneg %p84
        %p661 = pneg %p81
        %p662 = scmp.lt.s32.totalorder %s37, 1
        %s663 = scalar_select %p662, %s37, 1
        %s664 = scalar_lea.vmem %s2, %s663
        %p665 = pneg %p110
        %p666 = pneg %p107
        %p667 = scmp.lt.s32.totalorder %s37, 1
        %s668 = scalar_select %p667, %s37, 1
        %s669 = scalar_lea.vmem %s3, %s668
        %p670 = pneg %p136
        %p671 = pneg %p133
        %p672 = pneg %p157
        %p673 = pneg %p154
        %p674 = pneg %p178
        %p675 = pneg %p175
        %p676 = pneg %p199
        %p677 = pneg %p196
        %p678 = pneg %p220
        %p679 = pneg %p217
        %p680 = pneg %p241
        %p681 = pneg %p238
        %p682 = pneg %p262
        %p683 = pneg %p259
        %p684 = pneg %p283
        %p685 = pneg %p280
        %p686 = pneg %p304
        %p687 = pneg %p301
        %p688 = pneg %p325
        %p689 = pneg %p322
        %p690 = pneg %p346
        %p691 = pneg %p343
        %p692 = pneg %p367
        %p693 = pneg %p364
        %p694 = pneg %p388
        %p695 = pneg %p385
        %p696 = pneg %p409
        %p697 = pneg %p406
        %p698 = pneg %p430
        %p699 = pneg %p427
        %p700 = pneg %p451
        %p701 = pneg %p448
        %p702 = pneg %p472
        %p703 = pneg %p469
        %p704 = pneg %p498
        %p705 = pneg %p495
        %s706 = sand.u32 %s485, 1
        %s707 = scalar_lea.sflag [#allocation5], %s706
        %s708 = sand.u32 %s485, 1
        %s709 = scalar_lea.vmem [#allocation4], %s708
        %p710 = pneg %p524
        %p711 = pneg %p521
        %p712 = scmp.lt.s32.totalorder %s37, 1
        %s713 = scalar_select %p712, %s37, 1
        %s714 = scalar_lea.vmem %s21, %s713
        %p715 = pneg %p550
        %p716 = pneg %p547
        %p717 = scmp.lt.s32.totalorder %s37, 1
        %s718 = scalar_select %p717, %s37, 1
        %s719 = scalar_lea.vmem %s22, %s718
        %p720 = scmp.lt.s32.totalorder %s37, 1
        %s721 = scalar_select %p720, %s37, 1
        %s722 = smul.addr %s721, 2
        %s723 = smul.addr %s722, 8
        %s724 = scalar_lea.vmem %s0, %s723
        %p725 = scmp.lt.s32.totalorder %s37, 1
        %s726 = scalar_select %p725, %s37, 1
        %s727 = scalar_lea.vmem %s1, %s726
        %p728 = scmp.lt.s32.totalorder %s37, 1
        %s729 = scalar_select %p728, %s37, 1
        %s730 = scalar_lea.vmem %s2, %s729
        %p731 = scmp.lt.s32.totalorder %s37, 1
        %s732 = scalar_select %p731, %s37, 1
        %s733 = scalar_lea.vmem %s3, %s732
        %p734 = scmp.lt.s32.totalorder %s37, 1
        %s735 = scalar_select %p734, %s37, 1
        %s736 = scalar_lea.vmem %s21, %s735
        %p737 = scmp.lt.s32.totalorder %s37, 1
        %s738 = scalar_select %p737, %s37, 1
        %s739 = scalar_lea.vmem %s22, %s738
        %vm740 = vcmask 523264
        %741 = vst.msk [vmem:[#allocation2] sm:$0xff] %vm740, 0.0
        %742 = vst.msk [vmem:[#allocation2 + $0x8] sm:$0xff] %vm740, 0.0
        %vm743 = vcmask 517120
        %744 = vst.msk [vmem:[#allocation2 + $0x10] sm:$0x3] %vm743, 0.0
        %745 = vst [vmem:[#allocation3] sm:$0xff] 0.0
        %746 = vst [vmem:[#allocation3 + $0x8] sm:$0xff] 0.0
        %747 = vst [vmem:[#allocation3 + $0x10] sm:$0x3] 0.0
        %v748 = vld [vmem:[%s724] sm:$0xff]
        %v749 = vld [vmem:[%s724 + $0x8] sm:$0xff]
        %750 = vst.msk [vmem:[#allocation2 + $0x1] sm:$0xff] %vm740, %v748
        %751 = vst.msk [vmem:[#allocation2 + $0x9] sm:$0xff] %vm740, %v749
        %v752 = vld [vmem:[#allocation2] sm:$0xff]
        %v753 = vld [vmem:[#allocation2 + $0x8] sm:$0xff]
        %v754 = vld [vmem:[%s4] sm:$0xff]
        %v755 = vld [vmem:[%s4 + $0x8] sm:$0xff]
        %v756 = vld [vmem:[%s4 + $0x10] sm:$0xff]
        %v757 = vld [vmem:[%s4 + $0x18] sm:$0xff]
        %v758 = vld [vmem:[%s4 + $0x20] sm:$0xff]
        %v759 = vld [vmem:[%s4 + $0x28] sm:$0xff]
        %v760 = vld [vmem:[%s4 + $0x30] sm:$0xff]
        %v761 = vld [vmem:[%s4 + $0x38] sm:$0xff]
        %v762 = vld [vmem:[#allocation2 + $0x1] sm:$0xff]
        %v763 = vld [vmem:[#allocation2 + $0x9] sm:$0xff]
        %s764 = scalar_lea.vmem %s4, 64
        %v765 = vld [vmem:[%s764] sm:$0xff]
        %v766 = vld [vmem:[%s764 + $0x8] sm:$0xff]
        %v767 = vld [vmem:[%s764 + $0x10] sm:$0xff]
        %v768 = vld [vmem:[%s764 + $0x18] sm:$0xff]
        %v769 = vld [vmem:[%s764 + $0x20] sm:$0xff]
        %v770 = vld [vmem:[%s764 + $0x28] sm:$0xff]
        %v771 = vld [vmem:[%s764 + $0x30] sm:$0xff]
        %v772 = vld [vmem:[%s764 + $0x38] sm:$0xff]
        %v774 = vsel %vm740, %v762, 0
        %v777 = vsel %vm740, %v763, 0
        %779 = vmatprep.subr.mxu0 0.0
        %780 = vmatpush1.msra.mxu0 %v765
        %781 = vmatprep.subr.mxu0 0.0
        %782 = vmatpush1.msra.mxu0 %v766
        %783 = vmatprep.subr.mxu0 0.0
        %784 = vmatpush1.msra.mxu0 %v767
        %785 = vmatprep.subr.mxu0 0.0
        %786 = vmatpush1.msra.mxu0 %v768
        %787 = vmatprep.subr.mxu0 0.0
        %788 = vmatpush1.msra.mxu0 %v769
        %789 = vmatprep.subr.mxu0 0.0
        %790 = vmatpush1.msra.mxu0 %v770
        %791 = vmatprep.subr.mxu0 0.0
        %792 = vmatpush1.msra.mxu0 %v771
        %793 = vmatprep.subr.mxu0 0.0
        %794 = vmatpush1.msra.mxu0 %v772
        %795 = vmatprep.subr.mxu0 0.0
        %796 = vmatpush1.msra.mxu0 0.0
        %797 = vmatprep.subr.mxu0 0.0
        %798 = vmatpush1.msra.mxu0 0.0
        %799 = vmatprep.subr.mxu0 0.0
        %800 = vmatpush1.msra.mxu0 0.0
        %801 = vmatprep.subr.mxu0 0.0
        %802 = vmatpush1.msra.mxu0 0.0
        %803 = vmatprep.subr.mxu0 0.0
        %804 = vmatpush1.msra.mxu0 0.0
        %805 = vmatprep.subr.mxu0 0.0
        %806 = vmatpush1.msra.mxu0 0.0
        %807 = vmatprep.subr.mxu0 0.0
        %808 = vmatpush1.msra.mxu0 0.0
        %809 = vmatprep.subr.mxu0 0.0
        %810 = vmatpush1.msra.mxu0 0.0
        %811 = vmatprep.subr.mxu0 0.0
        %812 = vmatpush1.msra.mxu0 0.0
        %813 = vmatprep.subr.mxu0 0.0
        %814 = vmatpush1.msra.mxu0 0.0
        %815 = vmatprep.subr.mxu0 0.0
        %816 = vmatpush1.msra.mxu0 0.0
        %817 = vmatprep.subr.mxu0 0.0
        %818 = vmatpush1.msra.mxu0 0.0
        %819 = vmatprep.subr.mxu0 0.0
        %820 = vmatpush1.msra.mxu0 0.0
        %821 = vmatprep.subr.mxu0 0.0
        %822 = vmatpush1.msra.mxu0 0.0
        %823 = vmatprep.subr.mxu0 0.0
        %824 = vmatpush1.msra.mxu0 0.0
        %825 = vmatprep.subr.mxu0 0.0
        %826 = vmatpush1.msra.mxu0 0.0
        %827 = vmatprep.subr.mxu0 0.0
        %828 = vmatpush1.msra.mxu0 0.0
        %829 = vmatprep.subr.mxu0 0.0
        %830 = vmatpush1.msra.mxu0 0.0
        %831 = vmatprep.subr.mxu0 0.0
        %832 = vmatpush1.msra.mxu0 0.0
        %833 = vmatprep.subr.mxu0 0.0
        %834 = vmatpush1.msra.mxu0 0.0
        %835 = vmatprep.subr.mxu0 0.0
        %836 = vmatpush1.msra.mxu0 0.0
        %837 = vmatprep.subr.mxu0 0.0
        %838 = vmatpush1.msra.mxu0 0.0
        %839 = vmatprep.subr.mxu0 0.0
        %840 = vmatpush1.msra.mxu0 0.0
        %841 = vmatprep.subr.mxu0 0.0
        %842 = vmatpush1.msra.mxu0 0.0
        %843 = vmatprep.mubr.f32.mxu0 0.0
        %844 = vmatmul.mubr.f32.gmra.mrb[0].mxu0 %v774
        %v845 = vpop.f32.mrb[0].mxu0
        %v846 = vadd.f32 0.0, %v845
        %v847 = vpop.f32.mrb[0].mxu0
        %848 = vmatprep.mubr.f32.mxu0 0.0
        %849 = vmatmul.mubr.f32.gmra.mrb[0].mxu0 %v777
        %v850 = vpop.f32.mrb[0].mxu0
        %v851 = vadd.f32 0.0, %v850
        %v852 = vpop.f32.mrb[0].mxu0
        %853 = vdwg.mxu0
        %v855 = vsel %vm740, %v752, 0
        %v858 = vsel %vm740, %v753, 0
        %860 = vmatprep.subr.mxu0 0.0
        %861 = vmatpush1.msra.mxu0 %v754
        %862 = vmatprep.subr.mxu0 0.0
        %863 = vmatpush1.msra.mxu0 %v755
        %864 = vmatprep.subr.mxu0 0.0
        %865 = vmatpush1.msra.mxu0 %v756
        %866 = vmatprep.subr.mxu0 0.0
        %867 = vmatpush1.msra.mxu0 %v757
        %868 = vmatprep.subr.mxu0 0.0
        %869 = vmatpush1.msra.mxu0 %v758
        %870 = vmatprep.subr.mxu0 0.0
        %871 = vmatpush1.msra.mxu0 %v759
        %872 = vmatprep.subr.mxu0 0.0
        %873 = vmatpush1.msra.mxu0 %v760
        %874 = vmatprep.subr.mxu0 0.0
        %875 = vmatpush1.msra.mxu0 %v761
        %876 = vmatprep.subr.mxu0 0.0
        %877 = vmatpush1.msra.mxu0 0.0
        %878 = vmatprep.subr.mxu0 0.0
        %879 = vmatpush1.msra.mxu0 0.0
        %880 = vmatprep.subr.mxu0 0.0
        %881 = vmatpush1.msra.mxu0 0.0
        %882 = vmatprep.subr.mxu0 0.0
        %883 = vmatpush1.msra.mxu0 0.0
        %884 = vmatprep.subr.mxu0 0.0
        %885 = vmatpush1.msra.mxu0 0.0
        %886 = vmatprep.subr.mxu0 0.0
        %887 = vmatpush1.msra.mxu0 0.0
        %888 = vmatprep.subr.mxu0 0.0
        %889 = vmatpush1.msra.mxu0 0.0
        %890 = vmatprep.subr.mxu0 0.0
        %891 = vmatpush1.msra.mxu0 0.0
        %892 = vmatprep.subr.mxu0 0.0
        %893 = vmatpush1.msra.mxu0 0.0
        %894 = vmatprep.subr.mxu0 0.0
        %895 = vmatpush1.msra.mxu0 0.0
        %896 = vmatprep.subr.mxu0 0.0
        %897 = vmatpush1.msra.mxu0 0.0
        %898 = vmatprep.subr.mxu0 0.0
        %899 = vmatpush1.msra.mxu0 0.0
        %900 = vmatprep.subr.mxu0 0.0
        %901 = vmatpush1.msra.mxu0 0.0
        %902 = vmatprep.subr.mxu0 0.0
        %903 = vmatpush1.msra.mxu0 0.0
        %904 = vmatprep.subr.mxu0 0.0
        %905 = vmatpush1.msra.mxu0 0.0
        %906 = vmatprep.subr.mxu0 0.0
        %907 = vmatpush1.msra.mxu0 0.0
        %908 = vmatprep.subr.mxu0 0.0
        %909 = vmatpush1.msra.mxu0 0.0
        %910 = vmatprep.subr.mxu0 0.0
        %911 = vmatpush1.msra.mxu0 0.0
        %912 = vmatprep.subr.mxu0 0.0
        %913 = vmatpush1.msra.mxu0 0.0
        %914 = vmatprep.subr.mxu0 0.0
        %915 = vmatpush1.msra.mxu0 0.0
        %916 = vmatprep.subr.mxu0 0.0
        %917 = vmatpush1.msra.mxu0 0.0
        %918 = vmatprep.subr.mxu0 0.0
        %919 = vmatpush1.msra.mxu0 0.0
        %920 = vmatprep.subr.mxu0 0.0
        %921 = vmatpush1.msra.mxu0 0.0
        %922 = vmatprep.subr.mxu0 0.0
        %923 = vmatpush1.msra.mxu0 0.0
        %924 = vmatprep.mubr.f32.mxu0 0.0
        %925 = vmatmul.mubr.f32.gmra.mrb[0].mxu0 %v855
        %v926 = vpop.f32.mrb[0].mxu0
        %v927 = vadd.f32 %v846, %v926
        %v928 = vpop.f32.mrb[0].mxu0
        %929 = vmatprep.mubr.f32.mxu0 0.0
        %930 = vmatmul.mubr.f32.gmra.mrb[0].mxu0 %v858
        %v931 = vpop.f32.mrb[0].mxu0
        %v932 = vadd.f32 %v851, %v931
        %v933 = vpop.f32.mrb[0].mxu0
        %934 = vdwg.mxu0
        %v935 = vld [vmem:[#allocation2 + $0x2] sm:$0xff]
        %v936 = vld [vmem:[#allocation2 + $0xa] sm:$0xff]
        %s937 = scalar_lea.vmem %s4, 128
        %v938 = vld [vmem:[%s937] sm:$0xff]
        %v939 = vld [vmem:[%s937 + $0x8] sm:$0xff]
        %v940 = vld [vmem:[%s937 + $0x10] sm:$0xff]
        %v941 = vld [vmem:[%s937 + $0x18] sm:$0xff]
        %v942 = vld [vmem:[%s937 + $0x20] sm:$0xff]
        %v943 = vld [vmem:[%s937 + $0x28] sm:$0xff]
        %v944 = vld [vmem:[%s937 + $0x30] sm:$0xff]
        %v945 = vld [vmem:[%s937 + $0x38] sm:$0xff]
        %v947 = vsel %vm740, %v935, 0
        %v950 = vsel %vm740, %v936, 0
        %952 = vmatprep.subr.mxu0 0.0
        %953 = vmatpush1.msra.mxu0 %v938
        %954 = vmatprep.subr.mxu0 0.0
        %955 = vmatpush1.msra.mxu0 %v939
        %956 = vmatprep.subr.mxu0 0.0
        %957 = vmatpush1.msra.mxu0 %v940
        %958 = vmatprep.subr.mxu0 0.0
        %959 = vmatpush1.msra.mxu0 %v941
        %960 = vmatprep.subr.mxu0 0.0
        %961 = vmatpush1.msra.mxu0 %v942
        %962 = vmatprep.subr.mxu0 0.0
        %963 = vmatpush1.msra.mxu0 %v943
        %964 = vmatprep.subr.mxu0 0.0
        %965 = vmatpush1.msra.mxu0 %v944
        %966 = vmatprep.subr.mxu0 0.0
        %967 = vmatpush1.msra.mxu0 %v945
        %968 = vmatprep.subr.mxu0 0.0
        %969 = vmatpush1.msra.mxu0 0.0
        %970 = vmatprep.subr.mxu0 0.0
        %971 = vmatpush1.msra.mxu0 0.0
        %972 = vmatprep.subr.mxu0 0.0
        %973 = vmatpush1.msra.mxu0 0.0
        %974 = vmatprep.subr.mxu0 0.0
        %975 = vmatpush1.msra.mxu0 0.0
        %976 = vmatprep.subr.mxu0 0.0
        %977 = vmatpush1.msra.mxu0 0.0
        %978 = vmatprep.subr.mxu0 0.0
        %979 = vmatpush1.msra.mxu0 0.0
        %980 = vmatprep.subr.mxu0 0.0
        %981 = vmatpush1.msra.mxu0 0.0
        %982 = vmatprep.subr.mxu0 0.0
        %983 = vmatpush1.msra.mxu0 0.0
        %984 = vmatprep.subr.mxu0 0.0
        %985 = vmatpush1.msra.mxu0 0.0
        %986 = vmatprep.subr.mxu0 0.0
        %987 = vmatpush1.msra.mxu0 0.0
        %988 = vmatprep.subr.mxu0 0.0
        %989 = vmatpush1.msra.mxu0 0.0
        %990 = vmatprep.subr.mxu0 0.0
        %991 = vmatpush1.msra.mxu0 0.0
        %992 = vmatprep.subr.mxu0 0.0
        %993 = vmatpush1.msra.mxu0 0.0
        %994 = vmatprep.subr.mxu0 0.0
        %995 = vmatpush1.msra.mxu0 0.0
        %996 = vmatprep.subr.mxu0 0.0
        %997 = vmatpush1.msra.mxu0 0.0
        %998 = vmatprep.subr.mxu0 0.0
        %999 = vmatpush1.msra.mxu0 0.0
        %1000 = vmatprep.subr.mxu0 0.0
        %1001 = vmatpush1.msra.mxu0 0.0
        %1002 = vmatprep.subr.mxu0 0.0
        %1003 = vmatpush1.msra.mxu0 0.0
        %1004 = vmatprep.subr.mxu0 0.0
        %1005 = vmatpush1.msra.mxu0 0.0
        %1006 = vmatprep.subr.mxu0 0.0
        %1007 = vmatpush1.msra.mxu0 0.0
        %1008 = vmatprep.subr.mxu0 0.0
        %1009 = vmatpush1.msra.mxu0 0.0
        %1010 = vmatprep.subr.mxu0 0.0
        %1011 = vmatpush1.msra.mxu0 0.0
        %1012 = vmatprep.subr.mxu0 0.0
        %1013 = vmatpush1.msra.mxu0 0.0
        %1014 = vmatprep.subr.mxu0 0.0
        %1015 = vmatpush1.msra.mxu0 0.0
        %1016 = vmatprep.mubr.f32.mxu0 0.0
        %1017 = vmatmul.mubr.f32.gmra.mrb[0].mxu0 %v947
        %v1018 = vpop.f32.mrb[0].mxu0
        %v1019 = vadd.f32 0.0, %v1018
        %v1020 = vpop.f32.mrb[0].mxu0
        %1021 = vmatprep.mubr.f32.mxu0 0.0
        %1022 = vmatmul.mubr.f32.gmra.mrb[0].mxu0 %v950
        %v1023 = vpop.f32.mrb[0].mxu0
        %v1024 = vadd.f32 0.0, %v1023
        %v1025 = vpop.f32.mrb[0].mxu0
        %1026 = vdwg.mxu0
        %v1027 = vadd.f32 %v927, %v1019
        %v1028 = vadd.f32 %v932, %v1024
        %v1029 = vld [vmem:[%s5] sm:$0x1]
        %v1031 = vlaneseq
        %v1032 = vshrl.u32 %v1031, 7
        %v1033 = vsub.s32 0, %v1032
        %v1034 = vrot.slane %v1029, %v1033
        %v1036 = vadd.f32 %v1027, %v1034
        %v1037 = vadd.f32 %v1028, %v1034
        %vm1038 = vcmp.gt.f32.partialorder %v1036, 0.0
        %vm1039 = vcmp.gt.f32.partialorder %v1037, 0.0
        %v1040 = vmin.f32 %v1036, 0.0
        %v1041 = vmin.f32 %v1037, 0.0
        %v1042 = vmul.f32 %v1040, 1.442695
        %v1043 = vpow.pop %v1042
        %v1044 = vmul.f32 %v1041, 1.442695
        %v1045 = vpow.pop %v1044
        %v1046 = vsub.f32 %v1043, 1.0
        %v1047 = vsub.f32 %v1045, 1.0
        %v1048 = vsel %vm1038, %v1036, %v1046
        %v1049 = vsel %vm1039, %v1037, %v1047
        %1050 = vst [vmem:[#allocation3 + $0x1] sm:$0xff] %v1048
        %1051 = vst [vmem:[#allocation3 + $0x9] sm:$0xff] %v1049
        %v1052 = vld [vmem:[#allocation3] sm:$0xff]
        %v1053 = vld [vmem:[#allocation3 + $0x8] sm:$0xff]
        %v1054 = vld [vmem:[%s6] sm:$0xff]
        %v1055 = vld [vmem:[%s6 + $0x8] sm:$0xff]
        %v1056 = vld [vmem:[%s6 + $0x10] sm:$0xff]
        %v1057 = vld [vmem:[%s6 + $0x18] sm:$0xff]
        %v1058 = vld [vmem:[%s6 + $0x20] sm:$0xff]
        %v1059 = vld [vmem:[%s6 + $0x28] sm:$0xff]
        %v1060 = vld [vmem:[%s6 + $0x30] sm:$0xff]
        %v1061 = vld [vmem:[%s6 + $0x38] sm:$0xff]
        %v1062 = vld [vmem:[%s6 + $0x40] sm:$0xff]
        %v1063 = vld [vmem:[%s6 + $0x48] sm:$0xff]
        %v1064 = vld [vmem:[%s6 + $0x50] sm:$0xff]
        %v1065 = vld [vmem:[%s6 + $0x58] sm:$0xff]
        %v1066 = vld [vmem:[%s6 + $0x60] sm:$0xff]
        %v1067 = vld [vmem:[%s6 + $0x68] sm:$0xff]
        %v1068 = vld [vmem:[%s6 + $0x70] sm:$0xff]
        %v1069 = vld [vmem:[%s6 + $0x78] sm:$0xff]
        %v1070 = vld [vmem:[#allocation3 + $0x1] sm:$0xff]
        %v1071 = vld [vmem:[#allocation3 + $0x9] sm:$0xff]
        %s1072 = scalar_lea.vmem %s6, 128
        %v1073 = vld [vmem:[%s1072] sm:$0xff]
        %v1074 = vld [vmem:[%s1072 + $0x8] sm:$0xff]
        %v1075 = vld [vmem:[%s1072 + $0x10] sm:$0xff]
        %v1076 = vld [vmem:[%s1072 + $0x18] sm:$0xff]
        %v1077 = vld [vmem:[%s1072 + $0x20] sm:$0xff]
        %v1078 = vld [vmem:[%s1072 + $0x28] sm:$0xff]
        %v1079 = vld [vmem:[%s1072 + $0x30] sm:$0xff]
        %v1080 = vld [vmem:[%s1072 + $0x38] sm:$0xff]
        %v1081 = vld [vmem:[%s1072 + $0x40] sm:$0xff]
        %v1082 = vld [vmem:[%s1072 + $0x48] sm:$0xff]
        %v1083 = vld [vmem:[%s1072 + $0x50] sm:$0xff]
        %v1084 = vld [vmem:[%s1072 + $0x58] sm:$0xff]
        %v1085 = vld [vmem:[%s1072 + $0x60] sm:$0xff]
        %v1086 = vld [vmem:[%s1072 + $0x68] sm:$0xff]
        %v1087 = vld [vmem:[%s1072 + $0x70] sm:$0xff]
        %v1088 = vld [vmem:[%s1072 + $0x78] sm:$0xff]
        %1089 = vmatprep.subr.mxu0 0.0
        %1090 = vmatpush1.msra.mxu0 %v1073
        %1091 = vmatprep.subr.mxu0 0.0
        %1092 = vmatpush1.msra.mxu0 %v1074
        %1093 = vmatprep.subr.mxu0 0.0
        %1094 = vmatpush1.msra.mxu0 %v1075
        %1095 = vmatprep.subr.mxu0 0.0
        %1096 = vmatpush1.msra.mxu0 %v1076
        %1097 = vmatprep.subr.mxu0 0.0
        %1098 = vmatpush1.msra.mxu0 %v1077
        %1099 = vmatprep.subr.mxu0 0.0
        %1100 = vmatpush1.msra.mxu0 %v1078
        %1101 = vmatprep.subr.mxu0 0.0
        %1102 = vmatpush1.msra.mxu0 %v1079
        %1103 = vmatprep.subr.mxu0 0.0
        %1104 = vmatpush1.msra.mxu0 %v1080
        %1105 = vmatprep.subr.mxu0 0.0
        %1106 = vmatpush1.msra.mxu0 %v1081
        %1107 = vmatprep.subr.mxu0 0.0
        %1108 = vmatpush1.msra.mxu0 %v1082
        %1109 = vmatprep.subr.mxu0 0.0
        %1110 = vmatpush1.msra.mxu0 %v1083
        %1111 = vmatprep.subr.mxu0 0.0
        %1112 = vmatpush1.msra.mxu0 %v1084
        %1113 = vmatprep.subr.mxu0 0.0
        %1114 = vmatpush1.msra.mxu0 %v1085
        %1115 = vmatprep.subr.mxu0 0.0
        %1116 = vmatpush1.msra.mxu0 %v1086
        %1117 = vmatprep.subr.mxu0 0.0
        %1118 = vmatpush1.msra.mxu0 %v1087
        %1119 = vmatprep.subr.mxu0 0.0
        %1120 = vmatpush1.msra.mxu0 %v1088
        %1121 = vmatprep.subr.mxu0 0.0
        %1122 = vmatpush1.msra.mxu0 0.0
        %1123 = vmatprep.subr.mxu0 0.0
        %1124 = vmatpush1.msra.mxu0 0.0
        %1125 = vmatprep.subr.mxu0 0.0
        %1126 = vmatpush1.msra.mxu0 0.0
        %1127 = vmatprep.subr.mxu0 0.0
        %1128 = vmatpush1.msra.mxu0 0.0
        %1129 = vmatprep.subr.mxu0 0.0
        %1130 = vmatpush1.msra.mxu0 0.0
        %1131 = vmatprep.subr.mxu0 0.0
        %1132 = vmatpush1.msra.mxu0 0.0
        %1133 = vmatprep.subr.mxu0 0.0
        %1134 = vmatpush1.msra.mxu0 0.0
        %1135 = vmatprep.subr.mxu0 0.0
        %1136 = vmatpush1.msra.mxu0 0.0
        %1137 = vmatprep.subr.mxu0 0.0
        %1138 = vmatpush1.msra.mxu0 0.0
        %1139 = vmatprep.subr.mxu0 0.0
        %1140 = vmatpush1.msra.mxu0 0.0
        %1141 = vmatprep.subr.mxu0 0.0
        %1142 = vmatpush1.msra.mxu0 0.0
        %1143 = vmatprep.subr.mxu0 0.0
        %1144 = vmatpush1.msra.mxu0 0.0
        %1145 = vmatprep.subr.mxu0 0.0
        %1146 = vmatpush1.msra.mxu0 0.0
        %1147 = vmatprep.subr.mxu0 0.0
        %1148 = vmatpush1.msra.mxu0 0.0
        %1149 = vmatprep.subr.mxu0 0.0
        %1150 = vmatpush1.msra.mxu0 0.0
        %1151 = vmatprep.subr.mxu0 0.0
        %1152 = vmatpush1.msra.mxu0 0.0
        %1153 = vmatprep.mubr.f32.mxu0 0.0
        %1154 = vmatmul.mubr.f32.gmra.mrb[0].mxu0 %v1070
        %v1155 = vpop.f32.mrb[0].mxu0
        %v1156 = vadd.f32 0.0, %v1155
        %v1157 = vpop.f32.mrb[0].mxu0
        %1158 = vmatprep.mubr.f32.mxu0 0.0
        %1159 = vmatmul.mubr.f32.gmra.mrb[0].mxu0 %v1071
        %v1160 = vpop.f32.mrb[0].mxu0
        %v1161 = vadd.f32 0.0, %v1160
        %v1162 = vpop.f32.mrb[0].mxu0
        %1163 = vdwg.mxu0
        %1164 = vmatprep.subr.mxu0 0.0
        %1165 = vmatpush1.msra.mxu0 %v1054
        %1166 = vmatprep.subr.mxu0 0.0
        %1167 = vmatpush1.msra.mxu0 %v1055
        %1168 = vmatprep.subr.mxu0 0.0
        %1169 = vmatpush1.msra.mxu0 %v1056
        %1170 = vmatprep.subr.mxu0 0.0
        %1171 = vmatpush1.msra.mxu0 %v1057
        %1172 = vmatprep.subr.mxu0 0.0
        %1173 = vmatpush1.msra.mxu0 %v1058
        %1174 = vmatprep.subr.mxu0 0.0
        %1175 = vmatpush1.msra.mxu0 %v1059
        %1176 = vmatprep.subr.mxu0 0.0
        %1177 = vmatpush1.msra.mxu0 %v1060
        %1178 = vmatprep.subr.mxu0 0.0
        %1179 = vmatpush1.msra.mxu0 %v1061
        %1180 = vmatprep.subr.mxu0 0.0
        %1181 = vmatpush1.msra.mxu0 %v1062
        %1182 = vmatprep.subr.mxu0 0.0
        %1183 = vmatpush1.msra.mxu0 %v1063
        %1184 = vmatprep.subr.mxu0 0.0
        %1185 = vmatpush1.msra.mxu0 %v1064
        %1186 = vmatprep.subr.mxu0 0.0
        %1187 = vmatpush1.msra.mxu0 %v1065
        %1188 = vmatprep.subr.mxu0 0.0
        %1189 = vmatpush1.msra.mxu0 %v1066
        %1190 = vmatprep.subr.mxu0 0.0
        %1191 = vmatpush1.msra.mxu0 %v1067
        %1192 = vmatprep.subr.mxu0 0.0
        %1193 = vmatpush1.msra.mxu0 %v1068
        %1194 = vmatprep.subr.mxu0 0.0
        %1195 = vmatpush1.msra.mxu0 %v1069
        %1196 = vmatprep.subr.mxu0 0.0
        %1197 = vmatpush1.msra.mxu0 0.0
        %1198 = vmatprep.subr.mxu0 0.0
        %1199 = vmatpush1.msra.mxu0 0.0
        %1200 = vmatprep.subr.mxu0 0.0
        %1201 = vmatpush1.msra.mxu0 0.0
        %1202 = vmatprep.subr.mxu0 0.0
        %1203 = vmatpush1.msra.mxu0 0.0
        %1204 = vmatprep.subr.mxu0 0.0
        %1205 = vmatpush1.msra.mxu0 0.0
        %1206 = vmatprep.subr.mxu0 0.0
        %1207 = vmatpush1.msra.mxu0 0.0
        %1208 = vmatprep.subr.mxu0 0.0
        %1209 = vmatpush1.msra.mxu0 0.0
        %1210 = vmatprep.subr.mxu0 0.0
        %1211 = vmatpush1.msra.mxu0 0.0
        %1212 = vmatprep.subr.mxu0 0.0
        %1213 = vmatpush1.msra.mxu0 0.0
        %1214 = vmatprep.subr.mxu0 0.0
        %1215 = vmatpush1.msra.mxu0 0.0
        %1216 = vmatprep.subr.mxu0 0.0
        %1217 = vmatpush1.msra.mxu0 0.0
        %1218 = vmatprep.subr.mxu0 0.0
        %1219 = vmatpush1.msra.mxu0 0.0
        %1220 = vmatprep.subr.mxu0 0.0
        %1221 = vmatpush1.msra.mxu0 0.0
        %1222 = vmatprep.subr.mxu0 0.0
        %1223 = vmatpush1.msra.mxu0 0.0
        %1224 = vmatprep.subr.mxu0 0.0
        %1225 = vmatpush1.msra.mxu0 0.0
        %1226 = vmatprep.subr.mxu0 0.0
        %1227 = vmatpush1.msra.mxu0 0.0
        %1228 = vmatprep.mubr.f32.mxu0 0.0
        %1229 = vmatmul.mubr.f32.gmra.mrb[0].mxu0 %v1052
        %v1230 = vpop.f32.mrb[0].mxu0
        %v1231 = vadd.f32 %v1156, %v1230
        %v1232 = vpop.f32.mrb[0].mxu0
        %1233 = vmatprep.mubr.f32.mxu0 0.0
        %1234 = vmatmul.mubr.f32.gmra.mrb[0].mxu0 %v1053
        %v1235 = vpop.f32.mrb[0].mxu0
        %v1236 = vadd.f32 %v1161, %v1235
        %v1237 = vpop.f32.mrb[0].mxu0
        %1238 = vdwg.mxu0
        %v1239 = vld [vmem:[#allocation3 + $0x2] sm:$0xff]
        %v1240 = vld [vmem:[#allocation3 + $0xa] sm:$0xff]
        %s1241 = scalar_lea.vmem %s6, 256
        %v1242 = vld [vmem:[%s1241] sm:$0xff]
        %v1243 = vld [vmem:[%s1241 + $0x8] sm:$0xff]
        %v1244 = vld [vmem:[%s1241 + $0x10] sm:$0xff]
        %v1245 = vld [vmem:[%s1241 + $0x18] sm:$0xff]
        %v1246 = vld [vmem:[%s1241 + $0x20] sm:$0xff]
        %v1247 = vld [vmem:[%s1241 + $0x28] sm:$0xff]
        %v1248 = vld [vmem:[%s1241 + $0x30] sm:$0xff]
        %v1249 = vld [vmem:[%s1241 + $0x38] sm:$0xff]
        %v1250 = vld [vmem:[%s1241 + $0x40] sm:$0xff]
        %v1251 = vld [vmem:[%s1241 + $0x48] sm:$0xff]
        %v1252 = vld [vmem:[%s1241 + $0x50] sm:$0xff]
        %v1253 = vld [vmem:[%s1241 + $0x58] sm:$0xff]
        %v1254 = vld [vmem:[%s1241 + $0x60] sm:$0xff]
        %v1255 = vld [vmem:[%s1241 + $0x68] sm:$0xff]
        %v1256 = vld [vmem:[%s1241 + $0x70] sm:$0xff]
        %v1257 = vld [vmem:[%s1241 + $0x78] sm:$0xff]
        %1258 = vmatprep.subr.mxu0 0.0
        %1259 = vmatpush1.msra.mxu0 %v1242
        %1260 = vmatprep.subr.mxu0 0.0
        %1261 = vmatpush1.msra.mxu0 %v1243
        %1262 = vmatprep.subr.mxu0 0.0
        %1263 = vmatpush1.msra.mxu0 %v1244
        %1264 = vmatprep.subr.mxu0 0.0
        %1265 = vmatpush1.msra.mxu0 %v1245
        %1266 = vmatprep.subr.mxu0 0.0
        %1267 = vmatpush1.msra.mxu0 %v1246
        %1268 = vmatprep.subr.mxu0 0.0
        %1269 = vmatpush1.msra.mxu0 %v1247
        %1270 = vmatprep.subr.mxu0 0.0
        %1271 = vmatpush1.msra.mxu0 %v1248
        %1272 = vmatprep.subr.mxu0 0.0
        %1273 = vmatpush1.msra.mxu0 %v1249
        %1274 = vmatprep.subr.mxu0 0.0
        %1275 = vmatpush1.msra.mxu0 %v1250
        %1276 = vmatprep.subr.mxu0 0.0
        %1277 = vmatpush1.msra.mxu0 %v1251
        %1278 = vmatprep.subr.mxu0 0.0
        %1279 = vmatpush1.msra.mxu0 %v1252
        %1280 = vmatprep.subr.mxu0 0.0
        %1281 = vmatpush1.msra.mxu0 %v1253
        %1282 = vmatprep.subr.mxu0 0.0
        %1283 = vmatpush1.msra.mxu0 %v1254
        %1284 = vmatprep.subr.mxu0 0.0
        %1285 = vmatpush1.msra.mxu0 %v1255
        %1286 = vmatprep.subr.mxu0 0.0
        %1287 = vmatpush1.msra.mxu0 %v1256
        %1288 = vmatprep.subr.mxu0 0.0
        %1289 = vmatpush1.msra.mxu0 %v1257
        %1290 = vmatprep.subr.mxu0 0.0
        %1291 = vmatpush1.msra.mxu0 0.0
        %1292 = vmatprep.subr.mxu0 0.0
        %1293 = vmatpush1.msra.mxu0 0.0
        %1294 = vmatprep.subr.mxu0 0.0
        %1295 = vmatpush1.msra.mxu0 0.0
        %1296 = vmatprep.subr.mxu0 0.0
        %1297 = vmatpush1.msra.mxu0 0.0
        %1298 = vmatprep.subr.mxu0 0.0
        %1299 = vmatpush1.msra.mxu0 0.0
        %1300 = vmatprep.subr.mxu0 0.0
        %1301 = vmatpush1.msra.mxu0 0.0
        %1302 = vmatprep.subr.mxu0 0.0
        %1303 = vmatpush1.msra.mxu0 0.0
        %1304 = vmatprep.subr.mxu0 0.0
        %1305 = vmatpush1.msra.mxu0 0.0
        %1306 = vmatprep.subr.mxu0 0.0
        %1307 = vmatpush1.msra.mxu0 0.0
        %1308 = vmatprep.subr.mxu0 0.0
        %1309 = vmatpush1.msra.mxu0 0.0
        %1310 = vmatprep.subr.mxu0 0.0
        %1311 = vmatpush1.msra.mxu0 0.0
        %1312 = vmatprep.subr.mxu0 0.0
        %1313 = vmatpush1.msra.mxu0 0.0
        %1314 = vmatprep.subr.mxu0 0.0
        %1315 = vmatpush1.msra.mxu0 0.0
        %1316 = vmatprep.subr.mxu0 0.0
        %1317 = vmatpush1.msra.mxu0 0.0
        %1318 = vmatprep.subr.mxu0 0.0
        %1319 = vmatpush1.msra.mxu0 0.0
        %1320 = vmatprep.subr.mxu0 0.0
        %1321 = vmatpush1.msra.mxu0 0.0
        %1322 = vmatprep.mubr.f32.mxu0 0.0
        %1323 = vmatmul.mubr.f32.gmra.mrb[0].mxu0 %v1239
        %v1324 = vpop.f32.mrb[0].mxu0
        %v1325 = vadd.f32 0.0, %v1324
        %v1326 = vpop.f32.mrb[0].mxu0
        %1327 = vmatprep.mubr.f32.mxu0 0.0
        %1328 = vmatmul.mubr.f32.gmra.mrb[0].mxu0 %v1240
        %v1329 = vpop.f32.mrb[0].mxu0
        %v1330 = vadd.f32 0.0, %v1329
        %v1331 = vpop.f32.mrb[0].mxu0
        %1332 = vdwg.mxu0
        %v1333 = vadd.f32 %v1231, %v1325
        %v1334 = vadd.f32 %v1236, %v1330
        %v1335 = vld [vmem:[%s7] sm:$0x1]
        %v1337 = vlaneseq
        %v1338 = vshrl.u32 %v1337, 7
        %v1339 = vsub.s32 0, %v1338
        %v1340 = vrot.slane %v1335, %v1339
        %v1342 = vadd.f32 %v1333, %v1340
        %v1343 = vadd.f32 %v1334, %v1340
        %vm1344 = vcmp.gt.f32.partialorder %v1342, 0.0
        %vm1345 = vcmp.gt.f32.partialorder %v1343, 0.0
        %v1346 = vmin.f32 %v1342, 0.0
        %v1347 = vmin.f32 %v1343, 0.0
        %v1348 = vmul.f32 %v1346, 1.442695
        %v1349 = vpow.pop %v1348
        %v1350 = vmul.f32 %v1347, 1.442695
        %v1351 = vpow.pop %v1350
        %v1352 = vsub.f32 %v1349, 1.0
        %v1353 = vsub.f32 %v1351, 1.0
        %v1354 = vsel %vm1344, %v1342, %v1352
        %v1355 = vsel %vm1345, %v1343, %v1353
        %1356 = vst [vmem:[#allocation3 + $0x1] sm:$0xff] %v1354
        %1357 = vst [vmem:[#allocation3 + $0x9] sm:$0xff] %v1355
        %v1358 = vld [vmem:[#allocation3] sm:$0xff]
        %v1359 = vld [vmem:[#allocation3 + $0x8] sm:$0xff]
        %v1360 = vld [vmem:[%s8] sm:$0xff]
        %v1361 = vld [vmem:[%s8 + $0x8] sm:$0xff]
        %v1362 = vld [vmem:[%s8 + $0x10] sm:$0xff]
        %v1363 = vld [vmem:[%s8 + $0x18] sm:$0xff]
        %v1364 = vld [vmem:[%s8 + $0x20] sm:$0xff]
        %v1365 = vld [vmem:[%s8 + $0x28] sm:$0xff]
        %v1366 = vld [vmem:[%s8 + $0x30] sm:$0xff]
        %v1367 = vld [vmem:[%s8 + $0x38] sm:$0xff]
        %v1368 = vld [vmem:[%s8 + $0x40] sm:$0xff]
        %v1369 = vld [vmem:[%s8 + $0x48] sm:$0xff]
        %v1370 = vld [vmem:[%s8 + $0x50] sm:$0xff]
        %v1371 = vld [vmem:[%s8 + $0x58] sm:$0xff]
        %v1372 = vld [vmem:[%s8 + $0x60] sm:$0xff]
        %v1373 = vld [vmem:[%s8 + $0x68] sm:$0xff]
        %v1374 = vld [vmem:[%s8 + $0x70] sm:$0xff]
        %v1375 = vld [vmem:[%s8 + $0x78] sm:$0xff]
        %v1376 = vld [vmem:[#allocation3 + $0x1] sm:$0xff]
        %v1377 = vld [vmem:[#allocation3 + $0x9] sm:$0xff]
        %s1378 = scalar_lea.vmem %s8, 128
        %v1379 = vld [vmem:[%s1378] sm:$0xff]
        %v1380 = vld [vmem:[%s1378 + $0x8] sm:$0xff]
        %v1381 = vld [vmem:[%s1378 + $0x10] sm:$0xff]
        %v1382 = vld [vmem:[%s1378 + $0x18] sm:$0xff]
        %v1383 = vld [vmem:[%s1378 + $0x20] sm:$0xff]
        %v1384 = vld [vmem:[%s1378 + $0x28] sm:$0xff]
        %v1385 = vld [vmem:[%s1378 + $0x30] sm:$0xff]
        %v1386 = vld [vmem:[%s1378 + $0x38] sm:$0xff]
        %v1387 = vld [vmem:[%s1378 + $0x40] sm:$0xff]
        %v1388 = vld [vmem:[%s1378 + $0x48] sm:$0xff]
        %v1389 = vld [vmem:[%s1378 + $0x50] sm:$0xff]
        %v1390 = vld [vmem:[%s1378 + $0x58] sm:$0xff]
        %v1391 = vld [vmem:[%s1378 + $0x60] sm:$0xff]
        %v1392 = vld [vmem:[%s1378 + $0x68] sm:$0xff]
        %v1393 = vld [vmem:[%s1378 + $0x70] sm:$0xff]
        %v1394 = vld [vmem:[%s1378 + $0x78] sm:$0xff]
        %1395 = vmatprep.subr.mxu0 0.0
        %1396 = vmatpush1.msra.mxu0 %v1379
        %1397 = vmatprep.subr.mxu0 0.0
        %1398 = vmatpush1.msra.mxu0 %v1380
        %1399 = vmatprep.subr.mxu0 0.0
        %1400 = vmatpush1.msra.mxu0 %v1381
        %1401 = vmatprep.subr.mxu0 0.0
        %1402 = vmatpush1.msra.mxu0 %v1382
        %1403 = vmatprep.subr.mxu0 0.0
        %1404 = vmatpush1.msra.mxu0 %v1383
        %1405 = vmatprep.subr.mxu0 0.0
        %1406 = vmatpush1.msra.mxu0 %v1384
        %1407 = vmatprep.subr.mxu0 0.0
        %1408 = vmatpush1.msra.mxu0 %v1385
        %1409 = vmatprep.subr.mxu0 0.0
        %1410 = vmatpush1.msra.mxu0 %v1386
        %1411 = vmatprep.subr.mxu0 0.0
        %1412 = vmatpush1.msra.mxu0 %v1387
        %1413 = vmatprep.subr.mxu0 0.0
        %1414 = vmatpush1.msra.mxu0 %v1388
        %1415 = vmatprep.subr.mxu0 0.0
        %1416 = vmatpush1.msra.mxu0 %v1389
        %1417 = vmatprep.subr.mxu0 0.0
        %1418 = vmatpush1.msra.mxu0 %v1390
        %1419 = vmatprep.subr.mxu0 0.0
        %1420 = vmatpush1.msra.mxu0 %v1391
        %1421 = vmatprep.subr.mxu0 0.0
        %1422 = vmatpush1.msra.mxu0 %v1392
        %1423 = vmatprep.subr.mxu0 0.0
        %1424 = vmatpush1.msra.mxu0 %v1393
        %1425 = vmatprep.subr.mxu0 0.0
        %1426 = vmatpush1.msra.mxu0 %v1394
        %1427 = vmatprep.subr.mxu0 0.0
        %1428 = vmatpush1.msra.mxu0 0.0
        %1429 = vmatprep.subr.mxu0 0.0
        %1430 = vmatpush1.msra.mxu0 0.0
        %1431 = vmatprep.subr.mxu0 0.0
        %1432 = vmatpush1.msra.mxu0 0.0
        %1433 = vmatprep.subr.mxu0 0.0
        %1434 = vmatpush1.msra.mxu0 0.0
        %1435 = vmatprep.subr.mxu0 0.0
        %1436 = vmatpush1.msra.mxu0 0.0
        %1437 = vmatprep.subr.mxu0 0.0
        %1438 = vmatpush1.msra.mxu0 0.0
        %1439 = vmatprep.subr.mxu0 0.0
        %1440 = vmatpush1.msra.mxu0 0.0
        %1441 = vmatprep.subr.mxu0 0.0
        %1442 = vmatpush1.msra.mxu0 0.0
        %1443 = vmatprep.subr.mxu0 0.0
        %1444 = vmatpush1.msra.mxu0 0.0
        %1445 = vmatprep.subr.mxu0 0.0
        %1446 = vmatpush1.msra.mxu0 0.0
        %1447 = vmatprep.subr.mxu0 0.0
        %1448 = vmatpush1.msra.mxu0 0.0
        %1449 = vmatprep.subr.mxu0 0.0
        %1450 = vmatpush1.msra.mxu0 0.0
        %1451 = vmatprep.subr.mxu0 0.0
        %1452 = vmatpush1.msra.mxu0 0.0
        %1453 = vmatprep.subr.mxu0 0.0
        %1454 = vmatpush1.msra.mxu0 0.0
        %1455 = vmatprep.subr.mxu0 0.0
        %1456 = vmatpush1.msra.mxu0 0.0
        %1457 = vmatprep.subr.mxu0 0.0
        %1458 = vmatpush1.msra.mxu0 0.0
        %1459 = vmatprep.mubr.f32.mxu0 0.0
        %1460 = vmatmul.mubr.f32.gmra.mrb[0].mxu0 %v1376
        %v1461 = vpop.f32.mrb[0].mxu0
        %v1462 = vadd.f32 0.0, %v1461
        %v1463 = vpop.f32.mrb[0].mxu0
        %1464 = vmatprep.mubr.f32.mxu0 0.0
        %1465 = vmatmul.mubr.f32.gmra.mrb[0].mxu0 %v1377
        %v1466 = vpop.f32.mrb[0].mxu0
        %v1467 = vadd.f32 0.0, %v1466
        %v1468 = vpop.f32.mrb[0].mxu0
        %1469 = vdwg.mxu0
        %1470 = vmatprep.subr.mxu0 0.0
        %1471 = vmatpush1.msra.mxu0 %v1360
        %1472 = vmatprep.subr.mxu0 0.0
        %1473 = vmatpush1.msra.mxu0 %v1361
        %1474 = vmatprep.subr.mxu0 0.0
        %1475 = vmatpush1.msra.mxu0 %v1362
        %1476 = vmatprep.subr.mxu0 0.0
        %1477 = vmatpush1.msra.mxu0 %v1363
        %1478 = vmatprep.subr.mxu0 0.0
        %1479 = vmatpush1.msra.mxu0 %v1364
        %1480 = vmatprep.subr.mxu0 0.0
        %1481 = vmatpush1.msra.mxu0 %v1365
        %1482 = vmatprep.subr.mxu0 0.0
        %1483 = vmatpush1.msra.mxu0 %v1366
        %1484 = vmatprep.subr.mxu0 0.0
        %1485 = vmatpush1.msra.mxu0 %v1367
        %1486 = vmatprep.subr.mxu0 0.0
        %1487 = vmatpush1.msra.mxu0 %v1368
        %1488 = vmatprep.subr.mxu0 0.0
        %1489 = vmatpush1.msra.mxu0 %v1369
        %1490 = vmatprep.subr.mxu0 0.0
        %1491 = vmatpush1.msra.mxu0 %v1370
        %1492 = vmatprep.subr.mxu0 0.0
        %1493 = vmatpush1.msra.mxu0 %v1371
        %1494 = vmatprep.subr.mxu0 0.0
        %1495 = vmatpush1.msra.mxu0 %v1372
        %1496 = vmatprep.subr.mxu0 0.0
        %1497 = vmatpush1.msra.mxu0 %v1373
        %1498 = vmatprep.subr.mxu0 0.0
        %1499 = vmatpush1.msra.mxu0 %v1374
        %1500 = vmatprep.subr.mxu0 0.0
        %1501 = vmatpush1.msra.mxu0 %v1375
        %1502 = vmatprep.subr.mxu0 0.0
        %1503 = vmatpush1.msra.mxu0 0.0
        %1504 = vmatprep.subr.mxu0 0.0
        %1505 = vmatpush1.msra.mxu0 0.0
        %1506 = vmatprep.subr.mxu0 0.0
        %1507 = vmatpush1.msra.mxu0 0.0
        %1508 = vmatprep.subr.mxu0 0.0
        %1509 = vmatpush1.msra.mxu0 0.0
        %1510 = vmatprep.subr.mxu0 0.0
        %1511 = vmatpush1.msra.mxu0 0.0
        %1512 = vmatprep.subr.mxu0 0.0
        %1513 = vmatpush1.msra.mxu0 0.0
        %1514 = vmatprep.subr.mxu0 0.0
        %1515 = vmatpush1.msra.mxu0 0.0
        %1516 = vmatprep.subr.mxu0 0.0
        %1517 = vmatpush1.msra.mxu0 0.0
        %1518 = vmatprep.subr.mxu0 0.0
        %1519 = vmatpush1.msra.mxu0 0.0
        %1520 = vmatprep.subr.mxu0 0.0
        %1521 = vmatpush1.msra.mxu0 0.0
        %1522 = vmatprep.subr.mxu0 0.0
        %1523 = vmatpush1.msra.mxu0 0.0
        %1524 = vmatprep.subr.mxu0 0.0
        %1525 = vmatpush1.msra.mxu0 0.0
        %1526 = vmatprep.subr.mxu0 0.0
        %1527 = vmatpush1.msra.mxu0 0.0
        %1528 = vmatprep.subr.mxu0 0.0
        %1529 = vmatpush1.msra.mxu0 0.0
        %1530 = vmatprep.subr.mxu0 0.0
        %1531 = vmatpush1.msra.mxu0 0.0
        %1532 = vmatprep.subr.mxu0 0.0
        %1533 = vmatpush1.msra.mxu0 0.0
        %1534 = vmatprep.mubr.f32.mxu0 0.0
        %1535 = vmatmul.mubr.f32.gmra.mrb[0].mxu0 %v1358
        %v1536 = vpop.f32.mrb[0].mxu0
        %v1537 = vadd.f32 %v1462, %v1536
        %v1538 = vpop.f32.mrb[0].mxu0
        %1539 = vmatprep.mubr.f32.mxu0 0.0
        %1540 = vmatmul.mubr.f32.gmra.mrb[0].mxu0 %v1359
        %v1541 = vpop.f32.mrb[0].mxu0
        %v1542 = vadd.f32 %v1467, %v1541
        %v1543 = vpop.f32.mrb[0].mxu0
        %1544 = vdwg.mxu0
        %v1545 = vld [vmem:[#allocation3 + $0x2] sm:$0xff]
        %v1546 = vld [vmem:[#allocation3 + $0xa] sm:$0xff]
        %s1547 = scalar_lea.vmem %s8, 256
        %v1548 = vld [vmem:[%s1547] sm:$0xff]
        %v1549 = vld [vmem:[%s1547 + $0x8] sm:$0xff]
        %v1550 = vld [vmem:[%s1547 + $0x10] sm:$0xff]
        %v1551 = vld [vmem:[%s1547 + $0x18] sm:$0xff]
        %v1552 = vld [vmem:[%s1547 + $0x20] sm:$0xff]
        %v1553 = vld [vmem:[%s1547 + $0x28] sm:$0xff]
        %v1554 = vld [vmem:[%s1547 + $0x30] sm:$0xff]
        %v1555 = vld [vmem:[%s1547 + $0x38] sm:$0xff]
        %v1556 = vld [vmem:[%s1547 + $0x40] sm:$0xff]
        %v1557 = vld [vmem:[%s1547 + $0x48] sm:$0xff]
        %v1558 = vld [vmem:[%s1547 + $0x50] sm:$0xff]
        %v1559 = vld [vmem:[%s1547 + $0x58] sm:$0xff]
        %v1560 = vld [vmem:[%s1547 + $0x60] sm:$0xff]
        %v1561 = vld [vmem:[%s1547 + $0x68] sm:$0xff]
        %v1562 = vld [vmem:[%s1547 + $0x70] sm:$0xff]
        %v1563 = vld [vmem:[%s1547 + $0x78] sm:$0xff]
        %1564 = vmatprep.subr.mxu0 0.0
        %1565 = vmatpush1.msra.mxu0 %v1548
        %1566 = vmatprep.subr.mxu0 0.0
        %1567 = vmatpush1.msra.mxu0 %v1549
        %1568 = vmatprep.subr.mxu0 0.0
        %1569 = vmatpush1.msra.mxu0 %v1550
        %1570 = vmatprep.subr.mxu0 0.0
        %1571 = vmatpush1.msra.mxu0 %v1551
        %1572 = vmatprep.subr.mxu0 0.0
        %1573 = vmatpush1.msra.mxu0 %v1552
        %1574 = vmatprep.subr.mxu0 0.0
        %1575 = vmatpush1.msra.mxu0 %v1553
        %1576 = vmatprep.subr.mxu0 0.0
        %1577 = vmatpush1.msra.mxu0 %v1554
        %1578 = vmatprep.subr.mxu0 0.0
        %1579 = vmatpush1.msra.mxu0 %v1555
        %1580 = vmatprep.subr.mxu0 0.0
        %1581 = vmatpush1.msra.mxu0 %v1556
        %1582 = vmatprep.subr.mxu0 0.0
        %1583 = vmatpush1.msra.mxu0 %v1557
        %1584 = vmatprep.subr.mxu0 0.0
        %1585 = vmatpush1.msra.mxu0 %v1558
        %1586 = vmatprep.subr.mxu0 0.0
        %1587 = vmatpush1.msra.mxu0 %v1559
        %1588 = vmatprep.subr.mxu0 0.0
        %1589 = vmatpush1.msra.mxu0 %v1560
        %1590 = vmatprep.subr.mxu0 0.0
        %1591 = vmatpush1.msra.mxu0 %v1561
        %1592 = vmatprep.subr.mxu0 0.0
        %1593 = vmatpush1.msra.mxu0 %v1562
        %1594 = vmatprep.subr.mxu0 0.0
        %1595 = vmatpush1.msra.mxu0 %v1563
        %1596 = vmatprep.subr.mxu0 0.0
        %1597 = vmatpush1.msra.mxu0 0.0
        %1598 = vmatprep.subr.mxu0 0.0
        %1599 = vmatpush1.msra.mxu0 0.0
        %1600 = vmatprep.subr.mxu0 0.0
        %1601 = vmatpush1.msra.mxu0 0.0
        %1602 = vmatprep.subr.mxu0 0.0
        %1603 = vmatpush1.msra.mxu0 0.0
        %1604 = vmatprep.subr.mxu0 0.0
        %1605 = vmatpush1.msra.mxu0 0.0
        %1606 = vmatprep.subr.mxu0 0.0
        %1607 = vmatpush1.msra.mxu0 0.0
        %1608 = vmatprep.subr.mxu0 0.0
        %1609 = vmatpush1.msra.mxu0 0.0
        %1610 = vmatprep.subr.mxu0 0.0
        %1611 = vmatpush1.msra.mxu0 0.0
        %1612 = vmatprep.subr.mxu0 0.0
        %1613 = vmatpush1.msra.mxu0 0.0
        %1614 = vmatprep.subr.mxu0 0.0
        %1615 = vmatpush1.msra.mxu0 0.0
        %1616 = vmatprep.subr.mxu0 0.0
        %1617 = vmatpush1.msra.mxu0 0.0
        %1618 = vmatprep.subr.mxu0 0.0
        %1619 = vmatpush1.msra.mxu0 0.0
        %1620 = vmatprep.subr.mxu0 0.0
        %1621 = vmatpush1.msra.mxu0 0.0
        %1622 = vmatprep.subr.mxu0 0.0
        %1623 = vmatpush1.msra.mxu0 0.0
        %1624 = vmatprep.subr.mxu0 0.0
        %1625 = vmatpush1.msra.mxu0 0.0
        %1626 = vmatprep.subr.mxu0 0.0
        %1627 = vmatpush1.msra.mxu0 0.0
        %1628 = vmatprep.mubr.f32.mxu0 0.0
        %1629 = vmatmul.mubr.f32.gmra.mrb[0].mxu0 %v1545
        %v1630 = vpop.f32.mrb[0].mxu0
        %v1631 = vadd.f32 0.0, %v1630
        %v1632 = vpop.f32.mrb[0].mxu0
        %1633 = vmatprep.mubr.f32.mxu0 0.0
        %1634 = vmatmul.mubr.f32.gmra.mrb[0].mxu0 %v1546
        %v1635 = vpop.f32.mrb[0].mxu0
        %v1636 = vadd.f32 0.0, %v1635
        %v1637 = vpop.f32.mrb[0].mxu0
        %1638 = vdwg.mxu0
        %v1639 = vadd.f32 %v1537, %v1631
        %v1640 = vadd.f32 %v1542, %v1636
        %v1641 = vld [vmem:[%s9] sm:$0x1]
        %v1643 = vlaneseq
        %v1644 = vshrl.u32 %v1643, 7
        %v1645 = vsub.s32 0, %v1644
        %v1646 = vrot.slane %v1641, %v1645
        %v1648 = vadd.f32 %v1639, %v1646
        %v1649 = vadd.f32 %v1640, %v1646
        %vm1650 = vcmp.gt.f32.partialorder %v1648, 0.0
        %vm1651 = vcmp.gt.f32.partialorder %v1649, 0.0
        %v1652 = vmin.f32 %v1648, 0.0
        %v1653 = vmin.f32 %v1649, 0.0
        %v1654 = vmul.f32 %v1652, 1.442695
        %v1655 = vpow.pop %v1654
        %v1656 = vmul.f32 %v1653, 1.442695
        %v1657 = vpow.pop %v1656
        %v1658 = vsub.f32 %v1655, 1.0
        %v1659 = vsub.f32 %v1657, 1.0
        %v1660 = vsel %vm1650, %v1648, %v1658
        %v1661 = vsel %vm1651, %v1649, %v1659
        %v1662 = vld [vmem:[%s11] sm:$0x1]
        %vm1663 = vcmask 1043456
        %v1664 = vsel %vm1663, %v1660, 0.0
        %v1665 = vrot.slane %v1664, 4
        %v1666 = vadd.f32 %v1664, %v1665
        %v1667 = vrot.slane %v1666, 2
        %v1668 = vadd.f32 %v1666, %v1667
        %v1669 = vrot.slane %v1668, 1
        %v1670 = vadd.f32 %v1668, %v1669
        %v1671 = vld [vmem:[%s10] sm:$0xff]
        %v1672 = vld [vmem:[%s10 + $0x8] sm:$0xff]
        %v1673 = vld [vmem:[%s10 + $0x10] sm:$0xff]
        %v1674 = vld [vmem:[%s10 + $0x18] sm:$0xff]
        %v1675 = vld [vmem:[%s10 + $0x20] sm:$0xff]
        %v1676 = vld [vmem:[%s10 + $0x28] sm:$0xff]
        %v1677 = vld [vmem:[%s10 + $0x30] sm:$0xff]
        %v1678 = vld [vmem:[%s10 + $0x38] sm:$0xff]
        %v1679 = vld [vmem:[%s10 + $0x40] sm:$0xff]
        %v1680 = vld [vmem:[%s10 + $0x48] sm:$0xff]
        %v1681 = vld [vmem:[%s10 + $0x50] sm:$0xff]
        %v1682 = vld [vmem:[%s10 + $0x58] sm:$0xff]
        %v1683 = vld [vmem:[%s10 + $0x60] sm:$0xff]
        %v1684 = vld [vmem:[%s10 + $0x68] sm:$0xff]
        %v1685 = vld [vmem:[%s10 + $0x70] sm:$0xff]
        %v1686 = vld [vmem:[%s10 + $0x78] sm:$0xff]
        %1687 = vmatprep.subr.mxu0 0.0
        %1688 = vmatpush1.msra.mxu0 %v1671
        %1689 = vmatprep.subr.mxu0 0.0
        %1690 = vmatpush1.msra.mxu0 %v1672
        %1691 = vmatprep.subr.mxu0 0.0
        %1692 = vmatpush1.msra.mxu0 %v1673
        %1693 = vmatprep.subr.mxu0 0.0
        %1694 = vmatpush1.msra.mxu0 %v1674
        %1695 = vmatprep.subr.mxu0 0.0
        %1696 = vmatpush1.msra.mxu0 %v1675
        %1697 = vmatprep.subr.mxu0 0.0
        %1698 = vmatpush1.msra.mxu0 %v1676
        %1699 = vmatprep.subr.mxu0 0.0
        %1700 = vmatpush1.msra.mxu0 %v1677
        %1701 = vmatprep.subr.mxu0 0.0
        %1702 = vmatpush1.msra.mxu0 %v1678
        %1703 = vmatprep.subr.mxu0 0.0
        %1704 = vmatpush1.msra.mxu0 %v1679
        %1705 = vmatprep.subr.mxu0 0.0
        %1706 = vmatpush1.msra.mxu0 %v1680
        %1707 = vmatprep.subr.mxu0 0.0
        %1708 = vmatpush1.msra.mxu0 %v1681
        %1709 = vmatprep.subr.mxu0 0.0
        %1710 = vmatpush1.msra.mxu0 %v1682
        %1711 = vmatprep.subr.mxu0 0.0
        %1712 = vmatpush1.msra.mxu0 %v1683
        %1713 = vmatprep.subr.mxu0 0.0
        %1714 = vmatpush1.msra.mxu0 %v1684
        %1715 = vmatprep.subr.mxu0 0.0
        %1716 = vmatpush1.msra.mxu0 %v1685
        %1717 = vmatprep.subr.mxu0 0.0
        %1718 = vmatpush1.msra.mxu0 %v1686
        %1719 = vmatprep.subr.mxu0 0.0
        %1720 = vmatpush1.msra.mxu0 0.0
        %1721 = vmatprep.subr.mxu0 0.0
        %1722 = vmatpush1.msra.mxu0 0.0
        %1723 = vmatprep.subr.mxu0 0.0
        %1724 = vmatpush1.msra.mxu0 0.0
        %1725 = vmatprep.subr.mxu0 0.0
        %1726 = vmatpush1.msra.mxu0 0.0
        %1727 = vmatprep.subr.mxu0 0.0
        %1728 = vmatpush1.msra.mxu0 0.0
        %1729 = vmatprep.subr.mxu0 0.0
        %1730 = vmatpush1.msra.mxu0 0.0
        %1731 = vmatprep.subr.mxu0 0.0
        %1732 = vmatpush1.msra.mxu0 0.0
        %1733 = vmatprep.subr.mxu0 0.0
        %1734 = vmatpush1.msra.mxu0 0.0
        %1735 = vmatprep.subr.mxu0 0.0
        %1736 = vmatpush1.msra.mxu0 0.0
        %1737 = vmatprep.subr.mxu0 0.0
        %1738 = vmatpush1.msra.mxu0 0.0
        %1739 = vmatprep.subr.mxu0 0.0
        %1740 = vmatpush1.msra.mxu0 0.0
        %1741 = vmatprep.subr.mxu0 0.0
        %1742 = vmatpush1.msra.mxu0 0.0
        %1743 = vmatprep.subr.mxu0 0.0
        %1744 = vmatpush1.msra.mxu0 0.0
        %1745 = vmatprep.subr.mxu0 0.0
        %1746 = vmatpush1.msra.mxu0 0.0
        %1747 = vmatprep.subr.mxu0 0.0
        %1748 = vmatpush1.msra.mxu0 0.0
        %1749 = vmatprep.subr.mxu0 0.0
        %1750 = vmatpush1.msra.mxu0 0.0
        %1751 = vmatprep.mubr.f32.mxu0 0.0
        %1752 = vmatmul.mubr.f32.gmra.mrb[0].mxu0 %v1670
        %v1753 = vpop.f32.mrb[0].mxu0
        %v1754 = vadd.f32 0.0, %v1753
        %v1755 = vpop.f32.mrb[0].mxu0
        %1756 = vdwg.mxu0
        %v1757 = vadd.f32 %v1662, %v1754
        %v1759 = vrot.slane %v1660, 4
        %v1761 = vsel %vm1663, %v1759, 0.0
        %v1762 = vrot.slane %v1761, 4
        %v1763 = vadd.f32 %v1761, %v1762
        %v1764 = vrot.slane %v1763, 2
        %v1765 = vadd.f32 %v1763, %v1764
        %v1766 = vrot.slane %v1765, 1
        %v1767 = vadd.f32 %v1765, %v1766
        %s1768 = scalar_lea.vmem %s10, 128
        %v1769 = vld [vmem:[%s1768] sm:$0xff]
        %v1770 = vld [vmem:[%s1768 + $0x8] sm:$0xff]
        %v1771 = vld [vmem:[%s1768 + $0x10] sm:$0xff]
        %v1772 = vld [vmem:[%s1768 + $0x18] sm:$0xff]
        %v1773 = vld [vmem:[%s1768 + $0x20] sm:$0xff]
        %v1774 = vld [vmem:[%s1768 + $0x28] sm:$0xff]
        %v1775 = vld [vmem:[%s1768 + $0x30] sm:$0xff]
        %v1776 = vld [vmem:[%s1768 + $0x38] sm:$0xff]
        %v1777 = vld [vmem:[%s1768 + $0x40] sm:$0xff]
        %v1778 = vld [vmem:[%s1768 + $0x48] sm:$0xff]
        %v1779 = vld [vmem:[%s1768 + $0x50] sm:$0xff]
        %v1780 = vld [vmem:[%s1768 + $0x58] sm:$0xff]
        %v1781 = vld [vmem:[%s1768 + $0x60] sm:$0xff]
        %v1782 = vld [vmem:[%s1768 + $0x68] sm:$0xff]
        %v1783 = vld [vmem:[%s1768 + $0x70] sm:$0xff]
        %v1784 = vld [vmem:[%s1768 + $0x78] sm:$0xff]
        %1785 = vmatprep.subr.mxu0 0.0
        %1786 = vmatpush1.msra.mxu0 %v1769
        %1787 = vmatprep.subr.mxu0 0.0
        %1788 = vmatpush1.msra.mxu0 %v1770
        %1789 = vmatprep.subr.mxu0 0.0
        %1790 = vmatpush1.msra.mxu0 %v1771
        %1791 = vmatprep.subr.mxu0 0.0
        %1792 = vmatpush1.msra.mxu0 %v1772
        %1793 = vmatprep.subr.mxu0 0.0
        %1794 = vmatpush1.msra.mxu0 %v1773
        %1795 = vmatprep.subr.mxu0 0.0
        %1796 = vmatpush1.msra.mxu0 %v1774
        %1797 = vmatprep.subr.mxu0 0.0
        %1798 = vmatpush1.msra.mxu0 %v1775
        %1799 = vmatprep.subr.mxu0 0.0
        %1800 = vmatpush1.msra.mxu0 %v1776
        %1801 = vmatprep.subr.mxu0 0.0
        %1802 = vmatpush1.msra.mxu0 %v1777
        %1803 = vmatprep.subr.mxu0 0.0
        %1804 = vmatpush1.msra.mxu0 %v1778
        %1805 = vmatprep.subr.mxu0 0.0
        %1806 = vmatpush1.msra.mxu0 %v1779
        %1807 = vmatprep.subr.mxu0 0.0
        %1808 = vmatpush1.msra.mxu0 %v1780
        %1809 = vmatprep.subr.mxu0 0.0
        %1810 = vmatpush1.msra.mxu0 %v1781
        %1811 = vmatprep.subr.mxu0 0.0
        %1812 = vmatpush1.msra.mxu0 %v1782
        %1813 = vmatprep.subr.mxu0 0.0
        %1814 = vmatpush1.msra.mxu0 %v1783
        %1815 = vmatprep.subr.mxu0 0.0
        %1816 = vmatpush1.msra.mxu0 %v1784
        %1817 = vmatprep.subr.mxu0 0.0
        %1818 = vmatpush1.msra.mxu0 0.0
        %1819 = vmatprep.subr.mxu0 0.0
        %1820 = vmatpush1.msra.mxu0 0.0
        %1821 = vmatprep.subr.mxu0 0.0
        %1822 = vmatpush1.msra.mxu0 0.0
        %1823 = vmatprep.subr.mxu0 0.0
        %1824 = vmatpush1.msra.mxu0 0.0
        %1825 = vmatprep.subr.mxu0 0.0
        %1826 = vmatpush1.msra.mxu0 0.0
        %1827 = vmatprep.subr.mxu0 0.0
        %1828 = vmatpush1.msra.mxu0 0.0
        %1829 = vmatprep.subr.mxu0 0.0
        %1830 = vmatpush1.msra.mxu0 0.0
        %1831 = vmatprep.subr.mxu0 0.0
        %1832 = vmatpush1.msra.mxu0 0.0
        %1833 = vmatprep.subr.mxu0 0.0
        %1834 = vmatpush1.msra.mxu0 0.0
        %1835 = vmatprep.subr.mxu0 0.0
        %1836 = vmatpush1.msra.mxu0 0.0
        %1837 = vmatprep.subr.mxu0 0.0
        %1838 = vmatpush1.msra.mxu0 0.0
        %1839 = vmatprep.subr.mxu0 0.0
        %1840 = vmatpush1.msra.mxu0 0.0
        %1841 = vmatprep.subr.mxu0 0.0
        %1842 = vmatpush1.msra.mxu0 0.0
        %1843 = vmatprep.subr.mxu0 0.0
        %1844 = vmatpush1.msra.mxu0 0.0
        %1845 = vmatprep.subr.mxu0 0.0
        %1846 = vmatpush1.msra.mxu0 0.0
        %1847 = vmatprep.subr.mxu0 0.0
        %1848 = vmatpush1.msra.mxu0 0.0
        %1849 = vmatprep.mubr.f32.mxu0 0.0
        %1850 = vmatmul.mubr.f32.gmra.mrb[0].mxu0 %v1767
        %v1851 = vpop.f32.mrb[0].mxu0
        %v1852 = vadd.f32 0.0, %v1851
        %v1853 = vpop.f32.mrb[0].mxu0
        %1854 = vdwg.mxu0
        %v1855 = vadd.f32 %v1757, %v1852
        %v1856 = vsel %vm1663, %v1661, 0.0
        %v1857 = vrot.slane %v1856, 4
        %v1858 = vadd.f32 %v1856, %v1857
        %v1859 = vrot.slane %v1858, 2
        %v1860 = vadd.f32 %v1858, %v1859
        %v1861 = vrot.slane %v1860, 1
        %v1862 = vadd.f32 %v1860, %v1861
        %s1863 = scalar_lea.vmem %s10, 256
        %v1864 = vld [vmem:[%s1863] sm:$0xff]
        %v1865 = vld [vmem:[%s1863 + $0x8] sm:$0xff]
        %v1866 = vld [vmem:[%s1863 + $0x10] sm:$0xff]
        %v1867 = vld [vmem:[%s1863 + $0x18] sm:$0xff]
        %v1868 = vld [vmem:[%s1863 + $0x20] sm:$0xff]
        %v1869 = vld [vmem:[%s1863 + $0x28] sm:$0xff]
        %v1870 = vld [vmem:[%s1863 + $0x30] sm:$0xff]
        %v1871 = vld [vmem:[%s1863 + $0x38] sm:$0xff]
        %v1872 = vld [vmem:[%s1863 + $0x40] sm:$0xff]
        %v1873 = vld [vmem:[%s1863 + $0x48] sm:$0xff]
        %v1874 = vld [vmem:[%s1863 + $0x50] sm:$0xff]
        %v1875 = vld [vmem:[%s1863 + $0x58] sm:$0xff]
        %v1876 = vld [vmem:[%s1863 + $0x60] sm:$0xff]
        %v1877 = vld [vmem:[%s1863 + $0x68] sm:$0xff]
        %v1878 = vld [vmem:[%s1863 + $0x70] sm:$0xff]
        %v1879 = vld [vmem:[%s1863 + $0x78] sm:$0xff]
        %1880 = vmatprep.subr.mxu0 0.0
        %1881 = vmatpush1.msra.mxu0 %v1864
        %1882 = vmatprep.subr.mxu0 0.0
        %1883 = vmatpush1.msra.mxu0 %v1865
        %1884 = vmatprep.subr.mxu0 0.0
        %1885 = vmatpush1.msra.mxu0 %v1866
        %1886 = vmatprep.subr.mxu0 0.0
        %1887 = vmatpush1.msra.mxu0 %v1867
        %1888 = vmatprep.subr.mxu0 0.0
        %1889 = vmatpush1.msra.mxu0 %v1868
        %1890 = vmatprep.subr.mxu0 0.0
        %1891 = vmatpush1.msra.mxu0 %v1869
        %1892 = vmatprep.subr.mxu0 0.0
        %1893 = vmatpush1.msra.mxu0 %v1870
        %1894 = vmatprep.subr.mxu0 0.0
        %1895 = vmatpush1.msra.mxu0 %v1871
        %1896 = vmatprep.subr.mxu0 0.0
        %1897 = vmatpush1.msra.mxu0 %v1872
        %1898 = vmatprep.subr.mxu0 0.0
        %1899 = vmatpush1.msra.mxu0 %v1873
        %1900 = vmatprep.subr.mxu0 0.0
        %1901 = vmatpush1.msra.mxu0 %v1874
        %1902 = vmatprep.subr.mxu0 0.0
        %1903 = vmatpush1.msra.mxu0 %v1875
        %1904 = vmatprep.subr.mxu0 0.0
        %1905 = vmatpush1.msra.mxu0 %v1876
        %1906 = vmatprep.subr.mxu0 0.0
        %1907 = vmatpush1.msra.mxu0 %v1877
        %1908 = vmatprep.subr.mxu0 0.0
        %1909 = vmatpush1.msra.mxu0 %v1878
        %1910 = vmatprep.subr.mxu0 0.0
        %1911 = vmatpush1.msra.mxu0 %v1879
        %1912 = vmatprep.subr.mxu0 0.0
        %1913 = vmatpush1.msra.mxu0 0.0
        %1914 = vmatprep.subr.mxu0 0.0
        %1915 = vmatpush1.msra.mxu0 0.0
        %1916 = vmatprep.subr.mxu0 0.0
        %1917 = vmatpush1.msra.mxu0 0.0
        %1918 = vmatprep.subr.mxu0 0.0
        %1919 = vmatpush1.msra.mxu0 0.0
        %1920 = vmatprep.subr.mxu0 0.0
        %1921 = vmatpush1.msra.mxu0 0.0
        %1922 = vmatprep.subr.mxu0 0.0
        %1923 = vmatpush1.msra.mxu0 0.0
        %1924 = vmatprep.subr.mxu0 0.0
        %1925 = vmatpush1.msra.mxu0 0.0
        %1926 = vmatprep.subr.mxu0 0.0
        %1927 = vmatpush1.msra.mxu0 0.0
        %1928 = vmatprep.subr.mxu0 0.0
        %1929 = vmatpush1.msra.mxu0 0.0
        %1930 = vmatprep.subr.mxu0 0.0
        %1931 = vmatpush1.msra.mxu0 0.0
        %1932 = vmatprep.subr.mxu0 0.0
        %1933 = vmatpush1.msra.mxu0 0.0
        %1934 = vmatprep.subr.mxu0 0.0
        %1935 = vmatpush1.msra.mxu0 0.0
        %1936 = vmatprep.subr.mxu0 0.0
        %1937 = vmatpush1.msra.mxu0 0.0
        %1938 = vmatprep.subr.mxu0 0.0
        %1939 = vmatpush1.msra.mxu0 0.0
        %1940 = vmatprep.subr.mxu0 0.0
        %1941 = vmatpush1.msra.mxu0 0.0
        %1942 = vmatprep.subr.mxu0 0.0
        %1943 = vmatpush1.msra.mxu0 0.0
        %1944 = vmatprep.mubr.f32.mxu0 0.0
        %1945 = vmatmul.mubr.f32.gmra.mrb[0].mxu0 %v1862
        %v1946 = vpop.f32.mrb[0].mxu0
        %v1947 = vadd.f32 0.0, %v1946
        %v1948 = vpop.f32.mrb[0].mxu0
        %1949 = vdwg.mxu0
        %v1950 = vadd.f32 %v1855, %v1947
        %v1952 = vrot.slane %v1661, 4
        %v1954 = vsel %vm1663, %v1952, 0.0
        %v1955 = vrot.slane %v1954, 4
        %v1956 = vadd.f32 %v1954, %v1955
        %v1957 = vrot.slane %v1956, 2
        %v1958 = vadd.f32 %v1956, %v1957
        %v1959 = vrot.slane %v1958, 1
        %v1960 = vadd.f32 %v1958, %v1959
        %s1961 = scalar_lea.vmem %s10, 384
        %v1962 = vld [vmem:[%s1961] sm:$0xff]
        %v1963 = vld [vmem:[%s1961 + $0x8] sm:$0xff]
        %v1964 = vld [vmem:[%s1961 + $0x10] sm:$0xff]
        %v1965 = vld [vmem:[%s1961 + $0x18] sm:$0xff]
        %v1966 = vld [vmem:[%s1961 + $0x20] sm:$0xff]
        %v1967 = vld [vmem:[%s1961 + $0x28] sm:$0xff]
        %v1968 = vld [vmem:[%s1961 + $0x30] sm:$0xff]
        %v1969 = vld [vmem:[%s1961 + $0x38] sm:$0xff]
        %v1970 = vld [vmem:[%s1961 + $0x40] sm:$0xff]
        %v1971 = vld [vmem:[%s1961 + $0x48] sm:$0xff]
        %v1972 = vld [vmem:[%s1961 + $0x50] sm:$0xff]
        %v1973 = vld [vmem:[%s1961 + $0x58] sm:$0xff]
        %v1974 = vld [vmem:[%s1961 + $0x60] sm:$0xff]
        %v1975 = vld [vmem:[%s1961 + $0x68] sm:$0xff]
        %v1976 = vld [vmem:[%s1961 + $0x70] sm:$0xff]
        %v1977 = vld [vmem:[%s1961 + $0x78] sm:$0xff]
        %1978 = vmatprep.subr.mxu0 0.0
        %1979 = vmatpush1.msra.mxu0 %v1962
        %1980 = vmatprep.subr.mxu0 0.0
        %1981 = vmatpush1.msra.mxu0 %v1963
        %1982 = vmatprep.subr.mxu0 0.0
        %1983 = vmatpush1.msra.mxu0 %v1964
        %1984 = vmatprep.subr.mxu0 0.0
        %1985 = vmatpush1.msra.mxu0 %v1965
        %1986 = vmatprep.subr.mxu0 0.0
        %1987 = vmatpush1.msra.mxu0 %v1966
        %1988 = vmatprep.subr.mxu0 0.0
        %1989 = vmatpush1.msra.mxu0 %v1967
        %1990 = vmatprep.subr.mxu0 0.0
        %1991 = vmatpush1.msra.mxu0 %v1968
        %1992 = vmatprep.subr.mxu0 0.0
        %1993 = vmatpush1.msra.mxu0 %v1969
        %1994 = vmatprep.subr.mxu0 0.0
        %1995 = vmatpush1.msra.mxu0 %v1970
        %1996 = vmatprep.subr.mxu0 0.0
        %1997 = vmatpush1.msra.mxu0 %v1971
        %1998 = vmatprep.subr.mxu0 0.0
        %1999 = vmatpush1.msra.mxu0 %v1972
        %2000 = vmatprep.subr.mxu0 0.0
        %2001 = vmatpush1.msra.mxu0 %v1973
        %2002 = vmatprep.subr.mxu0 0.0
        %2003 = vmatpush1.msra.mxu0 %v1974
        %2004 = vmatprep.subr.mxu0 0.0
        %2005 = vmatpush1.msra.mxu0 %v1975
        %2006 = vmatprep.subr.mxu0 0.0
        %2007 = vmatpush1.msra.mxu0 %v1976
        %2008 = vmatprep.subr.mxu0 0.0
        %2009 = vmatpush1.msra.mxu0 %v1977
        %2010 = vmatprep.subr.mxu0 0.0
        %2011 = vmatpush1.msra.mxu0 0.0
        %2012 = vmatprep.subr.mxu0 0.0
        %2013 = vmatpush1.msra.mxu0 0.0
        %2014 = vmatprep.subr.mxu0 0.0
        %2015 = vmatpush1.msra.mxu0 0.0
        %2016 = vmatprep.subr.mxu0 0.0
        %2017 = vmatpush1.msra.mxu0 0.0
        %2018 = vmatprep.subr.mxu0 0.0
        %2019 = vmatpush1.msra.mxu0 0.0
        %2020 = vmatprep.subr.mxu0 0.0
        %2021 = vmatpush1.msra.mxu0 0.0
        %2022 = vmatprep.subr.mxu0 0.0
        %2023 = vmatpush1.msra.mxu0 0.0
        %2024 = vmatprep.subr.mxu0 0.0
        %2025 = vmatpush1.msra.mxu0 0.0
        %2026 = vmatprep.subr.mxu0 0.0
        %2027 = vmatpush1.msra.mxu0 0.0
        %2028 = vmatprep.subr.mxu0 0.0
        %2029 = vmatpush1.msra.mxu0 0.0
        %2030 = vmatprep.subr.mxu0 0.0
        %2031 = vmatpush1.msra.mxu0 0.0
        %2032 = vmatprep.subr.mxu0 0.0
        %2033 = vmatpush1.msra.mxu0 0.0
        %2034 = vmatprep.subr.mxu0 0.0
        %2035 = vmatpush1.msra.mxu0 0.0
        %2036 = vmatprep.subr.mxu0 0.0
        %2037 = vmatpush1.msra.mxu0 0.0
        %2038 = vmatprep.subr.mxu0 0.0
        %2039 = vmatpush1.msra.mxu0 0.0
        %2040 = vmatprep.subr.mxu0 0.0
        %2041 = vmatpush1.msra.mxu0 0.0
        %2042 = vmatprep.mubr.f32.mxu0 0.0
        %2043 = vmatmul.mubr.f32.gmra.mrb[0].mxu0 %v1960
        %v2044 = vpop.f32.mrb[0].mxu0
        %v2045 = vadd.f32 0.0, %v2044
        %v2046 = vpop.f32.mrb[0].mxu0
        %2047 = vdwg.mxu0
        %v2048 = vadd.f32 %v1950, %v2045
        %vm2049 = vcmp.gt.f32.partialorder %v2048, 0.0
        %v2050 = vmin.f32 %v2048, 0.0
        %v2051 = vmul.f32 %v2050, 1.442695
        %v2052 = vpow.pop %v2051
        %v2053 = vsub.f32 %v2052, 1.0
        %v2054 = vsel %vm2049, %v2048, %v2053
        %v2055 = vld [vmem:[%s12] sm:$0xff]
        %v2056 = vld [vmem:[%s12 + $0x8] sm:$0xff]
        %v2057 = vld [vmem:[%s12 + $0x10] sm:$0xff]
        %v2058 = vld [vmem:[%s12 + $0x18] sm:$0xff]
        %v2059 = vld [vmem:[%s727] sm:$0x1]
        %v2060 = vld [vmem:[%s13] sm:$0xff]
        %v2061 = vld [vmem:[%s13 + $0x8] sm:$0xff]
        %vm2062 = vcmask 130048
        %v2064 = vsel %vm2062, %v2059, 0
        %2066 = vmatprep.subr.mxu0 0.0
        %2067 = vmatpush1.msra.mxu0 %v2060
        %2068 = vmatprep.subr.mxu0 0.0
        %2069 = vmatpush1.msra.mxu0 %v2061
        %2070 = vmatprep.subr.mxu0 0.0
        %2071 = vmatpush1.msra.mxu0 0.0
        %2072 = vmatprep.subr.mxu0 0.0
        %2073 = vmatpush1.msra.mxu0 0.0
        %2074 = vmatprep.subr.mxu0 0.0
        %2075 = vmatpush1.msra.mxu0 0.0
        %2076 = vmatprep.subr.mxu0 0.0
        %2077 = vmatpush1.msra.mxu0 0.0
        %2078 = vmatprep.subr.mxu0 0.0
        %2079 = vmatpush1.msra.mxu0 0.0
        %2080 = vmatprep.subr.mxu0 0.0
        %2081 = vmatpush1.msra.mxu0 0.0
        %2082 = vmatprep.subr.mxu0 0.0
        %2083 = vmatpush1.msra.mxu0 0.0
        %2084 = vmatprep.subr.mxu0 0.0
        %2085 = vmatpush1.msra.mxu0 0.0
        %2086 = vmatprep.subr.mxu0 0.0
        %2087 = vmatpush1.msra.mxu0 0.0
        %2088 = vmatprep.subr.mxu0 0.0
        %2089 = vmatpush1.msra.mxu0 0.0
        %2090 = vmatprep.subr.mxu0 0.0
        %2091 = vmatpush1.msra.mxu0 0.0
        %2092 = vmatprep.subr.mxu0 0.0
        %2093 = vmatpush1.msra.mxu0 0.0
        %2094 = vmatprep.subr.mxu0 0.0
        %2095 = vmatpush1.msra.mxu0 0.0
        %2096 = vmatprep.subr.mxu0 0.0
        %2097 = vmatpush1.msra.mxu0 0.0
        %2098 = vmatprep.subr.mxu0 0.0
        %2099 = vmatpush1.msra.mxu0 0.0
        %2100 = vmatprep.subr.mxu0 0.0
        %2101 = vmatpush1.msra.mxu0 0.0
        %2102 = vmatprep.subr.mxu0 0.0
        %2103 = vmatpush1.msra.mxu0 0.0
        %2104 = vmatprep.subr.mxu0 0.0
        %2105 = vmatpush1.msra.mxu0 0.0
        %2106 = vmatprep.subr.mxu0 0.0
        %2107 = vmatpush1.msra.mxu0 0.0
        %2108 = vmatprep.subr.mxu0 0.0
        %2109 = vmatpush1.msra.mxu0 0.0
        %2110 = vmatprep.subr.mxu0 0.0
        %2111 = vmatpush1.msra.mxu0 0.0
        %2112 = vmatprep.subr.mxu0 0.0
        %2113 = vmatpush1.msra.mxu0 0.0
        %2114 = vmatprep.subr.mxu0 0.0
        %2115 = vmatpush1.msra.mxu0 0.0
        %2116 = vmatprep.subr.mxu0 0.0
        %2117 = vmatpush1.msra.mxu0 0.0
        %2118 = vmatprep.subr.mxu0 0.0
        %2119 = vmatpush1.msra.mxu0 0.0
        %2120 = vmatprep.subr.mxu0 0.0
        %2121 = vmatpush1.msra.mxu0 0.0
        %2122 = vmatprep.subr.mxu0 0.0
        %2123 = vmatpush1.msra.mxu0 0.0
        %2124 = vmatprep.subr.mxu0 0.0
        %2125 = vmatpush1.msra.mxu0 0.0
        %2126 = vmatprep.subr.mxu0 0.0
        %2127 = vmatpush1.msra.mxu0 0.0
        %2128 = vmatprep.subr.mxu0 0.0
        %2129 = vmatpush1.msra.mxu0 0.0
        %2130 = vmatprep.mubr.f32.mxu0 0.0
        %2131 = vmatmul.mubr.f32.gmra.mrb[0].mxu0 %v2064
        %v2132 = vpop.f32.mrb[0].mxu0
        %v2133 = vadd.f32 0.0, %v2132
        %v2134 = vpop.f32.mrb[0].mxu0
        %2135 = vdwg.mxu0
        %vm2136 = vcmask 261120
        %v2138 = vsel %vm2136, %v2054, 0
        %2140 = vmatprep.subr.mxu0 0.0
        %2141 = vmatpush1.msra.mxu0 %v2055
        %2142 = vmatprep.subr.mxu0 0.0
        %2143 = vmatpush1.msra.mxu0 %v2056
        %2144 = vmatprep.subr.mxu0 0.0
        %2145 = vmatpush1.msra.mxu0 %v2057
        %2146 = vmatprep.subr.mxu0 0.0
        %2147 = vmatpush1.msra.mxu0 %v2058
        %2148 = vmatprep.subr.mxu0 0.0
        %2149 = vmatpush1.msra.mxu0 0.0
        %2150 = vmatprep.subr.mxu0 0.0
        %2151 = vmatpush1.msra.mxu0 0.0
        %2152 = vmatprep.subr.mxu0 0.0
        %2153 = vmatpush1.msra.mxu0 0.0
        %2154 = vmatprep.subr.mxu0 0.0
        %2155 = vmatpush1.msra.mxu0 0.0
        %2156 = vmatprep.subr.mxu0 0.0
        %2157 = vmatpush1.msra.mxu0 0.0
        %2158 = vmatprep.subr.mxu0 0.0
        %2159 = vmatpush1.msra.mxu0 0.0
        %2160 = vmatprep.subr.mxu0 0.0
        %2161 = vmatpush1.msra.mxu0 0.0
        %2162 = vmatprep.subr.mxu0 0.0
        %2163 = vmatpush1.msra.mxu0 0.0
        %2164 = vmatprep.subr.mxu0 0.0
        %2165 = vmatpush1.msra.mxu0 0.0
        %2166 = vmatprep.subr.mxu0 0.0
        %2167 = vmatpush1.msra.mxu0 0.0
        %2168 = vmatprep.subr.mxu0 0.0
        %2169 = vmatpush1.msra.mxu0 0.0
        %2170 = vmatprep.subr.mxu0 0.0
        %2171 = vmatpush1.msra.mxu0 0.0
        %2172 = vmatprep.subr.mxu0 0.0
        %2173 = vmatpush1.msra.mxu0 0.0
        %2174 = vmatprep.subr.mxu0 0.0
        %2175 = vmatpush1.msra.mxu0 0.0
        %2176 = vmatprep.subr.mxu0 0.0
        %2177 = vmatpush1.msra.mxu0 0.0
        %2178 = vmatprep.subr.mxu0 0.0
        %2179 = vmatpush1.msra.mxu0 0.0
        %2180 = vmatprep.subr.mxu0 0.0
        %2181 = vmatpush1.msra.mxu0 0.0
        %2182 = vmatprep.subr.mxu0 0.0
        %2183 = vmatpush1.msra.mxu0 0.0
        %2184 = vmatprep.subr.mxu0 0.0
        %2185 = vmatpush1.msra.mxu0 0.0
        %2186 = vmatprep.subr.mxu0 0.0
        %2187 = vmatpush1.msra.mxu0 0.0
        %2188 = vmatprep.subr.mxu0 0.0
        %2189 = vmatpush1.msra.mxu0 0.0
        %2190 = vmatprep.subr.mxu0 0.0
        %2191 = vmatpush1.msra.mxu0 0.0
        %2192 = vmatprep.subr.mxu0 0.0
        %2193 = vmatpush1.msra.mxu0 0.0
        %2194 = vmatprep.subr.mxu0 0.0
        %2195 = vmatpush1.msra.mxu0 0.0
        %2196 = vmatprep.subr.mxu0 0.0
        %2197 = vmatpush1.msra.mxu0 0.0
        %2198 = vmatprep.subr.mxu0 0.0
        %2199 = vmatpush1.msra.mxu0 0.0
        %2200 = vmatprep.subr.mxu0 0.0
        %2201 = vmatpush1.msra.mxu0 0.0
        %2202 = vmatprep.subr.mxu0 0.0
        %2203 = vmatpush1.msra.mxu0 0.0
        %2204 = vmatprep.mubr.f32.mxu0 0.0
        %2205 = vmatmul.mubr.f32.gmra.mrb[0].mxu0 %v2138
        %v2206 = vpop.f32.mrb[0].mxu0
        %v2207 = vadd.f32 %v2133, %v2206
        %v2208 = vpop.f32.mrb[0].mxu0
        %2209 = vdwg.mxu0
        %v2210 = vld [vmem:[%s14] sm:$0x1]
        %v2211 = vadd.f32 %v2207, %v2210
        %vm2212 = vcmp.gt.f32.partialorder %v2211, 0.0
        %v2213 = vmin.f32 %v2211, 0.0
        %v2214 = vmul.f32 %v2213, 1.442695
        %v2215 = vpow.pop %v2214
        %v2216 = vsub.f32 %v2215, 1.0
        %v2217 = vsel %vm2212, %v2211, %v2216
        %v2218 = vld [vmem:[%s730] sm:$0x1]
        %v2219 = vld [vmem:[%s733] sm:$0x1]
        %v2220 = vld [vmem:[%s15] sm:$0xff]
        %v2221 = vld [vmem:[%s15 + $0x8] sm:$0xff]
        %v2222 = vld [vmem:[%s15 + $0x10] sm:$0xff]
        %v2223 = vld [vmem:[%s15 + $0x18] sm:$0xff]
        %v2224 = vld [vmem:[%s16] sm:$0xff]
        %v2225 = vld [vmem:[%s16 + $0x8] sm:$0xff]
        %v2226 = vld [vmem:[%s16 + $0x10] sm:$0xff]
        %v2227 = vld [vmem:[%s16 + $0x18] sm:$0xff]
        %v2229 = vsel %vm2136, %v2218, 0
        %2231 = vmatprep.subr.mxu0 0.0
        %2232 = vmatpush1.msra.mxu0 %v2224
        %2233 = vmatprep.subr.mxu0 0.0
        %2234 = vmatpush1.msra.mxu0 %v2225
        %2235 = vmatprep.subr.mxu0 0.0
        %2236 = vmatpush1.msra.mxu0 %v2226
        %2237 = vmatprep.subr.mxu0 0.0
        %2238 = vmatpush1.msra.mxu0 %v2227
        %2239 = vmatprep.subr.mxu0 0.0
        %2240 = vmatpush1.msra.mxu0 0.0
        %2241 = vmatprep.subr.mxu0 0.0
        %2242 = vmatpush1.msra.mxu0 0.0
        %2243 = vmatprep.subr.mxu0 0.0
        %2244 = vmatpush1.msra.mxu0 0.0
        %2245 = vmatprep.subr.mxu0 0.0
        %2246 = vmatpush1.msra.mxu0 0.0
        %2247 = vmatprep.subr.mxu0 0.0
        %2248 = vmatpush1.msra.mxu0 0.0
        %2249 = vmatprep.subr.mxu0 0.0
        %2250 = vmatpush1.msra.mxu0 0.0
        %2251 = vmatprep.subr.mxu0 0.0
        %2252 = vmatpush1.msra.mxu0 0.0
        %2253 = vmatprep.subr.mxu0 0.0
        %2254 = vmatpush1.msra.mxu0 0.0
        %2255 = vmatprep.subr.mxu0 0.0
        %2256 = vmatpush1.msra.mxu0 0.0
        %2257 = vmatprep.subr.mxu0 0.0
        %2258 = vmatpush1.msra.mxu0 0.0
        %2259 = vmatprep.subr.mxu0 0.0
        %2260 = vmatpush1.msra.mxu0 0.0
        %2261 = vmatprep.subr.mxu0 0.0
        %2262 = vmatpush1.msra.mxu0 0.0
        %2263 = vmatprep.subr.mxu0 0.0
        %2264 = vmatpush1.msra.mxu0 0.0
        %2265 = vmatprep.subr.mxu0 0.0
        %2266 = vmatpush1.msra.mxu0 0.0
        %2267 = vmatprep.subr.mxu0 0.0
        %2268 = vmatpush1.msra.mxu0 0.0
        %2269 = vmatprep.subr.mxu0 0.0
        %2270 = vmatpush1.msra.mxu0 0.0
        %2271 = vmatprep.subr.mxu0 0.0
        %2272 = vmatpush1.msra.mxu0 0.0
        %2273 = vmatprep.subr.mxu0 0.0
        %2274 = vmatpush1.msra.mxu0 0.0
        %2275 = vmatprep.subr.mxu0 0.0
        %2276 = vmatpush1.msra.mxu0 0.0
        %2277 = vmatprep.subr.mxu0 0.0
        %2278 = vmatpush1.msra.mxu0 0.0
        %2279 = vmatprep.subr.mxu0 0.0
        %2280 = vmatpush1.msra.mxu0 0.0
        %2281 = vmatprep.subr.mxu0 0.0
        %2282 = vmatpush1.msra.mxu0 0.0
        %2283 = vmatprep.subr.mxu0 0.0
        %2284 = vmatpush1.msra.mxu0 0.0
        %2285 = vmatprep.subr.mxu0 0.0
        %2286 = vmatpush1.msra.mxu0 0.0
        %2287 = vmatprep.subr.mxu0 0.0
        %2288 = vmatpush1.msra.mxu0 0.0
        %2289 = vmatprep.subr.mxu0 0.0
        %2290 = vmatpush1.msra.mxu0 0.0
        %2291 = vmatprep.subr.mxu0 0.0
        %2292 = vmatpush1.msra.mxu0 0.0
        %2293 = vmatprep.subr.mxu0 0.0
        %2294 = vmatpush1.msra.mxu0 0.0
        %2295 = vmatprep.mubr.f32.mxu0 0.0
        %2296 = vmatmul.mubr.f32.gmra.mrb[0].mxu0 %v2229
        %v2297 = vpop.f32.mrb[0].mxu0
        %v2298 = vadd.f32 0.0, %v2297
        %v2299 = vpop.f32.mrb[0].mxu0
        %2300 = vdwg.mxu0
        %v2302 = vsel %vm2136, %v2217, 0
        %2304 = vmatprep.subr.mxu0 0.0
        %2305 = vmatpush1.msra.mxu0 %v2220
        %2306 = vmatprep.subr.mxu0 0.0
        %2307 = vmatpush1.msra.mxu0 %v2221
        %2308 = vmatprep.subr.mxu0 0.0
        %2309 = vmatpush1.msra.mxu0 %v2222
        %2310 = vmatprep.subr.mxu0 0.0
        %2311 = vmatpush1.msra.mxu0 %v2223
        %2312 = vmatprep.subr.mxu0 0.0
        %2313 = vmatpush1.msra.mxu0 0.0
        %2314 = vmatprep.subr.mxu0 0.0
        %2315 = vmatpush1.msra.mxu0 0.0
        %2316 = vmatprep.subr.mxu0 0.0
        %2317 = vmatpush1.msra.mxu0 0.0
        %2318 = vmatprep.subr.mxu0 0.0
        %2319 = vmatpush1.msra.mxu0 0.0
        %2320 = vmatprep.subr.mxu0 0.0
        %2321 = vmatpush1.msra.mxu0 0.0
        %2322 = vmatprep.subr.mxu0 0.0
        %2323 = vmatpush1.msra.mxu0 0.0
        %2324 = vmatprep.subr.mxu0 0.0
        %2325 = vmatpush1.msra.mxu0 0.0
        %2326 = vmatprep.subr.mxu0 0.0
        %2327 = vmatpush1.msra.mxu0 0.0
        %2328 = vmatprep.subr.mxu0 0.0
        %2329 = vmatpush1.msra.mxu0 0.0
        %2330 = vmatprep.subr.mxu0 0.0
        %2331 = vmatpush1.msra.mxu0 0.0
        %2332 = vmatprep.subr.mxu0 0.0
        %2333 = vmatpush1.msra.mxu0 0.0
        %2334 = vmatprep.subr.mxu0 0.0
        %2335 = vmatpush1.msra.mxu0 0.0
        %2336 = vmatprep.subr.mxu0 0.0
        %2337 = vmatpush1.msra.mxu0 0.0
        %2338 = vmatprep.subr.mxu0 0.0
        %2339 = vmatpush1.msra.mxu0 0.0
        %2340 = vmatprep.subr.mxu0 0.0
        %2341 = vmatpush1.msra.mxu0 0.0
        %2342 = vmatprep.subr.mxu0 0.0
        %2343 = vmatpush1.msra.mxu0 0.0
        %2344 = vmatprep.subr.mxu0 0.0
        %2345 = vmatpush1.msra.mxu0 0.0
        %2346 = vmatprep.subr.mxu0 0.0
        %2347 = vmatpush1.msra.mxu0 0.0
        %2348 = vmatprep.subr.mxu0 0.0
        %2349 = vmatpush1.msra.mxu0 0.0
        %2350 = vmatprep.subr.mxu0 0.0
        %2351 = vmatpush1.msra.mxu0 0.0
        %2352 = vmatprep.subr.mxu0 0.0
        %2353 = vmatpush1.msra.mxu0 0.0
        %2354 = vmatprep.subr.mxu0 0.0
        %2355 = vmatpush1.msra.mxu0 0.0
        %2356 = vmatprep.subr.mxu0 0.0
        %2357 = vmatpush1.msra.mxu0 0.0
        %2358 = vmatprep.subr.mxu0 0.0
        %2359 = vmatpush1.msra.mxu0 0.0
        %2360 = vmatprep.subr.mxu0 0.0
        %2361 = vmatpush1.msra.mxu0 0.0
        %2362 = vmatprep.subr.mxu0 0.0
        %2363 = vmatpush1.msra.mxu0 0.0
        %2364 = vmatprep.subr.mxu0 0.0
        %2365 = vmatpush1.msra.mxu0 0.0
        %2366 = vmatprep.subr.mxu0 0.0
        %2367 = vmatpush1.msra.mxu0 0.0
        %2368 = vmatprep.mubr.f32.mxu0 0.0
        %2369 = vmatmul.mubr.f32.gmra.mrb[0].mxu0 %v2302
        %v2370 = vpop.f32.mrb[0].mxu0
        %v2371 = vadd.f32 %v2298, %v2370
        %v2372 = vpop.f32.mrb[0].mxu0
        %2373 = vdwg.mxu0
        %v2374 = vld [vmem:[%s17] sm:$0x1]
        %v2375 = vadd.f32 %v2371, %v2374
        %v2376 = vsub.f32 0.0, %v2375
        %v2377 = vmul.f32 %v2376, 1.442695
        %v2378 = vpow.pop %v2377
        %v2379 = vadd.f32 %v2378, 1.0
        %v2380 = vrcp.pop %v2379
        %v2381 = vtanh.pop %v2375
        %v2383 = vlaneseq
        %v2384 = vshrl.u32 %v2383, 7
        %v2385 = vsub.s32 0, %v2384
        %v2386 = vrot.slane %v2219, %v2385
        %2387 = vrot.lane.b32.xlu0 %v2386, 32
        %v2388 = vpop.permute.xlu0 %2387
        %v2390 = vmul.f32 %v2380, %v2388
        %2392 = vrot.lane.b32.xlu0 %v2381, 64
        %v2393 = vpop.permute.xlu0 %2392
        %v2395 = vmul.f32 %v2380, %v2393
        %2397 = vrot.lane.b32.xlu0 %v2395, 32
        %v2398 = vpop.permute.xlu0 %2397
        %v2400 = vadd.f32 %v2390, %v2398
        %v2401 = vtanh.pop %v2400
        %2403 = vrot.lane.b32.xlu0 %v2401, 64
        %v2404 = vpop.permute.xlu0 %2403
        %v2406 = vmul.f32 %v2380, %v2404
        %v2407 = vld [vmem:[%s18] sm:$0xff]
        %v2408 = vld [vmem:[%s18 + $0x8] sm:$0xff]
        %v2409 = vld [vmem:[%s18 + $0x10] sm:$0xff]
        %v2410 = vld [vmem:[%s18 + $0x18] sm:$0xff]
        %v2411 = vld [vmem:[%s19] sm:$0x1]
        %2413 = vrot.lane.b32.xlu0 %v2406, 32
        %v2414 = vpop.permute.xlu0 %2413
        %v2415 = vsel %vm2136, %v2414, 0
        %2417 = vmatprep.subr.mxu0 0.0
        %2418 = vmatpush1.msra.mxu0 %v2407
        %2419 = vmatprep.subr.mxu0 0.0
        %2420 = vmatpush1.msra.mxu0 %v2408
        %2421 = vmatprep.subr.mxu0 0.0
        %2422 = vmatpush1.msra.mxu0 %v2409
        %2423 = vmatprep.subr.mxu0 0.0
        %2424 = vmatpush1.msra.mxu0 %v2410
        %2425 = vmatprep.subr.mxu0 0.0
        %2426 = vmatpush1.msra.mxu0 0.0
        %2427 = vmatprep.subr.mxu0 0.0
        %2428 = vmatpush1.msra.mxu0 0.0
        %2429 = vmatprep.subr.mxu0 0.0
        %2430 = vmatpush1.msra.mxu0 0.0
        %2431 = vmatprep.subr.mxu0 0.0
        %2432 = vmatpush1.msra.mxu0 0.0
        %2433 = vmatprep.subr.mxu0 0.0
        %2434 = vmatpush1.msra.mxu0 0.0
        %2435 = vmatprep.subr.mxu0 0.0
        %2436 = vmatpush1.msra.mxu0 0.0
        %2437 = vmatprep.subr.mxu0 0.0
        %2438 = vmatpush1.msra.mxu0 0.0
        %2439 = vmatprep.subr.mxu0 0.0
        %2440 = vmatpush1.msra.mxu0 0.0
        %2441 = vmatprep.subr.mxu0 0.0
        %2442 = vmatpush1.msra.mxu0 0.0
        %2443 = vmatprep.subr.mxu0 0.0
        %2444 = vmatpush1.msra.mxu0 0.0
        %2445 = vmatprep.subr.mxu0 0.0
        %2446 = vmatpush1.msra.mxu0 0.0
        %2447 = vmatprep.subr.mxu0 0.0
        %2448 = vmatpush1.msra.mxu0 0.0
        %2449 = vmatprep.subr.mxu0 0.0
        %2450 = vmatpush1.msra.mxu0 0.0
        %2451 = vmatprep.subr.mxu0 0.0
        %2452 = vmatpush1.msra.mxu0 0.0
        %2453 = vmatprep.subr.mxu0 0.0
        %2454 = vmatpush1.msra.mxu0 0.0
        %2455 = vmatprep.subr.mxu0 0.0
        %2456 = vmatpush1.msra.mxu0 0.0
        %2457 = vmatprep.subr.mxu0 0.0
        %2458 = vmatpush1.msra.mxu0 0.0
        %2459 = vmatprep.subr.mxu0 0.0
        %2460 = vmatpush1.msra.mxu0 0.0
        %2461 = vmatprep.subr.mxu0 0.0
        %2462 = vmatpush1.msra.mxu0 0.0
        %2463 = vmatprep.subr.mxu0 0.0
        %2464 = vmatpush1.msra.mxu0 0.0
        %2465 = vmatprep.subr.mxu0 0.0
        %2466 = vmatpush1.msra.mxu0 0.0
        %2467 = vmatprep.subr.mxu0 0.0
        %2468 = vmatpush1.msra.mxu0 0.0
        %2469 = vmatprep.subr.mxu0 0.0
        %2470 = vmatpush1.msra.mxu0 0.0
        %2471 = vmatprep.subr.mxu0 0.0
        %2472 = vmatpush1.msra.mxu0 0.0
        %2473 = vmatprep.subr.mxu0 0.0
        %2474 = vmatpush1.msra.mxu0 0.0
        %2475 = vmatprep.subr.mxu0 0.0
        %2476 = vmatpush1.msra.mxu0 0.0
        %2477 = vmatprep.subr.mxu0 0.0
        %2478 = vmatpush1.msra.mxu0 0.0
        %2479 = vmatprep.subr.mxu0 0.0
        %2480 = vmatpush1.msra.mxu0 0.0
        %2481 = vmatprep.mubr.f32.mxu0 0.0
        %2482 = vmatmul.mubr.f32.gmra.mrb[0].mxu0 %v2415
        %v2483 = vpop.f32.mrb[0].mxu0
        %v2484 = vadd.f32 %v2411, %v2483
        %v2485 = vpop.f32.mrb[0].mxu0
        %2486 = vdwg.mxu0
        %vm2487 = vcmask 57344
        %2488 = vst.msk [vmem:[%s709] sm:$0x1] %vm2487, %v2484
        %vm2490 = vcmask 253952
        %2491 = vst.msk [vmem:[%s736] sm:$0x1] %vm2490, %v2414
        %2493 = vrot.lane.b32.xlu0 %v2400, 96
        %v2494 = vpop.permute.xlu0 %2493
        %2496 = vst.msk [vmem:[%s739] sm:$0x1] %vm2490, %v2494
        %s2497 = sand.u32 %s485, 1
        %s2498 = scalar_lea.sflag [#allocation5], %s2497
        %s2499 = sand.u32 %s485, 1
        %s2500 = scalar_lea.vmem [#allocation4], %s2499
        %p2501 = scmp.lt.s32.totalorder %s37, 1
        %s2502 = scalar_select %p2501, %s37, 1
        %s2503 = scalar_lea.vmem %s21, %s2502
        %p2504 = scmp.lt.s32.totalorder %s37, 1
        %s2505 = scalar_select %p2504, %s37, 1
        %s2506 = scalar_lea.vmem %s22, %s2505
        // Predicated region
        $region101: #{refinement_forward.1} parent=99 // pred_check
          %p2507 = pneg %p495
        $region102: #{refinement_forward.1} parent=99 // pred_check_branch
          %2509 = sbr.rel (%p2507) target = $region104
        $region103: #{refinement_forward.1} parent=99 // pred_region
          %s2511 = ssub.s32 16, 16
          %2512 = vsyncadd %s2498, %s2511
          %s2513 = smul.addr %s37, 16
          %s2514 = scalar_lea.hbm %s20, %s2513
          %s2516 = sshll.u32 %s2500, 4
          %s2517 = int_to_ptr.vmem [resolvable:$true] %s2516
          %2519 = dma.vmem_to_hbm [thread:$0]  %s2517, 16, %s2514, %s2498
        $region104: #{refinement_forward.1} parent=99 // pred_fallthru
          _
        // Predicated region
        $region105: #{refinement_forward.1} parent=99 // pred_check
          %p2520 = pneg %p521
        $region106: #{refinement_forward.1} parent=99 // pred_check_branch
          %2522 = sbr.rel (%p2520) target = $region108
        $region107: #{refinement_forward.1} parent=99 // pred_region
          _
        $region108: #{refinement_forward.1} parent=99 // pred_fallthru
          _
        // Predicated region
        $region109: #{refinement_forward.1} parent=99 // pred_check
          %p2523 = pneg %p547
        $region110: #{refinement_forward.1} parent=99 // pred_check_branch
          %2525 = sbr.rel (%p2523) target = $region112
        $region111: #{refinement_forward.1} parent=99 // pred_region
          _
        $region112: #{refinement_forward.1} parent=99 // pred_fallthru
          _
      $region100: #{refinement_forward.1} parent=5 // pred_fallthru
        _
      %p2526 = scmp.le.s32.totalorder 2, %s32
      // Predicated region
      $region113: #{refinement_forward.1} parent=5 // pred_check
        %p2527 = pneg %p2526
      $region114: #{refinement_forward.1} parent=5 // pred_check_branch
        %2529 = sbr.rel (%p2527) target = $region116
      $region115: #{refinement_forward.1} parent=5 // pred_region
        %s2530 = ssub.s32 %s32, 2
        // Predicated region
        $region117: #{refinement_forward.1} parent=115 // pred_check
          %p2531 = pneg %p501
        $region118: #{refinement_forward.1} parent=115 // pred_check_branch
          %2533 = sbr.rel (%p2531) target = $region120
        $region119: #{refinement_forward.1} parent=115 // pred_region
          %s2534 = sand.u32 %s486, 1
          %s2535 = scalar_lea.sflag [#allocation5], %s2534
          %s2536 = sand.u32 %s486, 1
          %s2537 = scalar_lea.vmem [#allocation4], %s2536
          %2538 = dma.done %s2535, 16
        $region120: #{refinement_forward.1} parent=115 // pred_fallthru
          _
        // Predicated region
        $region121: #{refinement_forward.1} parent=115 // pred_check
          %p2539 = pneg %p527
        $region122: #{refinement_forward.1} parent=115 // pred_check_branch
          %2541 = sbr.rel (%p2539) target = $region124
        $region123: #{refinement_forward.1} parent=115 // pred_region
          %p2542 = scmp.lt.s32.totalorder %s38, 1
          %s2543 = scalar_select %p2542, %s38, 1
          %s2544 = scalar_lea.vmem %s21, %s2543
        $region124: #{refinement_forward.1} parent=115 // pred_fallthru
          _
        // Predicated region
        $region125: #{refinement_forward.1} parent=115 // pred_check
          %p2545 = pneg %p553
        $region126: #{refinement_forward.1} parent=115 // pred_check_branch
          %2547 = sbr.rel (%p2545) target = $region128
        $region127: #{refinement_forward.1} parent=115 // pred_region
          %p2548 = scmp.lt.s32.totalorder %s38, 1
          %s2549 = scalar_select %p2548, %s38, 1
          %s2550 = scalar_lea.vmem %s22, %s2549
        $region128: #{refinement_forward.1} parent=115 // pred_fallthru
          _
      $region116: #{refinement_forward.1} parent=5 // pred_fallthru
        _
    $region6: #{refinement_forward.1} parent=1 // loop_footer
      %s36 = sadd.s32 1, %s32
    $region7: #{refinement_forward.1} parent=1 // loop_footer_branch
      %31 = sbr.rel target = $region3
    $region8: #{refinement_forward.1} parent=1 // loop_exit
      _
    %2551 = vsyncpa [#allocation5], 1
    %s2552 = scalar_lea.sflag [#allocation5], 1
    %2553 = vsyncpa %s2552, 1

</llo_original>
